<compile_context>
chip_gen: v6e
topology: v6e:2x2x1
jax: 0.10.0
libtpu: 0.0.40
codegen_flags: <defaults>
</compile_context>

<pallas_src>
import functools

import jax
import jax.numpy as jnp
from jax.experimental import pallas as pl
from jax.experimental.pallas import tpu as pltpu


def _rup(n, m):
    return ((n + m - 1) // m) * m


# ----------------------------- Pallas kernel ---------------------------------
def _postnet_fused_kernel(*refs, n_layers, K, pad, t_tile, seq_len, halo):
    """Fused 5x (Conv1d + folded BN (+tanh)) over one (batch, T-tile) block.

    refs layout:
      refs[0]: x_lo  (1, t_tile, C0p)  bf16  padded input, time block t
      refs[1]: x_hi  (1, t_tile, C0p)  bf16  padded input, time block t+1 (halo)
      refs[2+3l .. 4+3l]: w_l (K, Cin_p, Cout_p) bf16,
                          scale_l (1, Cout_p) f32, shift_l (1, Cout_p) f32
      refs[-1]: o_ref (1, t_tile, CLp) f32
    """
    x_lo_ref, x_hi_ref = refs[0], refs[1]
    o_ref = refs[-1]
    t = pl.program_id(1)

    # Layer-0 input window: t_tile + 2*halo timesteps (halo = n_layers * pad).
    win = jnp.concatenate(
        [x_lo_ref[0], x_hi_ref[0, :2 * halo, :]], axis=0)  # (t_tile+2*halo, C0p)

    for l in range(n_layers):
        w_ref = refs[2 + 3 * l]
        scale_ref = refs[3 + 3 * l]
        shift_ref = refs[4 + 3 * l]
        out_len = t_tile + 2 * (halo - (l + 1) * pad)
        cout = w_ref.shape[2]

        # Conv1d as K shifted 2-D matmuls; bf16 inputs, f32 MXU accumulation.
        # TODO(synk): the K sublane-shifted slices cost some retiling; an
        # im2col single-matmul variant could help once no longer HBM-bound.
        acc = jnp.zeros((out_len, cout), jnp.float32)
        for k in range(K):
            acc = acc + jnp.dot(win[k:k + out_len, :], w_ref[k],
                                preferred_element_type=jnp.float32)

        y = acc * scale_ref[...] + shift_ref[...]   # folded BatchNorm (eval)

        if l < n_layers - 1:
            y = jnp.tanh(y)
            # PyTorch zero-pads every layer's *input* in time.  Rows of this
            # layer's output lying outside the real sequence [0, seq_len) are
            # only halo for the next layer and must therefore be zero.
            tau0 = t * t_tile + (l + 1) * pad - halo
            tau = tau0 + jax.lax.broadcasted_iota(jnp.int32, (out_len, cout), 0)
            valid = jnp.logical_and(tau >= 0, tau < seq_len)
            win = jnp.where(valid, y, 0.0).astype(jnp.bfloat16)
        else:
            o_ref[0] = y.astype(o_ref.dtype)
        # F.dropout(..., 0.5, training=False) is identity in inference.
        # TODO(synk): training-mode stochastic dropout not implemented.


# ----------------------------- Wrapper ----------------------------------------
def _prepare_padded_params(params):
    """Zero-pad channel dims to multiples of 128 (lane width); weights -> bf16."""
    out = []
    for p in params:
        K, cin, cout = p["w"].shape
        cin_p, cout_p = _rup(cin, 128), _rup(cout, 128)
        w = jnp.zeros((K, cin_p, cout_p), jnp.bfloat16)
        w = w.at[:, :cin, :cout].set(p["w"].astype(jnp.bfloat16))
        scale = jnp.zeros((1, cout_p), jnp.float32).at[:, :cout].set(p["scale"])
        shift = jnp.zeros((1, cout_p), jnp.float32).at[:, :cout].set(p["shift"])
        out.append(dict(w=w, scale=scale, shift=shift))
    return out


def postnet_forward(x_ncl, params, *, t_tile=256):
    """x_ncl: (B, n_mel, T) PyTorch NCL layout -> (B, n_mel, T), float32."""
    B, c_in, T = x_ncl.shape
    n_layers = len(params)
    K = params[0]["w"].shape[0]
    pad = (K - 1) // 2
    halo = n_layers * pad            # cumulative halo across the fused layers
    c_out = params[-1]["w"].shape[2]

    pparams = _prepare_padded_params(params)
    c0p = pparams[0]["w"].shape[1]   # padded input channels
    cLp = pparams[-1]["w"].shape[2]  # padded output channels

    # T tile: multiple of 8 (sublane) and >= 2*halo so the halo fits one block.
    t_tile = _rup(min(t_tile, _rup(T, 8)), 8)
    t_tile = max(t_tile, _rup(2 * halo, 8))
    nt = -(-T // t_tile)
    Tp = (nt + 1) * t_tile           # block t+1 must exist for the right halo

    # Single zero-pad of the (small) input: time halo + channel lanes; bf16.
    x_ntc = jnp.transpose(x_ncl, (0, 2, 1)).astype(jnp.bfloat16)  # NTC
    x_p = jnp.zeros((B, Tp, c0p), jnp.bfloat16)
    x_p = x_p.at[:, halo:halo + T, :c_in].set(x_ntc)

    kernel = functools.partial(
        _postnet_fused_kernel, n_layers=n_layers, K=K, pad=pad,
        t_tile=t_tile, seq_len=T, halo=halo)

    # Inputs: padded activation twice (block t and block t+1 for the halo),
    # then (w, scale, shift) per layer.  Weight index_maps are constant so
    # their blocks stay resident across grid steps.
    inputs = [x_p, x_p]
    in_specs = [
        pl.BlockSpec((1, t_tile, c0p), lambda b, t: (b, t, 0)),
        pl.BlockSpec((1, t_tile, c0p), lambda b, t: (b, t + 1, 0)),
    ]
    for p in pparams:
        kk, cin_p, cout_p = p["w"].shape
        inputs += [p["w"], p["scale"], p["shift"]]
        in_specs += [
            pl.BlockSpec((kk, cin_p, cout_p), lambda b, t: (0, 0, 0)),
            pl.BlockSpec((1, cout_p), lambda b, t: (0, 0)),
            pl.BlockSpec((1, cout_p), lambda b, t: (0, 0)),
        ]

    out = pl.pallas_call(
        kernel,
        out_shape=jax.ShapeDtypeStruct((B, nt * t_tile, cLp), jnp.float32),
        grid=(B, nt),
        in_specs=in_specs,
        out_specs=pl.BlockSpec((1, t_tile, cLp), lambda b, t: (b, t, 0)),
        compiler_params=pltpu.CompilerParams(
            dimension_semantics=("parallel", "parallel"),
            vmem_limit_bytes=64 * 1024 * 1024),
    )(*inputs)

    # Drop channel/time padding and return PyTorch NCL layout.
    return jnp.transpose(out[:, :T, :c_out], (0, 2, 1))


# ----------------------------- Parameter setup --------------------------------
def make_postnet_params(key, n_mel, embed_dim, kernel_size, n_convs):
    """Deterministic synthetic parameters matching Postnet.__init__ shapes."""
    dims = [n_mel] + [embed_dim] * (n_convs - 1) + [n_mel]
    params = []
    eps = 1e-5
    for li in range(n_convs):
        cin, cout = dims[li], dims[li + 1]
        key, kw, kb, kg, kbt, km, kv = jax.random.split(key, 7)
        # ConvNorm weight: torch layout (Cout, Cin, K); we store (K, Cin, Cout).
        fan = cin * kernel_size + cout
        limit = jnp.sqrt(6.0 / fan)  # xavier-uniform-ish, deterministic
        w_torch = jax.random.uniform(kw, (cout, cin, kernel_size),
                                     minval=-limit, maxval=limit,
                                     dtype=jnp.float32)
        w = jnp.transpose(w_torch, (2, 1, 0))                 # (K, Cin, Cout)
        b = 0.01 * jax.random.normal(kb, (cout,), jnp.float32)
        # BatchNorm1d (eval): gamma, beta, running stats.
        gamma = 1.0 + 0.1 * jax.random.normal(kg, (cout,), jnp.float32)
        beta = 0.1 * jax.random.normal(kbt, (cout,), jnp.float32)
        running_mean = 0.05 * jax.random.normal(km, (cout,), jnp.float32)
        running_var = 1.0 + 0.1 * jax.random.uniform(kv, (cout,), jnp.float32)
        # Fold conv bias + BN into per-channel scale/shift:
        #   BN(conv + b) = conv*s + (b - mean)*s + beta,  s = gamma/sqrt(var+eps)
        s = gamma / jnp.sqrt(running_var + eps)
        shift = (b - running_mean) * s + beta
        params.append(dict(w=w, scale=s.reshape(1, cout),
                           shift=shift.reshape(1, cout)))
    return params


# ----------------------------- Reference check --------------------------------
def postnet_reference(x_ncl, params):
    """Pure-JAX reference mirroring the kernel's bf16-matmul / f32-accum math."""
    x = jnp.transpose(x_ncl, (0, 2, 1)).astype(jnp.bfloat16)
    n = len(params)
    for i, p in enumerate(params):
        w = p["w"].astype(jnp.bfloat16)
        K = w.shape[0]
        pad = (K - 1) // 2
        xp = jnp.pad(x, ((0, 0), (pad, pad), (0, 0)))
        T = x.shape[1]
        acc = jnp.zeros((x.shape[0], T, w.shape[2]), jnp.float32)
        for k in range(K):
            acc = acc + jnp.einsum("btc,cd->btd", xp[:, k:k + T, :], w[k],
                                   preferred_element_type=jnp.float32)
        y = acc * p["scale"][None] + p["shift"][None]
        if i < n - 1:
            x = jnp.tanh(y).astype(jnp.bfloat16)
        else:
            x = y
    return jnp.transpose(x, (0, 2, 1)).astype(jnp.float32)


if __name__ == "__main__":
    # Small, Postnet-consistent shapes:
    # n_mel_channels=8, postnet_embedding_dim=32, kernel_size=5, n_convolutions=5
    B, N_MEL, T = 2, 8, 48
    EMBED, KSIZE, NCONV = 32, 5, 5

    key = jax.random.PRNGKey(0)
    kx, kp = jax.random.split(key)
    x = jax.random.normal(kx, (B, N_MEL, T), dtype=jnp.float32)  # NCL like PyTorch
    params = make_postnet_params(kp, N_MEL, EMBED, KSIZE, NCONV)

    # t_tile=24 keeps the demo tiny while still exercising multiple T tiles
    # (halo handoff + boundary masking); production would use t_tile ~ 256-512.
    out = postnet_forward(x, params, t_tile=24)
    out = jax.block_until_ready(out)

    ref = postnet_reference(x, params)
    assert out.shape == (B, N_MEL, T), out.shape
    max_err = float(jnp.max(jnp.abs(out - ref)))
    assert jnp.allclose(out, ref, atol=5e-3, rtol=5e-3), (
        f"mismatch vs reference, max abs err {max_err}")

    print("KERNEL_OK")
</pallas_src>

<mosaic_0001>
module attributes {stable_mosaic.version = 11 : i64} {
  func.func @_postnet_fused_kernel(%arg0: i32, %arg1: i32, %arg2: memref<1x24x128xbf16, #tpu.memory_space<vmem>>, %arg3: memref<1x24x128xbf16, #tpu.memory_space<vmem>>, %arg4: memref<5x128x128xbf16, #tpu.memory_space<vmem>>, %arg5: memref<1x128xf32, #tpu.memory_space<vmem>>, %arg6: memref<1x128xf32, #tpu.memory_space<vmem>>, %arg7: memref<5x128x128xbf16, #tpu.memory_space<vmem>>, %arg8: memref<1x128xf32, #tpu.memory_space<vmem>>, %arg9: memref<1x128xf32, #tpu.memory_space<vmem>>, %arg10: memref<5x128x128xbf16, #tpu.memory_space<vmem>>, %arg11: memref<1x128xf32, #tpu.memory_space<vmem>>, %arg12: memref<1x128xf32, #tpu.memory_space<vmem>>, %arg13: memref<5x128x128xbf16, #tpu.memory_space<vmem>>, %arg14: memref<1x128xf32, #tpu.memory_space<vmem>>, %arg15: memref<1x128xf32, #tpu.memory_space<vmem>>, %arg16: memref<5x128x128xbf16, #tpu.memory_space<vmem>>, %arg17: memref<1x128xf32, #tpu.memory_space<vmem>>, %arg18: memref<1x128xf32, #tpu.memory_space<vmem>>, %arg19: memref<1x24x128xf32, #tpu.memory_space<vmem>>) attributes {dimension_semantics = [#tpu.dimension_semantics<parallel>, #tpu.dimension_semantics<parallel>], iteration_bounds = array<i64: 2, 2>, scalar_prefetch = 0 : i64, scratch_operands = 0 : i64, tpu.core_type = #tpu.core_type<tc>, window_params = [{transform_indices = @transform_0, window_bounds = array<i64: 1, 24, 128>}, {transform_indices = @transform_1, window_bounds = array<i64: 1, 24, 128>}, {pipeline_mode = #tpu.pipeline_mode<synchronous>, transform_indices = @transform_2, window_bounds = array<i64: 5, 128, 128>}, {pipeline_mode = #tpu.pipeline_mode<synchronous>, transform_indices = @transform_3, window_bounds = array<i64: 1, 128>}, {pipeline_mode = #tpu.pipeline_mode<synchronous>, transform_indices = @transform_4, window_bounds = array<i64: 1, 128>}, {pipeline_mode = #tpu.pipeline_mode<synchronous>, transform_indices = @transform_5, window_bounds = array<i64: 5, 128, 128>}, {pipeline_mode = #tpu.pipeline_mode<synchronous>, transform_indices = @transform_6, window_bounds = array<i64: 1, 128>}, {pipeline_mode = #tpu.pipeline_mode<synchronous>, transform_indices = @transform_7, window_bounds = array<i64: 1, 128>}, {pipeline_mode = #tpu.pipeline_mode<synchronous>, transform_indices = @transform_8, window_bounds = array<i64: 5, 128, 128>}, {pipeline_mode = #tpu.pipeline_mode<synchronous>, transform_indices = @transform_9, window_bounds = array<i64: 1, 128>}, {pipeline_mode = #tpu.pipeline_mode<synchronous>, transform_indices = @transform_10, window_bounds = array<i64: 1, 128>}, {pipeline_mode = #tpu.pipeline_mode<synchronous>, transform_indices = @transform_11, window_bounds = array<i64: 5, 128, 128>}, {pipeline_mode = #tpu.pipeline_mode<synchronous>, transform_indices = @transform_12, window_bounds = array<i64: 1, 128>}, {pipeline_mode = #tpu.pipeline_mode<synchronous>, transform_indices = @transform_13, window_bounds = array<i64: 1, 128>}, {pipeline_mode = #tpu.pipeline_mode<synchronous>, transform_indices = @transform_14, window_bounds = array<i64: 5, 128, 128>}, {pipeline_mode = #tpu.pipeline_mode<synchronous>, transform_indices = @transform_15, window_bounds = array<i64: 1, 128>}, {pipeline_mode = #tpu.pipeline_mode<synchronous>, transform_indices = @transform_16, window_bounds = array<i64: 1, 128>}, {transform_indices = @transform_17, window_bounds = array<i64: 1, 24, 128>}]} {
    %c0 = arith.constant 0 : index
    %c0_0 = arith.constant 0 : index
    %c0_1 = arith.constant 0 : index
    %0 = vector.load %arg2[%c0, %c0_0, %c0_1] : memref<1x24x128xbf16, #tpu.memory_space<vmem>>, vector<1x24x128xbf16>
    %1 = vector.shape_cast %0 : vector<1x24x128xbf16> to vector<24x128xbf16>
    %c0_2 = arith.constant 0 : index
    %c0_3 = arith.constant 0 : index
    %c0_4 = arith.constant 0 : index
    %2 = vector.load %arg3[%c0_2, %c0_3, %c0_4] : memref<1x24x128xbf16, #tpu.memory_space<vmem>>, vector<1x20x128xbf16>
    %3 = vector.shape_cast %2 : vector<1x20x128xbf16> to vector<20x128xbf16>
    %4 = tpu.concatenate %1, %3 in 0 : vector<24x128xbf16>, vector<20x128xbf16> -> vector<44x128xbf16>
    %cst = arith.constant 0.000000e+00 : f32
    %5 = vector.broadcast %cst : f32 to vector<40x128xf32>
    %6 = vector.extract_strided_slice %4 {offsets = [0, 0], sizes = [40, 128], strides = [1, 1]} : vector<44x128xbf16> to vector<40x128xbf16>
    %c0_5 = arith.constant 0 : index
    %c0_6 = arith.constant 0 : index
    %c0_7 = arith.constant 0 : index
    %7 = vector.load %arg4[%c0_5, %c0_6, %c0_7] : memref<5x128x128xbf16, #tpu.memory_space<vmem>>, vector<1x128x128xbf16>
    %8 = vector.shape_cast %7 : vector<1x128x128xbf16> to vector<128x128xbf16>
    %cst_8 = arith.constant dense<0.000000e+00> : vector<40x128xf32>
    %9 = tpu.matmul %6, %8, %cst_8 {dimension_numbers = #tpu.dot_dimension_numbers<[1], [0], [0], [1], [0, 0, 1, 1], [], []>} : vector<40x128xbf16>, vector<128x128xbf16>, vector<40x128xf32> -> vector<40x128xf32>
    %10 = arith.addf %5, %9 : vector<40x128xf32>
    %11 = vector.extract_strided_slice %4 {offsets = [1, 0], sizes = [40, 128], strides = [1, 1]} : vector<44x128xbf16> to vector<40x128xbf16>
    %c1 = arith.constant 1 : index
    %c0_9 = arith.constant 0 : index
    %c0_10 = arith.constant 0 : index
    %12 = vector.load %arg4[%c1, %c0_9, %c0_10] : memref<5x128x128xbf16, #tpu.memory_space<vmem>>, vector<1x128x128xbf16>
    %13 = vector.shape_cast %12 : vector<1x128x128xbf16> to vector<128x128xbf16>
    %cst_11 = arith.constant dense<0.000000e+00> : vector<40x128xf32>
    %14 = tpu.matmul %11, %13, %cst_11 {dimension_numbers = #tpu.dot_dimension_numbers<[1], [0], [0], [1], [0, 0, 1, 1], [], []>} : vector<40x128xbf16>, vector<128x128xbf16>, vector<40x128xf32> -> vector<40x128xf32>
    %15 = arith.addf %10, %14 : vector<40x128xf32>
    %16 = vector.extract_strided_slice %4 {offsets = [2, 0], sizes = [40, 128], strides = [1, 1]} : vector<44x128xbf16> to vector<40x128xbf16>
    %c2 = arith.constant 2 : index
    %c0_12 = arith.constant 0 : index
    %c0_13 = arith.constant 0 : index
    %17 = vector.load %arg4[%c2, %c0_12, %c0_13] : memref<5x128x128xbf16, #tpu.memory_space<vmem>>, vector<1x128x128xbf16>
    %18 = vector.shape_cast %17 : vector<1x128x128xbf16> to vector<128x128xbf16>
    %cst_14 = arith.constant dense<0.000000e+00> : vector<40x128xf32>
    %19 = tpu.matmul %16, %18, %cst_14 {dimension_numbers = #tpu.dot_dimension_numbers<[1], [0], [0], [1], [0, 0, 1, 1], [], []>} : vector<40x128xbf16>, vector<128x128xbf16>, vector<40x128xf32> -> vector<40x128xf32>
    %20 = arith.addf %15, %19 : vector<40x128xf32>
    %21 = vector.extract_strided_slice %4 {offsets = [3, 0], sizes = [40, 128], strides = [1, 1]} : vector<44x128xbf16> to vector<40x128xbf16>
    %c3 = arith.constant 3 : index
    %c0_15 = arith.constant 0 : index
    %c0_16 = arith.constant 0 : index
    %22 = vector.load %arg4[%c3, %c0_15, %c0_16] : memref<5x128x128xbf16, #tpu.memory_space<vmem>>, vector<1x128x128xbf16>
    %23 = vector.shape_cast %22 : vector<1x128x128xbf16> to vector<128x128xbf16>
    %cst_17 = arith.constant dense<0.000000e+00> : vector<40x128xf32>
    %24 = tpu.matmul %21, %23, %cst_17 {dimension_numbers = #tpu.dot_dimension_numbers<[1], [0], [0], [1], [0, 0, 1, 1], [], []>} : vector<40x128xbf16>, vector<128x128xbf16>, vector<40x128xf32> -> vector<40x128xf32>
    %25 = arith.addf %20, %24 : vector<40x128xf32>
    %26 = vector.extract_strided_slice %4 {offsets = [4, 0], sizes = [40, 128], strides = [1, 1]} : vector<44x128xbf16> to vector<40x128xbf16>
    %c4 = arith.constant 4 : index
    %c0_18 = arith.constant 0 : index
    %c0_19 = arith.constant 0 : index
    %27 = vector.load %arg4[%c4, %c0_18, %c0_19] : memref<5x128x128xbf16, #tpu.memory_space<vmem>>, vector<1x128x128xbf16>
    %28 = vector.shape_cast %27 : vector<1x128x128xbf16> to vector<128x128xbf16>
    %cst_20 = arith.constant dense<0.000000e+00> : vector<40x128xf32>
    %29 = tpu.matmul %26, %28, %cst_20 {dimension_numbers = #tpu.dot_dimension_numbers<[1], [0], [0], [1], [0, 0, 1, 1], [], []>} : vector<40x128xbf16>, vector<128x128xbf16>, vector<40x128xf32> -> vector<40x128xf32>
    %30 = arith.addf %25, %29 : vector<40x128xf32>
    %c0_21 = arith.constant 0 : index
    %c0_22 = arith.constant 0 : index
    %31 = vector.load %arg5[%c0_21, %c0_22] : memref<1x128xf32, #tpu.memory_space<vmem>>, vector<1x128xf32>
    %32 = vector.broadcast %31 : vector<1x128xf32> to vector<40x128xf32>
    %33 = arith.mulf %30, %32 : vector<40x128xf32>
    %c0_23 = arith.constant 0 : index
    %c0_24 = arith.constant 0 : index
    %34 = vector.load %arg6[%c0_23, %c0_24] : memref<1x128xf32, #tpu.memory_space<vmem>>, vector<1x128xf32>
    %35 = vector.broadcast %34 : vector<1x128xf32> to vector<40x128xf32>
    %36 = arith.addf %33, %35 : vector<40x128xf32>
    %37 = math.tanh %36 : vector<40x128xf32>
    %c24_i32 = arith.constant 24 : i32
    %38 = arith.muli %arg1, %c24_i32 : i32
    %c2_i32 = arith.constant 2 : i32
    %39 = arith.addi %38, %c2_i32 : i32
    %c10_i32 = arith.constant 10 : i32
    %40 = arith.subi %39, %c10_i32 : i32
    %41 = tpu.iota {dimensions = array<i32: 0>} : vector<40x128xi32>
    %42 = vector.broadcast %40 : i32 to vector<40x128xi32>
    %43 = arith.addi %42, %41 : vector<40x128xi32>
    %c0_i32 = arith.constant 0 : i32
    %44 = vector.broadcast %c0_i32 : i32 to vector<40x128xi32>
    %45 = arith.cmpi sge, %43, %44 : vector<40x128xi32>
    %c48_i32 = arith.constant 48 : i32
    %46 = vector.broadcast %c48_i32 : i32 to vector<40x128xi32>
    %47 = arith.cmpi slt, %43, %46 : vector<40x128xi32>
    %48 = arith.andi %45, %47 : vector<40x128xi1>
    %cst_25 = arith.constant 0.000000e+00 : f32
    %49 = vector.broadcast %cst_25 : f32 to vector<40x128xf32>
    %50 = arith.select %48, %37, %49 : vector<40x128xi1>, vector<40x128xf32>
    %51 = arith.truncf %50 : vector<40x128xf32> to vector<40x128xbf16>
    %cst_26 = arith.constant 0.000000e+00 : f32
    %52 = vector.broadcast %cst_26 : f32 to vector<36x128xf32>
    %53 = vector.extract_strided_slice %51 {offsets = [0, 0], sizes = [36, 128], strides = [1, 1]} : vector<40x128xbf16> to vector<36x128xbf16>
    %c0_27 = arith.constant 0 : index
    %c0_28 = arith.constant 0 : index
    %c0_29 = arith.constant 0 : index
    %54 = vector.load %arg7[%c0_27, %c0_28, %c0_29] : memref<5x128x128xbf16, #tpu.memory_space<vmem>>, vector<1x128x128xbf16>
    %55 = vector.shape_cast %54 : vector<1x128x128xbf16> to vector<128x128xbf16>
    %cst_30 = arith.constant dense<0.000000e+00> : vector<36x128xf32>
    %56 = tpu.matmul %53, %55, %cst_30 {dimension_numbers = #tpu.dot_dimension_numbers<[1], [0], [0], [1], [0, 0, 1, 1], [], []>} : vector<36x128xbf16>, vector<128x128xbf16>, vector<36x128xf32> -> vector<36x128xf32>
    %57 = arith.addf %52, %56 : vector<36x128xf32>
    %58 = vector.extract_strided_slice %51 {offsets = [1, 0], sizes = [36, 128], strides = [1, 1]} : vector<40x128xbf16> to vector<36x128xbf16>
    %c1_31 = arith.constant 1 : index
    %c0_32 = arith.constant 0 : index
    %c0_33 = arith.constant 0 : index
    %59 = vector.load %arg7[%c1_31, %c0_32, %c0_33] : memref<5x128x128xbf16, #tpu.memory_space<vmem>>, vector<1x128x128xbf16>
    %60 = vector.shape_cast %59 : vector<1x128x128xbf16> to vector<128x128xbf16>
    %cst_34 = arith.constant dense<0.000000e+00> : vector<36x128xf32>
    %61 = tpu.matmul %58, %60, %cst_34 {dimension_numbers = #tpu.dot_dimension_numbers<[1], [0], [0], [1], [0, 0, 1, 1], [], []>} : vector<36x128xbf16>, vector<128x128xbf16>, vector<36x128xf32> -> vector<36x128xf32>
    %62 = arith.addf %57, %61 : vector<36x128xf32>
    %63 = vector.extract_strided_slice %51 {offsets = [2, 0], sizes = [36, 128], strides = [1, 1]} : vector<40x128xbf16> to vector<36x128xbf16>
    %c2_35 = arith.constant 2 : index
    %c0_36 = arith.constant 0 : index
    %c0_37 = arith.constant 0 : index
    %64 = vector.load %arg7[%c2_35, %c0_36, %c0_37] : memref<5x128x128xbf16, #tpu.memory_space<vmem>>, vector<1x128x128xbf16>
    %65 = vector.shape_cast %64 : vector<1x128x128xbf16> to vector<128x128xbf16>
    %cst_38 = arith.constant dense<0.000000e+00> : vector<36x128xf32>
    %66 = tpu.matmul %63, %65, %cst_38 {dimension_numbers = #tpu.dot_dimension_numbers<[1], [0], [0], [1], [0, 0, 1, 1], [], []>} : vector<36x128xbf16>, vector<128x128xbf16>, vector<36x128xf32> -> vector<36x128xf32>
    %67 = arith.addf %62, %66 : vector<36x128xf32>
    %68 = vector.extract_strided_slice %51 {offsets = [3, 0], sizes = [36, 128], strides = [1, 1]} : vector<40x128xbf16> to vector<36x128xbf16>
    %c3_39 = arith.constant 3 : index
    %c0_40 = arith.constant 0 : index
    %c0_41 = arith.constant 0 : index
    %69 = vector.load %arg7[%c3_39, %c0_40, %c0_41] : memref<5x128x128xbf16, #tpu.memory_space<vmem>>, vector<1x128x128xbf16>
    %70 = vector.shape_cast %69 : vector<1x128x128xbf16> to vector<128x128xbf16>
    %cst_42 = arith.constant dense<0.000000e+00> : vector<36x128xf32>
    %71 = tpu.matmul %68, %70, %cst_42 {dimension_numbers = #tpu.dot_dimension_numbers<[1], [0], [0], [1], [0, 0, 1, 1], [], []>} : vector<36x128xbf16>, vector<128x128xbf16>, vector<36x128xf32> -> vector<36x128xf32>
    %72 = arith.addf %67, %71 : vector<36x128xf32>
    %73 = vector.extract_strided_slice %51 {offsets = [4, 0], sizes = [36, 128], strides = [1, 1]} : vector<40x128xbf16> to vector<36x128xbf16>
    %c4_43 = arith.constant 4 : index
    %c0_44 = arith.constant 0 : index
    %c0_45 = arith.constant 0 : index
    %74 = vector.load %arg7[%c4_43, %c0_44, %c0_45] : memref<5x128x128xbf16, #tpu.memory_space<vmem>>, vector<1x128x128xbf16>
    %75 = vector.shape_cast %74 : vector<1x128x128xbf16> to vector<128x128xbf16>
    %cst_46 = arith.constant dense<0.000000e+00> : vector<36x128xf32>
    %76 = tpu.matmul %73, %75, %cst_46 {dimension_numbers = #tpu.dot_dimension_numbers<[1], [0], [0], [1], [0, 0, 1, 1], [], []>} : vector<36x128xbf16>, vector<128x128xbf16>, vector<36x128xf32> -> vector<36x128xf32>
    %77 = arith.addf %72, %76 : vector<36x128xf32>
    %c0_47 = arith.constant 0 : index
    %c0_48 = arith.constant 0 : index
    %78 = vector.load %arg8[%c0_47, %c0_48] : memref<1x128xf32, #tpu.memory_space<vmem>>, vector<1x128xf32>
    %79 = vector.broadcast %78 : vector<1x128xf32> to vector<36x128xf32>
    %80 = arith.mulf %77, %79 : vector<36x128xf32>
    %c0_49 = arith.constant 0 : index
    %c0_50 = arith.constant 0 : index
    %81 = vector.load %arg9[%c0_49, %c0_50] : memref<1x128xf32, #tpu.memory_space<vmem>>, vector<1x128xf32>
    %82 = vector.broadcast %81 : vector<1x128xf32> to vector<36x128xf32>
    %83 = arith.addf %80, %82 : vector<36x128xf32>
    %84 = math.tanh %83 : vector<36x128xf32>
    %c24_i32_51 = arith.constant 24 : i32
    %85 = arith.muli %arg1, %c24_i32_51 : i32
    %c4_i32 = arith.constant 4 : i32
    %86 = arith.addi %85, %c4_i32 : i32
    %c10_i32_52 = arith.constant 10 : i32
    %87 = arith.subi %86, %c10_i32_52 : i32
    %88 = tpu.iota {dimensions = array<i32: 0>} : vector<36x128xi32>
    %89 = vector.broadcast %87 : i32 to vector<36x128xi32>
    %90 = arith.addi %89, %88 : vector<36x128xi32>
    %c0_i32_53 = arith.constant 0 : i32
    %91 = vector.broadcast %c0_i32_53 : i32 to vector<36x128xi32>
    %92 = arith.cmpi sge, %90, %91 : vector<36x128xi32>
    %c48_i32_54 = arith.constant 48 : i32
    %93 = vector.broadcast %c48_i32_54 : i32 to vector<36x128xi32>
    %94 = arith.cmpi slt, %90, %93 : vector<36x128xi32>
    %95 = arith.andi %92, %94 : vector<36x128xi1>
    %cst_55 = arith.constant 0.000000e+00 : f32
    %96 = vector.broadcast %cst_55 : f32 to vector<36x128xf32>
    %97 = arith.select %95, %84, %96 : vector<36x128xi1>, vector<36x128xf32>
    %98 = arith.truncf %97 : vector<36x128xf32> to vector<36x128xbf16>
    %cst_56 = arith.constant 0.000000e+00 : f32
    %99 = vector.broadcast %cst_56 : f32 to vector<32x128xf32>
    %100 = vector.extract_strided_slice %98 {offsets = [0, 0], sizes = [32, 128], strides = [1, 1]} : vector<36x128xbf16> to vector<32x128xbf16>
    %c0_57 = arith.constant 0 : index
    %c0_58 = arith.constant 0 : index
    %c0_59 = arith.constant 0 : index
    %101 = vector.load %arg10[%c0_57, %c0_58, %c0_59] : memref<5x128x128xbf16, #tpu.memory_space<vmem>>, vector<1x128x128xbf16>
    %102 = vector.shape_cast %101 : vector<1x128x128xbf16> to vector<128x128xbf16>
    %cst_60 = arith.constant dense<0.000000e+00> : vector<32x128xf32>
    %103 = tpu.matmul %100, %102, %cst_60 {dimension_numbers = #tpu.dot_dimension_numbers<[1], [0], [0], [1], [0, 0, 1, 1], [], []>} : vector<32x128xbf16>, vector<128x128xbf16>, vector<32x128xf32> -> vector<32x128xf32>
    %104 = arith.addf %99, %103 : vector<32x128xf32>
    %105 = vector.extract_strided_slice %98 {offsets = [1, 0], sizes = [32, 128], strides = [1, 1]} : vector<36x128xbf16> to vector<32x128xbf16>
    %c1_61 = arith.constant 1 : index
    %c0_62 = arith.constant 0 : index
    %c0_63 = arith.constant 0 : index
    %106 = vector.load %arg10[%c1_61, %c0_62, %c0_63] : memref<5x128x128xbf16, #tpu.memory_space<vmem>>, vector<1x128x128xbf16>
    %107 = vector.shape_cast %106 : vector<1x128x128xbf16> to vector<128x128xbf16>
    %cst_64 = arith.constant dense<0.000000e+00> : vector<32x128xf32>
    %108 = tpu.matmul %105, %107, %cst_64 {dimension_numbers = #tpu.dot_dimension_numbers<[1], [0], [0], [1], [0, 0, 1, 1], [], []>} : vector<32x128xbf16>, vector<128x128xbf16>, vector<32x128xf32> -> vector<32x128xf32>
    %109 = arith.addf %104, %108 : vector<32x128xf32>
    %110 = vector.extract_strided_slice %98 {offsets = [2, 0], sizes = [32, 128], strides = [1, 1]} : vector<36x128xbf16> to vector<32x128xbf16>
    %c2_65 = arith.constant 2 : index
    %c0_66 = arith.constant 0 : index
    %c0_67 = arith.constant 0 : index
    %111 = vector.load %arg10[%c2_65, %c0_66, %c0_67] : memref<5x128x128xbf16, #tpu.memory_space<vmem>>, vector<1x128x128xbf16>
    %112 = vector.shape_cast %111 : vector<1x128x128xbf16> to vector<128x128xbf16>
    %cst_68 = arith.constant dense<0.000000e+00> : vector<32x128xf32>
    %113 = tpu.matmul %110, %112, %cst_68 {dimension_numbers = #tpu.dot_dimension_numbers<[1], [0], [0], [1], [0, 0, 1, 1], [], []>} : vector<32x128xbf16>, vector<128x128xbf16>, vector<32x128xf32> -> vector<32x128xf32>
    %114 = arith.addf %109, %113 : vector<32x128xf32>
    %115 = vector.extract_strided_slice %98 {offsets = [3, 0], sizes = [32, 128], strides = [1, 1]} : vector<36x128xbf16> to vector<32x128xbf16>
    %c3_69 = arith.constant 3 : index
    %c0_70 = arith.constant 0 : index
    %c0_71 = arith.constant 0 : index
    %116 = vector.load %arg10[%c3_69, %c0_70, %c0_71] : memref<5x128x128xbf16, #tpu.memory_space<vmem>>, vector<1x128x128xbf16>
    %117 = vector.shape_cast %116 : vector<1x128x128xbf16> to vector<128x128xbf16>
    %cst_72 = arith.constant dense<0.000000e+00> : vector<32x128xf32>
    %118 = tpu.matmul %115, %117, %cst_72 {dimension_numbers = #tpu.dot_dimension_numbers<[1], [0], [0], [1], [0, 0, 1, 1], [], []>} : vector<32x128xbf16>, vector<128x128xbf16>, vector<32x128xf32> -> vector<32x128xf32>
    %119 = arith.addf %114, %118 : vector<32x128xf32>
    %120 = vector.extract_strided_slice %98 {offsets = [4, 0], sizes = [32, 128], strides = [1, 1]} : vector<36x128xbf16> to vector<32x128xbf16>
    %c4_73 = arith.constant 4 : index
    %c0_74 = arith.constant 0 : index
    %c0_75 = arith.constant 0 : index
    %121 = vector.load %arg10[%c4_73, %c0_74, %c0_75] : memref<5x128x128xbf16, #tpu.memory_space<vmem>>, vector<1x128x128xbf16>
    %122 = vector.shape_cast %121 : vector<1x128x128xbf16> to vector<128x128xbf16>
    %cst_76 = arith.constant dense<0.000000e+00> : vector<32x128xf32>
    %123 = tpu.matmul %120, %122, %cst_76 {dimension_numbers = #tpu.dot_dimension_numbers<[1], [0], [0], [1], [0, 0, 1, 1], [], []>} : vector<32x128xbf16>, vector<128x128xbf16>, vector<32x128xf32> -> vector<32x128xf32>
    %124 = arith.addf %119, %123 : vector<32x128xf32>
    %c0_77 = arith.constant 0 : index
    %c0_78 = arith.constant 0 : index
    %125 = vector.load %arg11[%c0_77, %c0_78] : memref<1x128xf32, #tpu.memory_space<vmem>>, vector<1x128xf32>
    %126 = vector.broadcast %125 : vector<1x128xf32> to vector<32x128xf32>
    %127 = arith.mulf %124, %126 : vector<32x128xf32>
    %c0_79 = arith.constant 0 : index
    %c0_80 = arith.constant 0 : index
    %128 = vector.load %arg12[%c0_79, %c0_80] : memref<1x128xf32, #tpu.memory_space<vmem>>, vector<1x128xf32>
    %129 = vector.broadcast %128 : vector<1x128xf32> to vector<32x128xf32>
    %130 = arith.addf %127, %129 : vector<32x128xf32>
    %131 = math.tanh %130 : vector<32x128xf32>
    %c24_i32_81 = arith.constant 24 : i32
    %132 = arith.muli %arg1, %c24_i32_81 : i32
    %c6_i32 = arith.constant 6 : i32
    %133 = arith.addi %132, %c6_i32 : i32
    %c10_i32_82 = arith.constant 10 : i32
    %134 = arith.subi %133, %c10_i32_82 : i32
    %135 = tpu.iota {dimensions = array<i32: 0>} : vector<32x128xi32>
    %136 = vector.broadcast %134 : i32 to vector<32x128xi32>
    %137 = arith.addi %136, %135 : vector<32x128xi32>
    %c0_i32_83 = arith.constant 0 : i32
    %138 = vector.broadcast %c0_i32_83 : i32 to vector<32x128xi32>
    %139 = arith.cmpi sge, %137, %138 : vector<32x128xi32>
    %c48_i32_84 = arith.constant 48 : i32
    %140 = vector.broadcast %c48_i32_84 : i32 to vector<32x128xi32>
    %141 = arith.cmpi slt, %137, %140 : vector<32x128xi32>
    %142 = arith.andi %139, %141 : vector<32x128xi1>
    %cst_85 = arith.constant 0.000000e+00 : f32
    %143 = vector.broadcast %cst_85 : f32 to vector<32x128xf32>
    %144 = arith.select %142, %131, %143 : vector<32x128xi1>, vector<32x128xf32>
    %145 = arith.truncf %144 : vector<32x128xf32> to vector<32x128xbf16>
    %cst_86 = arith.constant 0.000000e+00 : f32
    %146 = vector.broadcast %cst_86 : f32 to vector<28x128xf32>
    %147 = vector.extract_strided_slice %145 {offsets = [0, 0], sizes = [28, 128], strides = [1, 1]} : vector<32x128xbf16> to vector<28x128xbf16>
    %c0_87 = arith.constant 0 : index
    %c0_88 = arith.constant 0 : index
    %c0_89 = arith.constant 0 : index
    %148 = vector.load %arg13[%c0_87, %c0_88, %c0_89] : memref<5x128x128xbf16, #tpu.memory_space<vmem>>, vector<1x128x128xbf16>
    %149 = vector.shape_cast %148 : vector<1x128x128xbf16> to vector<128x128xbf16>
    %cst_90 = arith.constant dense<0.000000e+00> : vector<28x128xf32>
    %150 = tpu.matmul %147, %149, %cst_90 {dimension_numbers = #tpu.dot_dimension_numbers<[1], [0], [0], [1], [0, 0, 1, 1], [], []>} : vector<28x128xbf16>, vector<128x128xbf16>, vector<28x128xf32> -> vector<28x128xf32>
    %151 = arith.addf %146, %150 : vector<28x128xf32>
    %152 = vector.extract_strided_slice %145 {offsets = [1, 0], sizes = [28, 128], strides = [1, 1]} : vector<32x128xbf16> to vector<28x128xbf16>
    %c1_91 = arith.constant 1 : index
    %c0_92 = arith.constant 0 : index
    %c0_93 = arith.constant 0 : index
    %153 = vector.load %arg13[%c1_91, %c0_92, %c0_93] : memref<5x128x128xbf16, #tpu.memory_space<vmem>>, vector<1x128x128xbf16>
    %154 = vector.shape_cast %153 : vector<1x128x128xbf16> to vector<128x128xbf16>
    %cst_94 = arith.constant dense<0.000000e+00> : vector<28x128xf32>
    %155 = tpu.matmul %152, %154, %cst_94 {dimension_numbers = #tpu.dot_dimension_numbers<[1], [0], [0], [1], [0, 0, 1, 1], [], []>} : vector<28x128xbf16>, vector<128x128xbf16>, vector<28x128xf32> -> vector<28x128xf32>
    %156 = arith.addf %151, %155 : vector<28x128xf32>
    %157 = vector.extract_strided_slice %145 {offsets = [2, 0], sizes = [28, 128], strides = [1, 1]} : vector<32x128xbf16> to vector<28x128xbf16>
    %c2_95 = arith.constant 2 : index
    %c0_96 = arith.constant 0 : index
    %c0_97 = arith.constant 0 : index
    %158 = vector.load %arg13[%c2_95, %c0_96, %c0_97] : memref<5x128x128xbf16, #tpu.memory_space<vmem>>, vector<1x128x128xbf16>
    %159 = vector.shape_cast %158 : vector<1x128x128xbf16> to vector<128x128xbf16>
    %cst_98 = arith.constant dense<0.000000e+00> : vector<28x128xf32>
    %160 = tpu.matmul %157, %159, %cst_98 {dimension_numbers = #tpu.dot_dimension_numbers<[1], [0], [0], [1], [0, 0, 1, 1], [], []>} : vector<28x128xbf16>, vector<128x128xbf16>, vector<28x128xf32> -> vector<28x128xf32>
    %161 = arith.addf %156, %160 : vector<28x128xf32>
    %162 = vector.extract_strided_slice %145 {offsets = [3, 0], sizes = [28, 128], strides = [1, 1]} : vector<32x128xbf16> to vector<28x128xbf16>
    %c3_99 = arith.constant 3 : index
    %c0_100 = arith.constant 0 : index
    %c0_101 = arith.constant 0 : index
    %163 = vector.load %arg13[%c3_99, %c0_100, %c0_101] : memref<5x128x128xbf16, #tpu.memory_space<vmem>>, vector<1x128x128xbf16>
    %164 = vector.shape_cast %163 : vector<1x128x128xbf16> to vector<128x128xbf16>
    %cst_102 = arith.constant dense<0.000000e+00> : vector<28x128xf32>
    %165 = tpu.matmul %162, %164, %cst_102 {dimension_numbers = #tpu.dot_dimension_numbers<[1], [0], [0], [1], [0, 0, 1, 1], [], []>} : vector<28x128xbf16>, vector<128x128xbf16>, vector<28x128xf32> -> vector<28x128xf32>
    %166 = arith.addf %161, %165 : vector<28x128xf32>
    %167 = vector.extract_strided_slice %145 {offsets = [4, 0], sizes = [28, 128], strides = [1, 1]} : vector<32x128xbf16> to vector<28x128xbf16>
    %c4_103 = arith.constant 4 : index
    %c0_104 = arith.constant 0 : index
    %c0_105 = arith.constant 0 : index
    %168 = vector.load %arg13[%c4_103, %c0_104, %c0_105] : memref<5x128x128xbf16, #tpu.memory_space<vmem>>, vector<1x128x128xbf16>
    %169 = vector.shape_cast %168 : vector<1x128x128xbf16> to vector<128x128xbf16>
    %cst_106 = arith.constant dense<0.000000e+00> : vector<28x128xf32>
    %170 = tpu.matmul %167, %169, %cst_106 {dimension_numbers = #tpu.dot_dimension_numbers<[1], [0], [0], [1], [0, 0, 1, 1], [], []>} : vector<28x128xbf16>, vector<128x128xbf16>, vector<28x128xf32> -> vector<28x128xf32>
    %171 = arith.addf %166, %170 : vector<28x128xf32>
    %c0_107 = arith.constant 0 : index
    %c0_108 = arith.constant 0 : index
    %172 = vector.load %arg14[%c0_107, %c0_108] : memref<1x128xf32, #tpu.memory_space<vmem>>, vector<1x128xf32>
    %173 = vector.broadcast %172 : vector<1x128xf32> to vector<28x128xf32>
    %174 = arith.mulf %171, %173 : vector<28x128xf32>
    %c0_109 = arith.constant 0 : index
    %c0_110 = arith.constant 0 : index
    %175 = vector.load %arg15[%c0_109, %c0_110] : memref<1x128xf32, #tpu.memory_space<vmem>>, vector<1x128xf32>
    %176 = vector.broadcast %175 : vector<1x128xf32> to vector<28x128xf32>
    %177 = arith.addf %174, %176 : vector<28x128xf32>
    %178 = math.tanh %177 : vector<28x128xf32>
    %c24_i32_111 = arith.constant 24 : i32
    %179 = arith.muli %arg1, %c24_i32_111 : i32
    %c8_i32 = arith.constant 8 : i32
    %180 = arith.addi %179, %c8_i32 : i32
    %c10_i32_112 = arith.constant 10 : i32
    %181 = arith.subi %180, %c10_i32_112 : i32
    %182 = tpu.iota {dimensions = array<i32: 0>} : vector<28x128xi32>
    %183 = vector.broadcast %181 : i32 to vector<28x128xi32>
    %184 = arith.addi %183, %182 : vector<28x128xi32>
    %c0_i32_113 = arith.constant 0 : i32
    %185 = vector.broadcast %c0_i32_113 : i32 to vector<28x128xi32>
    %186 = arith.cmpi sge, %184, %185 : vector<28x128xi32>
    %c48_i32_114 = arith.constant 48 : i32
    %187 = vector.broadcast %c48_i32_114 : i32 to vector<28x128xi32>
    %188 = arith.cmpi slt, %184, %187 : vector<28x128xi32>
    %189 = arith.andi %186, %188 : vector<28x128xi1>
    %cst_115 = arith.constant 0.000000e+00 : f32
    %190 = vector.broadcast %cst_115 : f32 to vector<28x128xf32>
    %191 = arith.select %189, %178, %190 : vector<28x128xi1>, vector<28x128xf32>
    %192 = arith.truncf %191 : vector<28x128xf32> to vector<28x128xbf16>
    %cst_116 = arith.constant 0.000000e+00 : f32
    %193 = vector.broadcast %cst_116 : f32 to vector<24x128xf32>
    %194 = vector.extract_strided_slice %192 {offsets = [0, 0], sizes = [24, 128], strides = [1, 1]} : vector<28x128xbf16> to vector<24x128xbf16>
    %c0_117 = arith.constant 0 : index
    %c0_118 = arith.constant 0 : index
    %c0_119 = arith.constant 0 : index
    %195 = vector.load %arg16[%c0_117, %c0_118, %c0_119] : memref<5x128x128xbf16, #tpu.memory_space<vmem>>, vector<1x128x128xbf16>
    %196 = vector.shape_cast %195 : vector<1x128x128xbf16> to vector<128x128xbf16>
    %cst_120 = arith.constant dense<0.000000e+00> : vector<24x128xf32>
    %197 = tpu.matmul %194, %196, %cst_120 {dimension_numbers = #tpu.dot_dimension_numbers<[1], [0], [0], [1], [0, 0, 1, 1], [], []>} : vector<24x128xbf16>, vector<128x128xbf16>, vector<24x128xf32> -> vector<24x128xf32>
    %198 = arith.addf %193, %197 : vector<24x128xf32>
    %199 = vector.extract_strided_slice %192 {offsets = [1, 0], sizes = [24, 128], strides = [1, 1]} : vector<28x128xbf16> to vector<24x128xbf16>
    %c1_121 = arith.constant 1 : index
    %c0_122 = arith.constant 0 : index
    %c0_123 = arith.constant 0 : index
    %200 = vector.load %arg16[%c1_121, %c0_122, %c0_123] : memref<5x128x128xbf16, #tpu.memory_space<vmem>>, vector<1x128x128xbf16>
    %201 = vector.shape_cast %200 : vector<1x128x128xbf16> to vector<128x128xbf16>
    %cst_124 = arith.constant dense<0.000000e+00> : vector<24x128xf32>
    %202 = tpu.matmul %199, %201, %cst_124 {dimension_numbers = #tpu.dot_dimension_numbers<[1], [0], [0], [1], [0, 0, 1, 1], [], []>} : vector<24x128xbf16>, vector<128x128xbf16>, vector<24x128xf32> -> vector<24x128xf32>
    %203 = arith.addf %198, %202 : vector<24x128xf32>
    %204 = vector.extract_strided_slice %192 {offsets = [2, 0], sizes = [24, 128], strides = [1, 1]} : vector<28x128xbf16> to vector<24x128xbf16>
    %c2_125 = arith.constant 2 : index
    %c0_126 = arith.constant 0 : index
    %c0_127 = arith.constant 0 : index
    %205 = vector.load %arg16[%c2_125, %c0_126, %c0_127] : memref<5x128x128xbf16, #tpu.memory_space<vmem>>, vector<1x128x128xbf16>
    %206 = vector.shape_cast %205 : vector<1x128x128xbf16> to vector<128x128xbf16>
    %cst_128 = arith.constant dense<0.000000e+00> : vector<24x128xf32>
    %207 = tpu.matmul %204, %206, %cst_128 {dimension_numbers = #tpu.dot_dimension_numbers<[1], [0], [0], [1], [0, 0, 1, 1], [], []>} : vector<24x128xbf16>, vector<128x128xbf16>, vector<24x128xf32> -> vector<24x128xf32>
    %208 = arith.addf %203, %207 : vector<24x128xf32>
    %209 = vector.extract_strided_slice %192 {offsets = [3, 0], sizes = [24, 128], strides = [1, 1]} : vector<28x128xbf16> to vector<24x128xbf16>
    %c3_129 = arith.constant 3 : index
    %c0_130 = arith.constant 0 : index
    %c0_131 = arith.constant 0 : index
    %210 = vector.load %arg16[%c3_129, %c0_130, %c0_131] : memref<5x128x128xbf16, #tpu.memory_space<vmem>>, vector<1x128x128xbf16>
    %211 = vector.shape_cast %210 : vector<1x128x128xbf16> to vector<128x128xbf16>
    %cst_132 = arith.constant dense<0.000000e+00> : vector<24x128xf32>
    %212 = tpu.matmul %209, %211, %cst_132 {dimension_numbers = #tpu.dot_dimension_numbers<[1], [0], [0], [1], [0, 0, 1, 1], [], []>} : vector<24x128xbf16>, vector<128x128xbf16>, vector<24x128xf32> -> vector<24x128xf32>
    %213 = arith.addf %208, %212 : vector<24x128xf32>
    %214 = vector.extract_strided_slice %192 {offsets = [4, 0], sizes = [24, 128], strides = [1, 1]} : vector<28x128xbf16> to vector<24x128xbf16>
    %c4_133 = arith.constant 4 : index
    %c0_134 = arith.constant 0 : index
    %c0_135 = arith.constant 0 : index
    %215 = vector.load %arg16[%c4_133, %c0_134, %c0_135] : memref<5x128x128xbf16, #tpu.memory_space<vmem>>, vector<1x128x128xbf16>
    %216 = vector.shape_cast %215 : vector<1x128x128xbf16> to vector<128x128xbf16>
    %cst_136 = arith.constant dense<0.000000e+00> : vector<24x128xf32>
    %217 = tpu.matmul %214, %216, %cst_136 {dimension_numbers = #tpu.dot_dimension_numbers<[1], [0], [0], [1], [0, 0, 1, 1], [], []>} : vector<24x128xbf16>, vector<128x128xbf16>, vector<24x128xf32> -> vector<24x128xf32>
    %218 = arith.addf %213, %217 : vector<24x128xf32>
    %c0_137 = arith.constant 0 : index
    %c0_138 = arith.constant 0 : index
    %219 = vector.load %arg17[%c0_137, %c0_138] : memref<1x128xf32, #tpu.memory_space<vmem>>, vector<1x128xf32>
    %220 = vector.broadcast %219 : vector<1x128xf32> to vector<24x128xf32>
    %221 = arith.mulf %218, %220 : vector<24x128xf32>
    %c0_139 = arith.constant 0 : index
    %c0_140 = arith.constant 0 : index
    %222 = vector.load %arg18[%c0_139, %c0_140] : memref<1x128xf32, #tpu.memory_space<vmem>>, vector<1x128xf32>
    %223 = vector.broadcast %222 : vector<1x128xf32> to vector<24x128xf32>
    %224 = arith.addf %221, %223 : vector<24x128xf32>
    %c0_141 = arith.constant 0 : index
    %c0_142 = arith.constant 0 : index
    %c0_143 = arith.constant 0 : index
    %225 = vector.load %arg19[%c0_141, %c0_142, %c0_143] : memref<1x24x128xf32, #tpu.memory_space<vmem>>, vector<1x24x128xf32>
    %226 = vector.shape_cast %225 : vector<1x24x128xf32> to vector<24x128xf32>
    %227 = vector.shape_cast %224 : vector<24x128xf32> to vector<1x24x128xf32>
    tpu.vector_store %arg19[%c0_141, %c0_142, %c0_143], %227 {strides = array<i32>} : memref<1x24x128xf32, #tpu.memory_space<vmem>>, vector<1x24x128xf32>,
    return
  }
  func.func @transform_0(%arg0: i32, %arg1: i32) -> (i32, i32, i32) {
    %c0_i32 = arith.constant 0 : i32
    %c0_i32_0 = arith.constant 0 : i32
    return %arg0, %arg1, %c0_i32 : i32, i32, i32
  }
  func.func @transform_1(%arg0: i32, %arg1: i32) -> (i32, i32, i32) {
    %c1_i32 = arith.constant 1 : i32
    %0 = arith.addi %arg1, %c1_i32 : i32
    %c0_i32 = arith.constant 0 : i32
    %c0_i32_0 = arith.constant 0 : i32
    return %arg0, %0, %c0_i32 : i32, i32, i32
  }
  func.func @transform_2(%arg0: i32, %arg1: i32) -> (i32, i32, i32) {
    %c0_i32 = arith.constant 0 : i32
    %c0_i32_0 = arith.constant 0 : i32
    %c0_i32_1 = arith.constant 0 : i32
    %c0_i32_2 = arith.constant 0 : i32
    return %c0_i32, %c0_i32_0, %c0_i32_1 : i32, i32, i32
  }
  func.func @transform_3(%arg0: i32, %arg1: i32) -> (i32, i32) {
    %c0_i32 = arith.constant 0 : i32
    %c0_i32_0 = arith.constant 0 : i32
    %c0_i32_1 = arith.constant 0 : i32
    return %c0_i32, %c0_i32_0 : i32, i32
  }
  func.func @transform_4(%arg0: i32, %arg1: i32) -> (i32, i32) {
    %c0_i32 = arith.constant 0 : i32
    %c0_i32_0 = arith.constant 0 : i32
    %c0_i32_1 = arith.constant 0 : i32
    return %c0_i32, %c0_i32_0 : i32, i32
  }
  func.func @transform_5(%arg0: i32, %arg1: i32) -> (i32, i32, i32) {
    %c0_i32 = arith.constant 0 : i32
    %c0_i32_0 = arith.constant 0 : i32
    %c0_i32_1 = arith.constant 0 : i32
    %c0_i32_2 = arith.constant 0 : i32
    return %c0_i32, %c0_i32_0, %c0_i32_1 : i32, i32, i32
  }
  func.func @transform_6(%arg0: i32, %arg1: i32) -> (i32, i32) {
    %c0_i32 = arith.constant 0 : i32
    %c0_i32_0 = arith.constant 0 : i32
    %c0_i32_1 = arith.constant 0 : i32
    return %c0_i32, %c0_i32_0 : i32, i32
  }
  func.func @transform_7(%arg0: i32, %arg1: i32) -> (i32, i32) {
    %c0_i32 = arith.constant 0 : i32
    %c0_i32_0 = arith.constant 0 : i32
    %c0_i32_1 = arith.constant 0 : i32
    return %c0_i32, %c0_i32_0 : i32, i32
  }
  func.func @transform_8(%arg0: i32, %arg1: i32) -> (i32, i32, i32) {
    %c0_i32 = arith.constant 0 : i32
    %c0_i32_0 = arith.constant 0 : i32
    %c0_i32_1 = arith.constant 0 : i32
    %c0_i32_2 = arith.constant 0 : i32
    return %c0_i32, %c0_i32_0, %c0_i32_1 : i32, i32, i32
  }
  func.func @transform_9(%arg0: i32, %arg1: i32) -> (i32, i32) {
    %c0_i32 = arith.constant 0 : i32
    %c0_i32_0 = arith.constant 0 : i32
    %c0_i32_1 = arith.constant 0 : i32
    return %c0_i32, %c0_i32_0 : i32, i32
  }
  func.func @transform_10(%arg0: i32, %arg1: i32) -> (i32, i32) {
    %c0_i32 = arith.constant 0 : i32
    %c0_i32_0 = arith.constant 0 : i32
    %c0_i32_1 = arith.constant 0 : i32
    return %c0_i32, %c0_i32_0 : i32, i32
  }
  func.func @transform_11(%arg0: i32, %arg1: i32) -> (i32, i32, i32) {
    %c0_i32 = arith.constant 0 : i32
    %c0_i32_0 = arith.constant 0 : i32
    %c0_i32_1 = arith.constant 0 : i32
    %c0_i32_2 = arith.constant 0 : i32
    return %c0_i32, %c0_i32_0, %c0_i32_1 : i32, i32, i32
  }
  func.func @transform_12(%arg0: i32, %arg1: i32) -> (i32, i32) {
    %c0_i32 = arith.constant 0 : i32
    %c0_i32_0 = arith.constant 0 : i32
    %c0_i32_1 = arith.constant 0 : i32
    return %c0_i32, %c0_i32_0 : i32, i32
  }
  func.func @transform_13(%arg0: i32, %arg1: i32) -> (i32, i32) {
    %c0_i32 = arith.constant 0 : i32
    %c0_i32_0 = arith.constant 0 : i32
    %c0_i32_1 = arith.constant 0 : i32
    return %c0_i32, %c0_i32_0 : i32, i32
  }
  func.func @transform_14(%arg0: i32, %arg1: i32) -> (i32, i32, i32) {
    %c0_i32 = arith.constant 0 : i32
    %c0_i32_0 = arith.constant 0 : i32
    %c0_i32_1 = arith.constant 0 : i32
    %c0_i32_2 = arith.constant 0 : i32
    return %c0_i32, %c0_i32_0, %c0_i32_1 : i32, i32, i32
  }
  func.func @transform_15(%arg0: i32, %arg1: i32) -> (i32, i32) {
    %c0_i32 = arith.constant 0 : i32
    %c0_i32_0 = arith.constant 0 : i32
    %c0_i32_1 = arith.constant 0 : i32
    return %c0_i32, %c0_i32_0 : i32, i32
  }
  func.func @transform_16(%arg0: i32, %arg1: i32) -> (i32, i32) {
    %c0_i32 = arith.constant 0 : i32
    %c0_i32_0 = arith.constant 0 : i32
    %c0_i32_1 = arith.constant 0 : i32
    return %c0_i32, %c0_i32_0 : i32, i32
  }
  func.func @transform_17(%arg0: i32, %arg1: i32) -> (i32, i32, i32) {
    %c0_i32 = arith.constant 0 : i32
    %c0_i32_0 = arith.constant 0 : i32
    return %arg0, %arg1, %c0_i32 : i32, i32, i32
  }
}

</mosaic_0001>

<llo_original>
// kernel: tpu_custom_call.1
$region0: #{tpu_custom_call.1}
  #allocation0 [shape = 'u32[]', space=smem, size = 0x4, offset = 0x4, fixed_abs, tag = 'smem constant byte address 0x4 - core index']
  #allocation1 [shape = 'u32[144,128]{1,0:T(1,128)}', space=vmem, size = 0x12000, scoped, tag = 'internal scratch']
  %s0 = inlined_call_operand.hbm [shape: bf16[2,72,128], index: 0, kind: input, shape index: {}]
  %s1 = inlined_call_operand.hbm [shape: bf16[2,72,128], index: 1, kind: input, shape index: {}]
  %s2 = inlined_call_operand.hbm [shape: bf16[5,128,128], index: 2, kind: input, shape index: {}]
  %s3 = inlined_call_operand.vmem [shape: f32[1,128], index: 3, kind: input, shape index: {}]
  %s4 = inlined_call_operand.vmem [shape: f32[1,128], index: 4, kind: input, shape index: {}]
  %s5 = inlined_call_operand.hbm [shape: bf16[5,128,128], index: 5, kind: input, shape index: {}]
  %s6 = inlined_call_operand.vmem [shape: f32[1,128], index: 6, kind: input, shape index: {}]
  %s7 = inlined_call_operand.vmem [shape: f32[1,128], index: 7, kind: input, shape index: {}]
  %s8 = inlined_call_operand.hbm [shape: bf16[5,128,128], index: 8, kind: input, shape index: {}]
  %s9 = inlined_call_operand.vmem [shape: f32[1,128], index: 9, kind: input, shape index: {}]
  %s10 = inlined_call_operand.vmem [shape: f32[1,128], index: 10, kind: input, shape index: {}]
  %s11 = inlined_call_operand.hbm [shape: bf16[5,128,128], index: 11, kind: input, shape index: {}]
  %s12 = inlined_call_operand.vmem [shape: f32[1,128], index: 12, kind: input, shape index: {}]
  %s13 = inlined_call_operand.vmem [shape: f32[1,128], index: 13, kind: input, shape index: {}]
  %s14 = inlined_call_operand.hbm [shape: bf16[5,128,128], index: 14, kind: input, shape index: {}]
  %s15 = inlined_call_operand.vmem [shape: f32[1,128], index: 15, kind: input, shape index: {}]
  %s16 = inlined_call_operand.vmem [shape: f32[1,128], index: 16, kind: input, shape index: {}]
  %s17 = inlined_call_operand.hbm [shape: f32[2,48,128], index: 17, kind: output, shape index: {}]
  %s18 = sld [smem:[#allocation0]]
  $region129: #{tpu_custom_call.1} parent=0
    _
  %s20 = ssub.s32 1, %s18
  %s21 = scalar_select 0, %s20, %s18
  $region1: #{tpu_custom_call.1} parent=0
    #allocation2 [shape = 'u8[12288]{0}', space=vmem, size = 0x3000, scoped, tag = 'input window, operand 0']
    #allocation3 [shape = 's32[2]{0}', space=sflag, size = 0x8, scoped, tag = 'scoped memory for tpu_custom_call.1']
    #allocation4 [shape = 's32[2]{0}', space=sflag, size = 0x8, scoped, tag = 'scoped memory for tpu_custom_call.1']
    #allocation5 [shape = 'u8[12288]{0}', space=vmem, size = 0x3000, scoped, tag = 'input window, operand 1']
    #allocation6 [shape = 's32[2]{0}', space=sflag, size = 0x8, scoped, tag = 'scoped memory for tpu_custom_call.1']
    #allocation7 [shape = 'u8[163840]{0}', space=vmem, size = 0x28000, scoped, tag = 'input window, operand 2, single buffered']
    #allocation8 [shape = 'u8[163840]{0}', space=vmem, size = 0x28000, scoped, tag = 'input window, operand 5, single buffered']
    #allocation9 [shape = 's32[1]{0}', space=sflag, size = 0x4, scoped, tag = 'scoped memory for tpu_custom_call.1']
    #allocation10 [shape = 'u8[163840]{0}', space=vmem, size = 0x28000, scoped, tag = 'input window, operand 8, single buffered']
    #allocation11 [shape = 'u8[163840]{0}', space=vmem, size = 0x28000, scoped, tag = 'input window, operand 11, single buffered']
    #allocation12 [shape = 's32[1]{0}', space=sflag, size = 0x4, scoped, tag = 'scoped memory for tpu_custom_call.1']
    #allocation13 [shape = 'u8[163840]{0}', space=vmem, size = 0x28000, scoped, tag = 'input window, operand 14, single buffered']
    #allocation14 [shape = 'u8[24576]{0}', space=vmem, size = 0x6000, scoped, tag = 'output window, operand 0']
    %22 = vsyncpa [#allocation3], 0
    %s23 = scalar_lea.sflag [#allocation3], 1
    %24 = vsyncpa %s23, 0
    %25 = vsyncpa [#allocation6], 0
    %s26 = scalar_lea.sflag [#allocation6], 1
    %27 = vsyncpa %s26, 0
    %28 = vsyncpa [#allocation9], 0
    %29 = vsyncpa [#allocation12], 0
    %30 = vsyncpa [#allocation4], 0
    %s31 = scalar_lea.sflag [#allocation4], 1
    %32 = vsyncpa %s31, 0
    loop: start=0, step=1, limit=6
    $region2: #{tpu_custom_call.1} parent=1 // loop_pre_header
      _
    $region3: #{tpu_custom_call.1} parent=1 // loop_header
      %s34 = sphi 0, %s38
      %p35 = scmp.ge.s32.totalorder %s34, 6
      %s41 = sphi 0, %s53
      %s42 = sphi 0, %s49
      %s43 = sphi 0, %s41
      %s44 = sphi 0, %s42
      %s45 = sphi 0, %s43
      %s46 = sphi 0, %s44
      %s58 = sphi 0, %s60
      %s61 = sphi 0, %s58
      %s62 = sphi 0, %s61
      %s78 = sphi 0, %s62
      %s88 = sphi 0, %s90
      %s91 = sphi 0, %s88
      %s92 = sphi 0, %s91
      %s108 = sphi 0, %s92
      %s112 = sphi 0, %s112
      %s114 = sphi 0, %s112
      %s115 = sphi 0, %s114
      %s129 = sphi 0, %s115
      %s133 = sphi 0, %s133
      %s135 = sphi 0, %s133
      %s136 = sphi 0, %s135
      %s150 = sphi 0, %s136
      %s154 = sphi 0, %s154
      %s156 = sphi 0, %s154
      %s157 = sphi 0, %s156
      %s171 = sphi 0, %s157
      %s175 = sphi 0, %s175
      %s177 = sphi 0, %s175
      %s178 = sphi 0, %s177
      %s192 = sphi 0, %s178
      %s196 = sphi 0, %s196
      %s198 = sphi 0, %s196
      %s199 = sphi 0, %s198
      %s213 = sphi 0, %s199
      %s217 = sphi 0, %s217
      %s219 = sphi 0, %s217
      %s220 = sphi 0, %s219
      %s234 = sphi 0, %s220
      %s238 = sphi 0, %s238
      %s240 = sphi 0, %s238
      %s241 = sphi 0, %s240
      %s255 = sphi 0, %s241
      %s259 = sphi 0, %s259
      %s261 = sphi 0, %s259
      %s262 = sphi 0, %s261
      %s276 = sphi 0, %s262
      %s280 = sphi 0, %s280
      %s282 = sphi 0, %s280
      %s283 = sphi 0, %s282
      %s297 = sphi 0, %s283
      %s301 = sphi 0, %s301
      %s303 = sphi 0, %s301
      %s304 = sphi 0, %s303
      %s318 = sphi 0, %s304
      %s322 = sphi 0, %s322
      %s324 = sphi 0, %s322
      %s325 = sphi 0, %s324
      %s339 = sphi 0, %s325
      %s343 = sphi 0, %s343
      %s345 = sphi 0, %s343
      %s346 = sphi 0, %s345
      %s360 = sphi 0, %s346
      %s364 = sphi 0, %s364
      %s366 = sphi 0, %s364
      %s367 = sphi 0, %s366
      %s381 = sphi 0, %s367
      %s385 = sphi 0, %s385
      %s387 = sphi 0, %s385
      %s388 = sphi 0, %s387
      %s402 = sphi 0, %s388
      %s406 = sphi 0, %s406
      %s408 = sphi 0, %s406
      %s409 = sphi 0, %s408
      %s423 = sphi 0, %s409
      %s431 = sphi 0, %s433
      %s434 = sphi 0, %s431
      %s435 = sphi 0, %s434
      %s451 = sphi 0, %s435
    $region4: #{tpu_custom_call.1} parent=1 // loop_header_branch
      %37 = sbr.rel (%p35) target = $region8
    $region5: #{tpu_custom_call.1} parent=1 // loop_body
      %s39 = ssub.s32 %s34, 1
      %s40 = ssub.s32 %s34, 2
      %s47 = sadd.s32 1, %s42
      %p48 = scmp.ge.s32.totalorder %s47, 2
      %s49 = scalar_select %p48, 0, %s47
      %s50 = sadd.s32 1, %s41
      %s51 = scalar_select %p48, %s50, %s41
      %p52 = scmp.ge.s32.totalorder %s51, 2
      %s53 = scalar_select %p52, 0, %s51
      %s54 = ssub.s32 %s41, %s53
      %s55 = ssub.s32 %s42, %s49
      %s56 = sor.u32 %s54, %s55
      %p57 = scmp.eq.s32.totalorder %s56, 0
      %s59 = sadd.s32 %s58, 1
      %s60 = scalar_select %p57, %s58, %s59
      %p63 = pneg %p57
      %p64 = scmp.eq.s32.totalorder %s34, 3
      %p65 = por %p63, %p64
      %p66 = scmp.ne.s32.totalorder %s58, %s61
      %p67 = scmp.eq.s32.totalorder %s34, 0
      %p68 = por %p66, %p67
      %p69 = scmp.ne.s32.totalorder %s58, %s61
      %p70 = scmp.eq.s32.totalorder %s39, 3
      %p71 = por %p69, %p70
      %p72 = scmp.ne.s32.totalorder %s61, %s62
      %p73 = scmp.eq.s32.totalorder %s39, 0
      %p74 = por %p72, %p73
      %p75 = scmp.ne.s32.totalorder %s61, %s62
      %p76 = scmp.eq.s32.totalorder %s40, 3
      %p77 = por %p75, %p76
      %p79 = scmp.ne.s32.totalorder %s62, %s78
      %p80 = scmp.eq.s32.totalorder %s40, 0
      %p81 = por %p79, %p80
      %s82 = sadd.s32 %s42, 1
      %s83 = sadd.s32 %s49, 1
      %s84 = ssub.s32 %s41, %s53
      %s85 = ssub.s32 %s82, %s83
      %s86 = sor.u32 %s84, %s85
      %p87 = scmp.eq.s32.totalorder %s86, 0
      %s89 = sadd.s32 %s88, 1
      %s90 = scalar_select %p87, %s88, %s89
      %p93 = pneg %p87
      %p94 = scmp.eq.s32.totalorder %s34, 3
      %p95 = por %p93, %p94
      %p96 = scmp.ne.s32.totalorder %s88, %s91
      %p97 = scmp.eq.s32.totalorder %s34, 0
      %p98 = por %p96, %p97
      %p99 = scmp.ne.s32.totalorder %s88, %s91
      %p100 = scmp.eq.s32.totalorder %s39, 3
      %p101 = por %p99, %p100
      %p102 = scmp.ne.s32.totalorder %s91, %s92
      %p103 = scmp.eq.s32.totalorder %s39, 0
      %p104 = por %p102, %p103
      %p105 = scmp.ne.s32.totalorder %s91, %s92
      %p106 = scmp.eq.s32.totalorder %s40, 3
      %p107 = por %p105, %p106
      %p109 = scmp.ne.s32.totalorder %s92, %s108
      %p110 = scmp.eq.s32.totalorder %s40, 0
      %p111 = por %p109, %p110
      %s113 = sadd.s32 %s112, 1
      %p116 = scmp.eq.s32.totalorder %s34, 3
      %p117 = scmp.ne.s32.totalorder %s112, %s114
      %p118 = scmp.eq.s32.totalorder %s34, 0
      %p119 = por %p117, %p118
      %p120 = scmp.ne.s32.totalorder %s112, %s114
      %p121 = scmp.eq.s32.totalorder %s39, 3
      %p122 = por %p120, %p121
      %p123 = scmp.ne.s32.totalorder %s114, %s115
      %p124 = scmp.eq.s32.totalorder %s39, 0
      %p125 = por %p123, %p124
      %p126 = scmp.ne.s32.totalorder %s114, %s115
      %p127 = scmp.eq.s32.totalorder %s40, 3
      %p128 = por %p126, %p127
      %p130 = scmp.ne.s32.totalorder %s115, %s129
      %p131 = scmp.eq.s32.totalorder %s40, 0
      %p132 = por %p130, %p131
      %s134 = sadd.s32 %s133, 1
      %p137 = scmp.eq.s32.totalorder %s34, 3
      %p138 = scmp.ne.s32.totalorder %s133, %s135
      %p139 = scmp.eq.s32.totalorder %s34, 0
      %p140 = por %p138, %p139
      %p141 = scmp.ne.s32.totalorder %s133, %s135
      %p142 = scmp.eq.s32.totalorder %s39, 3
      %p143 = por %p141, %p142
      %p144 = scmp.ne.s32.totalorder %s135, %s136
      %p145 = scmp.eq.s32.totalorder %s39, 0
      %p146 = por %p144, %p145
      %p147 = scmp.ne.s32.totalorder %s135, %s136
      %p148 = scmp.eq.s32.totalorder %s40, 3
      %p149 = por %p147, %p148
      %p151 = scmp.ne.s32.totalorder %s136, %s150
      %p152 = scmp.eq.s32.totalorder %s40, 0
      %p153 = por %p151, %p152
      %s155 = sadd.s32 %s154, 1
      %p158 = scmp.eq.s32.totalorder %s34, 3
      %p159 = scmp.ne.s32.totalorder %s154, %s156
      %p160 = scmp.eq.s32.totalorder %s34, 0
      %p161 = por %p159, %p160
      %p162 = scmp.ne.s32.totalorder %s154, %s156
      %p163 = scmp.eq.s32.totalorder %s39, 3
      %p164 = por %p162, %p163
      %p165 = scmp.ne.s32.totalorder %s156, %s157
      %p166 = scmp.eq.s32.totalorder %s39, 0
      %p167 = por %p165, %p166
      %p168 = scmp.ne.s32.totalorder %s156, %s157
      %p169 = scmp.eq.s32.totalorder %s40, 3
      %p170 = por %p168, %p169
      %p172 = scmp.ne.s32.totalorder %s157, %s171
      %p173 = scmp.eq.s32.totalorder %s40, 0
      %p174 = por %p172, %p173
      %s176 = sadd.s32 %s175, 1
      %p179 = scmp.eq.s32.totalorder %s34, 3
      %p180 = scmp.ne.s32.totalorder %s175, %s177
      %p181 = scmp.eq.s32.totalorder %s34, 0
      %p182 = por %p180, %p181
      %p183 = scmp.ne.s32.totalorder %s175, %s177
      %p184 = scmp.eq.s32.totalorder %s39, 3
      %p185 = por %p183, %p184
      %p186 = scmp.ne.s32.totalorder %s177, %s178
      %p187 = scmp.eq.s32.totalorder %s39, 0
      %p188 = por %p186, %p187
      %p189 = scmp.ne.s32.totalorder %s177, %s178
      %p190 = scmp.eq.s32.totalorder %s40, 3
      %p191 = por %p189, %p190
      %p193 = scmp.ne.s32.totalorder %s178, %s192
      %p194 = scmp.eq.s32.totalorder %s40, 0
      %p195 = por %p193, %p194
      %s197 = sadd.s32 %s196, 1
      %p200 = scmp.eq.s32.totalorder %s34, 3
      %p201 = scmp.ne.s32.totalorder %s196, %s198
      %p202 = scmp.eq.s32.totalorder %s34, 0
      %p203 = por %p201, %p202
      %p204 = scmp.ne.s32.totalorder %s196, %s198
      %p205 = scmp.eq.s32.totalorder %s39, 3
      %p206 = por %p204, %p205
      %p207 = scmp.ne.s32.totalorder %s198, %s199
      %p208 = scmp.eq.s32.totalorder %s39, 0
      %p209 = por %p207, %p208
      %p210 = scmp.ne.s32.totalorder %s198, %s199
      %p211 = scmp.eq.s32.totalorder %s40, 3
      %p212 = por %p210, %p211
      %p214 = scmp.ne.s32.totalorder %s199, %s213
      %p215 = scmp.eq.s32.totalorder %s40, 0
      %p216 = por %p214, %p215
      %s218 = sadd.s32 %s217, 1
      %p221 = scmp.eq.s32.totalorder %s34, 3
      %p222 = scmp.ne.s32.totalorder %s217, %s219
      %p223 = scmp.eq.s32.totalorder %s34, 0
      %p224 = por %p222, %p223
      %p225 = scmp.ne.s32.totalorder %s217, %s219
      %p226 = scmp.eq.s32.totalorder %s39, 3
      %p227 = por %p225, %p226
      %p228 = scmp.ne.s32.totalorder %s219, %s220
      %p229 = scmp.eq.s32.totalorder %s39, 0
      %p230 = por %p228, %p229
      %p231 = scmp.ne.s32.totalorder %s219, %s220
      %p232 = scmp.eq.s32.totalorder %s40, 3
      %p233 = por %p231, %p232
      %p235 = scmp.ne.s32.totalorder %s220, %s234
      %p236 = scmp.eq.s32.totalorder %s40, 0
      %p237 = por %p235, %p236
      %s239 = sadd.s32 %s238, 1
      %p242 = scmp.eq.s32.totalorder %s34, 3
      %p243 = scmp.ne.s32.totalorder %s238, %s240
      %p244 = scmp.eq.s32.totalorder %s34, 0
      %p245 = por %p243, %p244
      %p246 = scmp.ne.s32.totalorder %s238, %s240
      %p247 = scmp.eq.s32.totalorder %s39, 3
      %p248 = por %p246, %p247
      %p249 = scmp.ne.s32.totalorder %s240, %s241
      %p250 = scmp.eq.s32.totalorder %s39, 0
      %p251 = por %p249, %p250
      %p252 = scmp.ne.s32.totalorder %s240, %s241
      %p253 = scmp.eq.s32.totalorder %s40, 3
      %p254 = por %p252, %p253
      %p256 = scmp.ne.s32.totalorder %s241, %s255
      %p257 = scmp.eq.s32.totalorder %s40, 0
      %p258 = por %p256, %p257
      %s260 = sadd.s32 %s259, 1
      %p263 = scmp.eq.s32.totalorder %s34, 3
      %p264 = scmp.ne.s32.totalorder %s259, %s261
      %p265 = scmp.eq.s32.totalorder %s34, 0
      %p266 = por %p264, %p265
      %p267 = scmp.ne.s32.totalorder %s259, %s261
      %p268 = scmp.eq.s32.totalorder %s39, 3
      %p269 = por %p267, %p268
      %p270 = scmp.ne.s32.totalorder %s261, %s262
      %p271 = scmp.eq.s32.totalorder %s39, 0
      %p272 = por %p270, %p271
      %p273 = scmp.ne.s32.totalorder %s261, %s262
      %p274 = scmp.eq.s32.totalorder %s40, 3
      %p275 = por %p273, %p274
      %p277 = scmp.ne.s32.totalorder %s262, %s276
      %p278 = scmp.eq.s32.totalorder %s40, 0
      %p279 = por %p277, %p278
      %s281 = sadd.s32 %s280, 1
      %p284 = scmp.eq.s32.totalorder %s34, 3
      %p285 = scmp.ne.s32.totalorder %s280, %s282
      %p286 = scmp.eq.s32.totalorder %s34, 0
      %p287 = por %p285, %p286
      %p288 = scmp.ne.s32.totalorder %s280, %s282
      %p289 = scmp.eq.s32.totalorder %s39, 3
      %p290 = por %p288, %p289
      %p291 = scmp.ne.s32.totalorder %s282, %s283
      %p292 = scmp.eq.s32.totalorder %s39, 0
      %p293 = por %p291, %p292
      %p294 = scmp.ne.s32.totalorder %s282, %s283
      %p295 = scmp.eq.s32.totalorder %s40, 3
      %p296 = por %p294, %p295
      %p298 = scmp.ne.s32.totalorder %s283, %s297
      %p299 = scmp.eq.s32.totalorder %s40, 0
      %p300 = por %p298, %p299
      %s302 = sadd.s32 %s301, 1
      %p305 = scmp.eq.s32.totalorder %s34, 3
      %p306 = scmp.ne.s32.totalorder %s301, %s303
      %p307 = scmp.eq.s32.totalorder %s34, 0
      %p308 = por %p306, %p307
      %p309 = scmp.ne.s32.totalorder %s301, %s303
      %p310 = scmp.eq.s32.totalorder %s39, 3
      %p311 = por %p309, %p310
      %p312 = scmp.ne.s32.totalorder %s303, %s304
      %p313 = scmp.eq.s32.totalorder %s39, 0
      %p314 = por %p312, %p313
      %p315 = scmp.ne.s32.totalorder %s303, %s304
      %p316 = scmp.eq.s32.totalorder %s40, 3
      %p317 = por %p315, %p316
      %p319 = scmp.ne.s32.totalorder %s304, %s318
      %p320 = scmp.eq.s32.totalorder %s40, 0
      %p321 = por %p319, %p320
      %s323 = sadd.s32 %s322, 1
      %p326 = scmp.eq.s32.totalorder %s34, 3
      %p327 = scmp.ne.s32.totalorder %s322, %s324
      %p328 = scmp.eq.s32.totalorder %s34, 0
      %p329 = por %p327, %p328
      %p330 = scmp.ne.s32.totalorder %s322, %s324
      %p331 = scmp.eq.s32.totalorder %s39, 3
      %p332 = por %p330, %p331
      %p333 = scmp.ne.s32.totalorder %s324, %s325
      %p334 = scmp.eq.s32.totalorder %s39, 0
      %p335 = por %p333, %p334
      %p336 = scmp.ne.s32.totalorder %s324, %s325
      %p337 = scmp.eq.s32.totalorder %s40, 3
      %p338 = por %p336, %p337
      %p340 = scmp.ne.s32.totalorder %s325, %s339
      %p341 = scmp.eq.s32.totalorder %s40, 0
      %p342 = por %p340, %p341
      %s344 = sadd.s32 %s343, 1
      %p347 = scmp.eq.s32.totalorder %s34, 3
      %p348 = scmp.ne.s32.totalorder %s343, %s345
      %p349 = scmp.eq.s32.totalorder %s34, 0
      %p350 = por %p348, %p349
      %p351 = scmp.ne.s32.totalorder %s343, %s345
      %p352 = scmp.eq.s32.totalorder %s39, 3
      %p353 = por %p351, %p352
      %p354 = scmp.ne.s32.totalorder %s345, %s346
      %p355 = scmp.eq.s32.totalorder %s39, 0
      %p356 = por %p354, %p355
      %p357 = scmp.ne.s32.totalorder %s345, %s346
      %p358 = scmp.eq.s32.totalorder %s40, 3
      %p359 = por %p357, %p358
      %p361 = scmp.ne.s32.totalorder %s346, %s360
      %p362 = scmp.eq.s32.totalorder %s40, 0
      %p363 = por %p361, %p362
      %s365 = sadd.s32 %s364, 1
      %p368 = scmp.eq.s32.totalorder %s34, 3
      %p369 = scmp.ne.s32.totalorder %s364, %s366
      %p370 = scmp.eq.s32.totalorder %s34, 0
      %p371 = por %p369, %p370
      %p372 = scmp.ne.s32.totalorder %s364, %s366
      %p373 = scmp.eq.s32.totalorder %s39, 3
      %p374 = por %p372, %p373
      %p375 = scmp.ne.s32.totalorder %s366, %s367
      %p376 = scmp.eq.s32.totalorder %s39, 0
      %p377 = por %p375, %p376
      %p378 = scmp.ne.s32.totalorder %s366, %s367
      %p379 = scmp.eq.s32.totalorder %s40, 3
      %p380 = por %p378, %p379
      %p382 = scmp.ne.s32.totalorder %s367, %s381
      %p383 = scmp.eq.s32.totalorder %s40, 0
      %p384 = por %p382, %p383
      %s386 = sadd.s32 %s385, 1
      %p389 = scmp.eq.s32.totalorder %s34, 3
      %p390 = scmp.ne.s32.totalorder %s385, %s387
      %p391 = scmp.eq.s32.totalorder %s34, 0
      %p392 = por %p390, %p391
      %p393 = scmp.ne.s32.totalorder %s385, %s387
      %p394 = scmp.eq.s32.totalorder %s39, 3
      %p395 = por %p393, %p394
      %p396 = scmp.ne.s32.totalorder %s387, %s388
      %p397 = scmp.eq.s32.totalorder %s39, 0
      %p398 = por %p396, %p397
      %p399 = scmp.ne.s32.totalorder %s387, %s388
      %p400 = scmp.eq.s32.totalorder %s40, 3
      %p401 = por %p399, %p400
      %p403 = scmp.ne.s32.totalorder %s388, %s402
      %p404 = scmp.eq.s32.totalorder %s40, 0
      %p405 = por %p403, %p404
      %s407 = sadd.s32 %s406, 1
      %p410 = scmp.eq.s32.totalorder %s34, 3
      %p411 = scmp.ne.s32.totalorder %s406, %s408
      %p412 = scmp.eq.s32.totalorder %s34, 0
      %p413 = por %p411, %p412
      %p414 = scmp.ne.s32.totalorder %s406, %s408
      %p415 = scmp.eq.s32.totalorder %s39, 3
      %p416 = por %p414, %p415
      %p417 = scmp.ne.s32.totalorder %s408, %s409
      %p418 = scmp.eq.s32.totalorder %s39, 0
      %p419 = por %p417, %p418
      %p420 = scmp.ne.s32.totalorder %s408, %s409
      %p421 = scmp.eq.s32.totalorder %s40, 3
      %p422 = por %p420, %p421
      %p424 = scmp.ne.s32.totalorder %s409, %s423
      %p425 = scmp.eq.s32.totalorder %s40, 0
      %p426 = por %p424, %p425
      %s427 = ssub.s32 %s41, %s53
      %s428 = ssub.s32 %s42, %s49
      %s429 = sor.u32 %s427, %s428
      %p430 = scmp.eq.s32.totalorder %s429, 0
      %s432 = sadd.s32 %s431, 1
      %s433 = scalar_select %p430, %s431, %s432
      %p436 = pneg %p430
      %p437 = scmp.eq.s32.totalorder %s34, 3
      %p438 = por %p436, %p437
      %p439 = scmp.ne.s32.totalorder %s431, %s434
      %p440 = scmp.eq.s32.totalorder %s34, 0
      %p441 = por %p439, %p440
      %p442 = scmp.ne.s32.totalorder %s431, %s434
      %p443 = scmp.eq.s32.totalorder %s39, 3
      %p444 = por %p442, %p443
      %p445 = scmp.ne.s32.totalorder %s434, %s435
      %p446 = scmp.eq.s32.totalorder %s39, 0
      %p447 = por %p445, %p446
      %p448 = scmp.ne.s32.totalorder %s434, %s435
      %p449 = scmp.eq.s32.totalorder %s40, 3
      %p450 = por %p448, %p449
      %p452 = scmp.ne.s32.totalorder %s435, %s451
      %p453 = scmp.eq.s32.totalorder %s40, 0
      %p454 = por %p452, %p453
      %p455 = scmp.le.s32.totalorder 1, %s34
      %p456 = scmp.lt.s32.totalorder %s34, 5
      %p457 = pnand %p455, %p456
      %p458 = pneg %p457
      // Predicated region
      $region9: #{tpu_custom_call.1} parent=5 // pred_check
        _
      $region10: #{tpu_custom_call.1} parent=5 // pred_check_branch
        %460 = sbr.rel (%p457) target = $region12
      $region11: #{tpu_custom_call.1} parent=5 // pred_region
        %s461 = ssub.s32 %s34, 1
        // Predicated region
        $region13: #{tpu_custom_call.1} parent=11 // pred_check
          %p462 = pneg %p125
        $region14: #{tpu_custom_call.1} parent=11 // pred_check_branch
          %464 = sbr.rel (%p462) target = $region16
        $region15: #{tpu_custom_call.1} parent=11 // pred_region
          %s466 = ssub.s32 5120, 5120
          %467 = vsyncadd [#allocation6], %s466
          %s468 = sshll.u32 [#allocation7], 4
          %s469 = int_to_ptr.vmem [resolvable:$true] %s468
          %474 = dma.hbm_to_vmem [thread:$0]  %s2, 5120, %s469, [#allocation6], 64, 64, 4
        $region16: #{tpu_custom_call.1} parent=11 // pred_fallthru
          _
        // Predicated region
        $region17: #{tpu_custom_call.1} parent=11 // pred_check
          %p475 = pneg %p146
        $region18: #{tpu_custom_call.1} parent=11 // pred_check_branch
          %477 = sbr.rel (%p475) target = $region20
        $region19: #{tpu_custom_call.1} parent=11 // pred_region
          _
        $region20: #{tpu_custom_call.1} parent=11 // pred_fallthru
          _
        // Predicated region
        $region21: #{tpu_custom_call.1} parent=11 // pred_check
          %p478 = pneg %p167
        $region22: #{tpu_custom_call.1} parent=11 // pred_check_branch
          %480 = sbr.rel (%p478) target = $region24
        $region23: #{tpu_custom_call.1} parent=11 // pred_region
          _
        $region24: #{tpu_custom_call.1} parent=11 // pred_fallthru
          _
        // Predicated region
        $region25: #{tpu_custom_call.1} parent=11 // pred_check
          %p481 = pneg %p188
        $region26: #{tpu_custom_call.1} parent=11 // pred_check_branch
          %483 = sbr.rel (%p481) target = $region28
        $region27: #{tpu_custom_call.1} parent=11 // pred_region
          %s485 = ssub.s32 5120, 5120
          %486 = vsyncadd [#allocation9], %s485
          %s487 = sshll.u32 [#allocation8], 4
          %s488 = int_to_ptr.vmem [resolvable:$true] %s487
          %493 = dma.hbm_to_vmem [thread:$0]  %s5, 5120, %s488, [#allocation9], 64, 64, 4
        $region28: #{tpu_custom_call.1} parent=11 // pred_fallthru
          _
        // Predicated region
        $region29: #{tpu_custom_call.1} parent=11 // pred_check
          %p494 = pneg %p209
        $region30: #{tpu_custom_call.1} parent=11 // pred_check_branch
          %496 = sbr.rel (%p494) target = $region32
        $region31: #{tpu_custom_call.1} parent=11 // pred_region
          _
        $region32: #{tpu_custom_call.1} parent=11 // pred_fallthru
          _
        // Predicated region
        $region33: #{tpu_custom_call.1} parent=11 // pred_check
          %p497 = pneg %p230
        $region34: #{tpu_custom_call.1} parent=11 // pred_check_branch
          %499 = sbr.rel (%p497) target = $region36
        $region35: #{tpu_custom_call.1} parent=11 // pred_region
          _
        $region36: #{tpu_custom_call.1} parent=11 // pred_fallthru
          _
        // Predicated region
        $region37: #{tpu_custom_call.1} parent=11 // pred_check
          %p500 = pneg %p251
        $region38: #{tpu_custom_call.1} parent=11 // pred_check_branch
          %502 = sbr.rel (%p500) target = $region40
        $region39: #{tpu_custom_call.1} parent=11 // pred_region
          %s504 = ssub.s32 5120, 5120
          %505 = vsyncadd [#allocation9], %s504
          %s506 = sshll.u32 [#allocation10], 4
          %s507 = int_to_ptr.vmem [resolvable:$true] %s506
          %512 = dma.hbm_to_vmem [thread:$0]  %s8, 5120, %s507, [#allocation9], 64, 64, 4
        $region40: #{tpu_custom_call.1} parent=11 // pred_fallthru
          _
        // Predicated region
        $region41: #{tpu_custom_call.1} parent=11 // pred_check
          %p513 = pneg %p272
        $region42: #{tpu_custom_call.1} parent=11 // pred_check_branch
          %515 = sbr.rel (%p513) target = $region44
        $region43: #{tpu_custom_call.1} parent=11 // pred_region
          _
        $region44: #{tpu_custom_call.1} parent=11 // pred_fallthru
          _
        // Predicated region
        $region45: #{tpu_custom_call.1} parent=11 // pred_check
          %p516 = pneg %p293
        $region46: #{tpu_custom_call.1} parent=11 // pred_check_branch
          %518 = sbr.rel (%p516) target = $region48
        $region47: #{tpu_custom_call.1} parent=11 // pred_region
          _
        $region48: #{tpu_custom_call.1} parent=11 // pred_fallthru
          _
        // Predicated region
        $region49: #{tpu_custom_call.1} parent=11 // pred_check
          %p519 = pneg %p314
        $region50: #{tpu_custom_call.1} parent=11 // pred_check_branch
          %521 = sbr.rel (%p519) target = $region52
        $region51: #{tpu_custom_call.1} parent=11 // pred_region
          %s523 = ssub.s32 5120, 5120
          %524 = vsyncadd [#allocation12], %s523
          %s525 = sshll.u32 [#allocation11], 4
          %s526 = int_to_ptr.vmem [resolvable:$true] %s525
          %531 = dma.hbm_to_vmem [thread:$0]  %s11, 5120, %s526, [#allocation12], 64, 64, 4
        $region52: #{tpu_custom_call.1} parent=11 // pred_fallthru
          _
        // Predicated region
        $region53: #{tpu_custom_call.1} parent=11 // pred_check
          %p532 = pneg %p335
        $region54: #{tpu_custom_call.1} parent=11 // pred_check_branch
          %534 = sbr.rel (%p532) target = $region56
        $region55: #{tpu_custom_call.1} parent=11 // pred_region
          _
        $region56: #{tpu_custom_call.1} parent=11 // pred_fallthru
          _
        // Predicated region
        $region57: #{tpu_custom_call.1} parent=11 // pred_check
          %p535 = pneg %p356
        $region58: #{tpu_custom_call.1} parent=11 // pred_check_branch
          %537 = sbr.rel (%p535) target = $region60
        $region59: #{tpu_custom_call.1} parent=11 // pred_region
          _
        $region60: #{tpu_custom_call.1} parent=11 // pred_fallthru
          _
        // Predicated region
        $region61: #{tpu_custom_call.1} parent=11 // pred_check
          %p538 = pneg %p377
        $region62: #{tpu_custom_call.1} parent=11 // pred_check_branch
          %540 = sbr.rel (%p538) target = $region64
        $region63: #{tpu_custom_call.1} parent=11 // pred_region
          %s542 = ssub.s32 5120, 5120
          %543 = vsyncadd [#allocation12], %s542
          %s544 = sshll.u32 [#allocation13], 4
          %s545 = int_to_ptr.vmem [resolvable:$true] %s544
          %550 = dma.hbm_to_vmem [thread:$0]  %s14, 5120, %s545, [#allocation12], 64, 64, 4
        $region64: #{tpu_custom_call.1} parent=11 // pred_fallthru
          _
        // Predicated region
        $region65: #{tpu_custom_call.1} parent=11 // pred_check
          %p551 = pneg %p398
        $region66: #{tpu_custom_call.1} parent=11 // pred_check_branch
          %553 = sbr.rel (%p551) target = $region68
        $region67: #{tpu_custom_call.1} parent=11 // pred_region
          _
        $region68: #{tpu_custom_call.1} parent=11 // pred_fallthru
          _
        // Predicated region
        $region69: #{tpu_custom_call.1} parent=11 // pred_check
          %p554 = pneg %p419
        $region70: #{tpu_custom_call.1} parent=11 // pred_check_branch
          %556 = sbr.rel (%p554) target = $region72
        $region71: #{tpu_custom_call.1} parent=11 // pred_region
          _
        $region72: #{tpu_custom_call.1} parent=11 // pred_fallthru
          _
      $region12: #{tpu_custom_call.1} parent=5 // pred_fallthru
        _
      %p557 = scmp.lt.s32.totalorder %s34, 4
      // Predicated region
      $region73: #{tpu_custom_call.1} parent=5 // pred_check
        %p558 = pneg %p557
      $region74: #{tpu_custom_call.1} parent=5 // pred_check_branch
        %560 = sbr.rel (%p558) target = $region76
      $region75: #{tpu_custom_call.1} parent=5 // pred_region
        // Predicated region
        $region77: #{tpu_custom_call.1} parent=75 // pred_check
          %p561 = pneg %p68
        $region78: #{tpu_custom_call.1} parent=75 // pred_check_branch
          %563 = sbr.rel (%p561) target = $region80
        $region79: #{tpu_custom_call.1} parent=75 // pred_region
          %s564 = sand.u32 %s58, 1
          %s565 = scalar_lea.sflag [#allocation3], %s564
          %s566 = sand.u32 %s58, 1
          %s567 = smul.addr %s566, 12
          %s568 = scalar_lea.vmem [#allocation2], %s567
          %s569 = smul.u32 3, %s42
          %s571 = ssub.s32 192, 192
          %572 = vsyncadd %s565, %s571
          %s573 = smul.addr %s41, 9
          %s574 = sadd.s32 %s569, %s573
          %s575 = smul.addr %s574, 64
          %s576 = scalar_lea.hbm %s0, %s575
          %s577 = sshll.u32 %s568, 4
          %s578 = int_to_ptr.vmem [resolvable:$true] %s577
          %583 = dma.hbm_to_vmem [thread:$0]  %s576, 192, %s578, %s565, 64, 64, 4
        $region80: #{tpu_custom_call.1} parent=75 // pred_fallthru
          _
        // Predicated region
        $region81: #{tpu_custom_call.1} parent=75 // pred_check
          %p584 = pneg %p98
        $region82: #{tpu_custom_call.1} parent=75 // pred_check_branch
          %586 = sbr.rel (%p584) target = $region84
        $region83: #{tpu_custom_call.1} parent=75 // pred_region
          %s587 = sand.u32 %s34, 1
          %s588 = scalar_lea.sflag [#allocation6], %s587
          %s589 = sand.u32 %s88, 1
          %s590 = smul.addr %s589, 12
          %s591 = scalar_lea.vmem [#allocation5], %s590
          %s592 = sadd.s32 %s42, 1
          %s593 = smul.u32 3, %s592
          %s595 = ssub.s32 192, 192
          %596 = vsyncadd %s588, %s595
          %s597 = smul.addr %s41, 9
          %s598 = sadd.s32 %s593, %s597
          %s599 = smul.addr %s598, 64
          %s600 = scalar_lea.hbm %s1, %s599
          %s601 = sshll.u32 %s591, 4
          %s602 = int_to_ptr.vmem [resolvable:$true] %s601
          %607 = dma.hbm_to_vmem [thread:$0]  %s600, 192, %s602, %s588, 64, 64, 4
        $region84: #{tpu_custom_call.1} parent=75 // pred_fallthru
          _
      $region76: #{tpu_custom_call.1} parent=5 // pred_fallthru
        _
      %p608 = scmp.le.s32.totalorder 1, %s34
      %p609 = scmp.lt.s32.totalorder %s34, 5
      %p610 = pnand %p608, %p609
      %p611 = pneg %p610
      // Predicated region
      $region85: #{tpu_custom_call.1} parent=5 // pred_check
        _
      $region86: #{tpu_custom_call.1} parent=5 // pred_check_branch
        %613 = sbr.rel (%p610) target = $region88
      $region87: #{tpu_custom_call.1} parent=5 // pred_region
        %s614 = ssub.s32 %s34, 1
        %s615 = sand.u32 %s61, 1
        %s616 = scalar_lea.sflag [#allocation3], %s615
        %s617 = sand.u32 %s61, 1
        %s618 = smul.addr %s617, 12
        %s619 = scalar_lea.vmem [#allocation2], %s618
        // Predicated region
        $region89: #{tpu_custom_call.1} parent=87 // pred_check
          %p620 = pneg %p74
        $region90: #{tpu_custom_call.1} parent=87 // pred_check_branch
          %622 = sbr.rel (%p620) target = $region92
        $region91: #{tpu_custom_call.1} parent=87 // pred_region
          %623 = dma.done %s616, 192
        $region92: #{tpu_custom_call.1} parent=87 // pred_fallthru
          _
        %s624 = sand.u32 %s39, 1
        %s625 = scalar_lea.sflag [#allocation6], %s624
        %s626 = sand.u32 %s91, 1
        %s627 = smul.addr %s626, 12
        %s628 = scalar_lea.vmem [#allocation5], %s627
        // Predicated region
        $region93: #{tpu_custom_call.1} parent=87 // pred_check
          %p629 = pneg %p104
        $region94: #{tpu_custom_call.1} parent=87 // pred_check_branch
          %631 = sbr.rel (%p629) target = $region96
        $region95: #{tpu_custom_call.1} parent=87 // pred_region
          %632 = dma.done %s625, 192
        $region96: #{tpu_custom_call.1} parent=87 // pred_fallthru
          _
        // Predicated region
        $region97: #{tpu_custom_call.1} parent=87 // pred_check
          %p633 = pneg %p125
        $region98: #{tpu_custom_call.1} parent=87 // pred_check_branch
          %635 = sbr.rel (%p633) target = $region100
        $region99: #{tpu_custom_call.1} parent=87 // pred_region
          %636 = dma.done [#allocation6], 5120
        $region100: #{tpu_custom_call.1} parent=87 // pred_fallthru
          _
        // Predicated region
        $region101: #{tpu_custom_call.1} parent=87 // pred_check
          %p637 = pneg %p188
        $region102: #{tpu_custom_call.1} parent=87 // pred_check_branch
          %639 = sbr.rel (%p637) target = $region104
        $region103: #{tpu_custom_call.1} parent=87 // pred_region
          %640 = dma.done [#allocation9], 5120
        $region104: #{tpu_custom_call.1} parent=87 // pred_fallthru
          _
        // Predicated region
        $region105: #{tpu_custom_call.1} parent=87 // pred_check
          %p641 = pneg %p251
        $region106: #{tpu_custom_call.1} parent=87 // pred_check_branch
          %643 = sbr.rel (%p641) target = $region108
        $region107: #{tpu_custom_call.1} parent=87 // pred_region
          %644 = dma.done [#allocation9], 5120
        $region108: #{tpu_custom_call.1} parent=87 // pred_fallthru
          _
        // Predicated region
        $region109: #{tpu_custom_call.1} parent=87 // pred_check
          %p645 = pneg %p314
        $region110: #{tpu_custom_call.1} parent=87 // pred_check_branch
          %647 = sbr.rel (%p645) target = $region112
        $region111: #{tpu_custom_call.1} parent=87 // pred_region
          %648 = dma.done [#allocation12], 5120
        $region112: #{tpu_custom_call.1} parent=87 // pred_fallthru
          _
        // Predicated region
        $region113: #{tpu_custom_call.1} parent=87 // pred_check
          %p649 = pneg %p377
        $region114: #{tpu_custom_call.1} parent=87 // pred_check_branch
          %651 = sbr.rel (%p649) target = $region116
        $region115: #{tpu_custom_call.1} parent=87 // pred_region
          %652 = dma.done [#allocation12], 5120
        $region116: #{tpu_custom_call.1} parent=87 // pred_fallthru
          _
        %s653 = sand.u32 %s61, 1
        %s654 = scalar_lea.sflag [#allocation3], %s653
        %s655 = sand.u32 %s61, 1
        %s656 = smul.addr %s655, 12
        %s657 = scalar_lea.vmem [#allocation2], %s656
        %p658 = pneg %p74
        %p659 = pneg %p71
        %s660 = sand.u32 %s39, 1
        %s661 = scalar_lea.sflag [#allocation6], %s660
        %s662 = sand.u32 %s91, 1
        %s663 = smul.addr %s662, 12
        %s664 = scalar_lea.vmem [#allocation5], %s663
        %p665 = pneg %p104
        %p666 = pneg %p101
        %p667 = pneg %p125
        %p668 = pneg %p122
        %p669 = pneg %p146
        %p670 = pneg %p143
        %p671 = pneg %p167
        %p672 = pneg %p164
        %p673 = pneg %p188
        %p674 = pneg %p185
        %p675 = pneg %p209
        %p676 = pneg %p206
        %p677 = pneg %p230
        %p678 = pneg %p227
        %p679 = pneg %p251
        %p680 = pneg %p248
        %p681 = pneg %p272
        %p682 = pneg %p269
        %p683 = pneg %p293
        %p684 = pneg %p290
        %p685 = pneg %p314
        %p686 = pneg %p311
        %p687 = pneg %p335
        %p688 = pneg %p332
        %p689 = pneg %p356
        %p690 = pneg %p353
        %p691 = pneg %p377
        %p692 = pneg %p374
        %p693 = pneg %p398
        %p694 = pneg %p395
        %p695 = pneg %p419
        %p696 = pneg %p416
        %p697 = pneg %p447
        %p698 = pneg %p444
        %s699 = sand.u32 %s434, 1
        %s700 = scalar_lea.sflag [#allocation4], %s699
        %s701 = sand.u32 %s434, 1
        %s702 = smul.addr %s701, 24
        %s703 = scalar_lea.vmem [#allocation14], %s702
        %s704 = smul.u32 3, %s44
        %s705 = sadd.s32 %s44, 1
        %s706 = smul.u32 3, %s705
        %s707 = smul.u32 3, %s44
        %v709 = vld [vmem:[%s619] sm:$0xf]
        %v710 = vld [vmem:[%s619 + $0x4] sm:$0xf]
        %v711 = vld [vmem:[%s619 + $0x8] sm:$0xf]
        %v712 = vld [vmem:[%s628] sm:$0xf]
        %v713 = vld [vmem:[%s628 + $0x4] sm:$0xf]
        %v714 = vld [vmem:[%s628 + $0x8] sm:$0x3]
        %v718 = vunpack.c.l.b16 %v709
        %v719 = vunpack.c.l.b16 %v710
        %v720 = vunpack.c.l.b16 %v711
        %v721 = vpack.c.b16 %v719, %v718
        %v722 = vpack.c.b16 %v720, %v720
        %v727 = vunpack.c.l.b16 %v712
        %v728 = vunpack.c.l.b16 %v713
        %v729 = vunpack.c.l.b16 %v714
        %v730 = vpack.c.b16 %v727, %v727
        %v731 = vpack.c.b16 %v729, %v728
        %vm733 = vcmask 1043456
        %v736 = vsel %vm733, %v722, %v730
        %v738 = vld [vmem:[#allocation7] sm:$0xf]
        %v739 = vld [vmem:[#allocation7 + $0x4] sm:$0xf]
        %v740 = vld [vmem:[#allocation7 + $0x8] sm:$0xf]
        %v741 = vld [vmem:[#allocation7 + $0xc] sm:$0xf]
        %v742 = vld [vmem:[#allocation7 + $0x10] sm:$0xf]
        %v743 = vld [vmem:[#allocation7 + $0x14] sm:$0xf]
        %v744 = vld [vmem:[#allocation7 + $0x18] sm:$0xf]
        %v745 = vld [vmem:[#allocation7 + $0x1c] sm:$0xf]
        %v746 = vld [vmem:[#allocation7 + $0x20] sm:$0xf]
        %v747 = vld [vmem:[#allocation7 + $0x24] sm:$0xf]
        %v748 = vld [vmem:[#allocation7 + $0x28] sm:$0xf]
        %v749 = vld [vmem:[#allocation7 + $0x2c] sm:$0xf]
        %v750 = vld [vmem:[#allocation7 + $0x30] sm:$0xf]
        %v751 = vld [vmem:[#allocation7 + $0x34] sm:$0xf]
        %v752 = vld [vmem:[#allocation7 + $0x38] sm:$0xf]
        %v753 = vld [vmem:[#allocation7 + $0x3c] sm:$0xf]
        %s754 = scalar_lea.vmem [#allocation7], 64
        %v755 = vld [vmem:[%s754] sm:$0xf]
        %v756 = vld [vmem:[%s754 + $0x4] sm:$0xf]
        %v757 = vld [vmem:[%s754 + $0x8] sm:$0xf]
        %v758 = vld [vmem:[%s754 + $0xc] sm:$0xf]
        %v759 = vld [vmem:[%s754 + $0x10] sm:$0xf]
        %v760 = vld [vmem:[%s754 + $0x14] sm:$0xf]
        %v761 = vld [vmem:[%s754 + $0x18] sm:$0xf]
        %v762 = vld [vmem:[%s754 + $0x1c] sm:$0xf]
        %v763 = vld [vmem:[%s754 + $0x20] sm:$0xf]
        %v764 = vld [vmem:[%s754 + $0x24] sm:$0xf]
        %v765 = vld [vmem:[%s754 + $0x28] sm:$0xf]
        %v766 = vld [vmem:[%s754 + $0x2c] sm:$0xf]
        %v767 = vld [vmem:[%s754 + $0x30] sm:$0xf]
        %v768 = vld [vmem:[%s754 + $0x34] sm:$0xf]
        %v769 = vld [vmem:[%s754 + $0x38] sm:$0xf]
        %v770 = vld [vmem:[%s754 + $0x3c] sm:$0xf]
        %vm771 = vsmask.f32 7424
        %v773 = vshrl.u32 %v721, 16
        %v775 = vshll.u32 %v721, 16
        %v777 = vrot.slane %v775, 1
        %v778 = vor.u32 %v773, %v777
        %v779 = vshll.u32 %v736, 16
        %v781 = vrot.slane %v779, 1
        %v782 = vsel %vm771, %v778, %v781
        %v783 = vshrl.u32 %v736, 16
        %v785 = vor.u32 %v783, %v781
        %v787 = vshll.u32 %v731, 16
        %v789 = vrot.slane %v787, 1
        %v790 = vsel %vm771, %v785, %v789
        %v791 = vshrl.u32 %v731, 16
        %v793 = vor.u32 %v791, %v789
        %v813 = vunpack.c.l.b16 %v755
        %v814 = vunpack.c.l.b16 %v756
        %v815 = vunpack.c.l.b16 %v757
        %v816 = vunpack.c.l.b16 %v758
        %v817 = vunpack.c.l.b16 %v759
        %v818 = vunpack.c.l.b16 %v760
        %v819 = vunpack.c.l.b16 %v761
        %v820 = vunpack.c.l.b16 %v762
        %v821 = vunpack.c.l.b16 %v763
        %v822 = vunpack.c.l.b16 %v764
        %v823 = vunpack.c.l.b16 %v765
        %v824 = vunpack.c.l.b16 %v766
        %v825 = vunpack.c.l.b16 %v767
        %v826 = vunpack.c.l.b16 %v768
        %v827 = vunpack.c.l.b16 %v769
        %v828 = vunpack.c.l.b16 %v770
        %v829 = vpack.c.b16 %v814, %v813
        %v830 = vpack.c.b16 %v816, %v815
        %v831 = vpack.c.b16 %v818, %v817
        %v832 = vpack.c.b16 %v820, %v819
        %v833 = vpack.c.b16 %v822, %v821
        %v834 = vpack.c.b16 %v824, %v823
        %v835 = vpack.c.b16 %v826, %v825
        %v836 = vpack.c.b16 %v828, %v827
        %845 = vmatprep.subr.bf16.mxu0 0
        %846 = vmatpush1.bf16.msra.mxu0 %v836
        %847 = vmatprep.subr.bf16.mxu0 0
        %848 = vmatpush1.bf16.msra.mxu0 %v835
        %849 = vmatprep.subr.bf16.mxu0 0
        %850 = vmatpush1.bf16.msra.mxu0 %v834
        %851 = vmatprep.subr.bf16.mxu0 0
        %852 = vmatpush1.bf16.msra.mxu0 %v833
        %853 = vmatprep.subr.bf16.mxu0 0
        %854 = vmatpush1.bf16.msra.mxu0 %v832
        %855 = vmatprep.subr.bf16.mxu0 0
        %856 = vmatpush1.bf16.msra.mxu0 %v831
        %857 = vmatprep.subr.bf16.mxu0 0
        %858 = vmatpush1.bf16.msra.mxu0 %v830
        %859 = vmatprep.subr.bf16.mxu0 0
        %860 = vmatpush1.bf16.msra.mxu0 %v829
        %861 = vmatprep.subr.bf16.mxu0 0
        %862 = vmatpush2.bf16.msra.mxu0 0
        %863 = vmatprep.subr.bf16.mxu0 0
        %864 = vmatpush2.bf16.msra.mxu0 0
        %865 = vmatprep.subr.bf16.mxu0 0
        %866 = vmatpush2.bf16.msra.mxu0 0
        %867 = vmatprep.subr.bf16.mxu0 0
        %868 = vmatpush2.bf16.msra.mxu0 0
        %869 = vmatprep.subr.bf16.mxu0 0
        %870 = vmatpush2.bf16.msra.mxu0 0
        %871 = vmatprep.subr.bf16.mxu0 0
        %872 = vmatpush2.bf16.msra.mxu0 0
        %873 = vmatprep.subr.bf16.mxu0 0
        %874 = vmatpush2.bf16.msra.mxu0 0
        %875 = vmatprep.subr.bf16.mxu0 0
        %876 = vmatpush2.bf16.msra.mxu0 0
        %877 = vmatprep.mubr.bf16.mxu0 0
        %878 = vmatmul.mubr.bf16.gmra.mxu0 %v782
        %v879 = vpop.f32.mrf.mxu0
        %v880 = vadd.f32 0.0, %v879
        %v881 = vpop.f32.mrf.mxu0
        %v882 = vpop.f32.mrf.mxu0
        %v883 = vadd.f32 0.0, %v882
        %v884 = vpop.f32.mrf.mxu0
        %885 = vmatprep.mubr.bf16.mxu0 0
        %886 = vmatmul.mubr.bf16.gmra.mxu0 %v790
        %v887 = vpop.f32.mrf.mxu0
        %v888 = vadd.f32 0.0, %v887
        %v889 = vpop.f32.mrf.mxu0
        %v890 = vpop.f32.mrf.mxu0
        %v891 = vadd.f32 0.0, %v890
        %v892 = vpop.f32.mrf.mxu0
        %893 = vmatprep.mubr.bf16.mxu0 0
        %894 = vmatmul.mubr.bf16.gmra.mxu0 %v793
        %v895 = vpop.f32.mrf.mxu0
        %v896 = vadd.f32 0.0, %v895
        %v897 = vpop.f32.mrf.mxu0
        %v898 = vpop.f32.mrf.mxu0
        %v899 = vpop.f32.mrf.mxu0
        %900 = vdwg.mxu0
        %v917 = vunpack.c.l.b16 %v738
        %v918 = vunpack.c.l.b16 %v739
        %v919 = vunpack.c.l.b16 %v740
        %v920 = vunpack.c.l.b16 %v741
        %v921 = vunpack.c.l.b16 %v742
        %v922 = vunpack.c.l.b16 %v743
        %v923 = vunpack.c.l.b16 %v744
        %v924 = vunpack.c.l.b16 %v745
        %v925 = vunpack.c.l.b16 %v746
        %v926 = vunpack.c.l.b16 %v747
        %v927 = vunpack.c.l.b16 %v748
        %v928 = vunpack.c.l.b16 %v749
        %v929 = vunpack.c.l.b16 %v750
        %v930 = vunpack.c.l.b16 %v751
        %v931 = vunpack.c.l.b16 %v752
        %v932 = vunpack.c.l.b16 %v753
        %v933 = vpack.c.b16 %v918, %v917
        %v934 = vpack.c.b16 %v920, %v919
        %v935 = vpack.c.b16 %v922, %v921
        %v936 = vpack.c.b16 %v924, %v923
        %v937 = vpack.c.b16 %v926, %v925
        %v938 = vpack.c.b16 %v928, %v927
        %v939 = vpack.c.b16 %v930, %v929
        %v940 = vpack.c.b16 %v932, %v931
        %949 = vmatprep.subr.bf16.mxu0 0
        %950 = vmatpush1.bf16.msra.mxu0 %v940
        %951 = vmatprep.subr.bf16.mxu0 0
        %952 = vmatpush1.bf16.msra.mxu0 %v939
        %953 = vmatprep.subr.bf16.mxu0 0
        %954 = vmatpush1.bf16.msra.mxu0 %v938
        %955 = vmatprep.subr.bf16.mxu0 0
        %956 = vmatpush1.bf16.msra.mxu0 %v937
        %957 = vmatprep.subr.bf16.mxu0 0
        %958 = vmatpush1.bf16.msra.mxu0 %v936
        %959 = vmatprep.subr.bf16.mxu0 0
        %960 = vmatpush1.bf16.msra.mxu0 %v935
        %961 = vmatprep.subr.bf16.mxu0 0
        %962 = vmatpush1.bf16.msra.mxu0 %v934
        %963 = vmatprep.subr.bf16.mxu0 0
        %964 = vmatpush1.bf16.msra.mxu0 %v933
        %965 = vmatprep.subr.bf16.mxu0 0
        %966 = vmatpush2.bf16.msra.mxu0 0
        %967 = vmatprep.subr.bf16.mxu0 0
        %968 = vmatpush2.bf16.msra.mxu0 0
        %969 = vmatprep.subr.bf16.mxu0 0
        %970 = vmatpush2.bf16.msra.mxu0 0
        %971 = vmatprep.subr.bf16.mxu0 0
        %972 = vmatpush2.bf16.msra.mxu0 0
        %973 = vmatprep.subr.bf16.mxu0 0
        %974 = vmatpush2.bf16.msra.mxu0 0
        %975 = vmatprep.subr.bf16.mxu0 0
        %976 = vmatpush2.bf16.msra.mxu0 0
        %977 = vmatprep.subr.bf16.mxu0 0
        %978 = vmatpush2.bf16.msra.mxu0 0
        %979 = vmatprep.subr.bf16.mxu0 0
        %980 = vmatpush2.bf16.msra.mxu0 0
        %981 = vmatprep.mubr.bf16.mxu0 0
        %982 = vmatmul.mubr.bf16.gmra.mxu0 %v721
        %v983 = vpop.f32.mrf.mxu0
        %v984 = vadd.f32 %v880, %v983
        %v985 = vpop.f32.mrf.mxu0
        %v986 = vpop.f32.mrf.mxu0
        %v987 = vadd.f32 %v883, %v986
        %v988 = vpop.f32.mrf.mxu0
        %989 = vmatprep.mubr.bf16.mxu0 0
        %990 = vmatmul.mubr.bf16.gmra.mxu0 %v736
        %v991 = vpop.f32.mrf.mxu0
        %v992 = vadd.f32 %v888, %v991
        %v993 = vpop.f32.mrf.mxu0
        %v994 = vpop.f32.mrf.mxu0
        %v995 = vadd.f32 %v891, %v994
        %v996 = vpop.f32.mrf.mxu0
        %997 = vmatprep.mubr.bf16.mxu0 0
        %998 = vmatmul.mubr.bf16.gmra.mxu0 %v731
        %v999 = vpop.f32.mrf.mxu0
        %v1000 = vadd.f32 %v896, %v999
        %v1001 = vpop.f32.mrf.mxu0
        %v1002 = vpop.f32.mrf.mxu0
        %v1003 = vpop.f32.mrf.mxu0
        %1004 = vdwg.mxu0
        %s1005 = scalar_lea.vmem [#allocation7], 128
        %v1006 = vld [vmem:[%s1005] sm:$0xf]
        %v1007 = vld [vmem:[%s1005 + $0x4] sm:$0xf]
        %v1008 = vld [vmem:[%s1005 + $0x8] sm:$0xf]
        %v1009 = vld [vmem:[%s1005 + $0xc] sm:$0xf]
        %v1010 = vld [vmem:[%s1005 + $0x10] sm:$0xf]
        %v1011 = vld [vmem:[%s1005 + $0x14] sm:$0xf]
        %v1012 = vld [vmem:[%s1005 + $0x18] sm:$0xf]
        %v1013 = vld [vmem:[%s1005 + $0x1c] sm:$0xf]
        %v1014 = vld [vmem:[%s1005 + $0x20] sm:$0xf]
        %v1015 = vld [vmem:[%s1005 + $0x24] sm:$0xf]
        %v1016 = vld [vmem:[%s1005 + $0x28] sm:$0xf]
        %v1017 = vld [vmem:[%s1005 + $0x2c] sm:$0xf]
        %v1018 = vld [vmem:[%s1005 + $0x30] sm:$0xf]
        %v1019 = vld [vmem:[%s1005 + $0x34] sm:$0xf]
        %v1020 = vld [vmem:[%s1005 + $0x38] sm:$0xf]
        %v1021 = vld [vmem:[%s1005 + $0x3c] sm:$0xf]
        %vm1023 = vcmask 1046528
        %v1024 = vrot.slane %v721, 1
        %v1025 = vrot.slane %v736, 1
        %v1026 = vsel %vm1023, %v1024, %v1025
        %v1027 = vrot.slane %v731, 1
        %v1028 = vsel %vm1023, %v1025, %v1027
        %v1048 = vunpack.c.l.b16 %v1006
        %v1049 = vunpack.c.l.b16 %v1007
        %v1050 = vunpack.c.l.b16 %v1008
        %v1051 = vunpack.c.l.b16 %v1009
        %v1052 = vunpack.c.l.b16 %v1010
        %v1053 = vunpack.c.l.b16 %v1011
        %v1054 = vunpack.c.l.b16 %v1012
        %v1055 = vunpack.c.l.b16 %v1013
        %v1056 = vunpack.c.l.b16 %v1014
        %v1057 = vunpack.c.l.b16 %v1015
        %v1058 = vunpack.c.l.b16 %v1016
        %v1059 = vunpack.c.l.b16 %v1017
        %v1060 = vunpack.c.l.b16 %v1018
        %v1061 = vunpack.c.l.b16 %v1019
        %v1062 = vunpack.c.l.b16 %v1020
        %v1063 = vunpack.c.l.b16 %v1021
        %v1064 = vpack.c.b16 %v1049, %v1048
        %v1065 = vpack.c.b16 %v1051, %v1050
        %v1066 = vpack.c.b16 %v1053, %v1052
        %v1067 = vpack.c.b16 %v1055, %v1054
        %v1068 = vpack.c.b16 %v1057, %v1056
        %v1069 = vpack.c.b16 %v1059, %v1058
        %v1070 = vpack.c.b16 %v1061, %v1060
        %v1071 = vpack.c.b16 %v1063, %v1062
        %1080 = vmatprep.subr.bf16.mxu0 0
        %1081 = vmatpush1.bf16.msra.mxu0 %v1071
        %1082 = vmatprep.subr.bf16.mxu0 0
        %1083 = vmatpush1.bf16.msra.mxu0 %v1070
        %1084 = vmatprep.subr.bf16.mxu0 0
        %1085 = vmatpush1.bf16.msra.mxu0 %v1069
        %1086 = vmatprep.subr.bf16.mxu0 0
        %1087 = vmatpush1.bf16.msra.mxu0 %v1068
        %1088 = vmatprep.subr.bf16.mxu0 0
        %1089 = vmatpush1.bf16.msra.mxu0 %v1067
        %1090 = vmatprep.subr.bf16.mxu0 0
        %1091 = vmatpush1.bf16.msra.mxu0 %v1066
        %1092 = vmatprep.subr.bf16.mxu0 0
        %1093 = vmatpush1.bf16.msra.mxu0 %v1065
        %1094 = vmatprep.subr.bf16.mxu0 0
        %1095 = vmatpush1.bf16.msra.mxu0 %v1064
        %1096 = vmatprep.subr.bf16.mxu0 0
        %1097 = vmatpush2.bf16.msra.mxu0 0
        %1098 = vmatprep.subr.bf16.mxu0 0
        %1099 = vmatpush2.bf16.msra.mxu0 0
        %1100 = vmatprep.subr.bf16.mxu0 0
        %1101 = vmatpush2.bf16.msra.mxu0 0
        %1102 = vmatprep.subr.bf16.mxu0 0
        %1103 = vmatpush2.bf16.msra.mxu0 0
        %1104 = vmatprep.subr.bf16.mxu0 0
        %1105 = vmatpush2.bf16.msra.mxu0 0
        %1106 = vmatprep.subr.bf16.mxu0 0
        %1107 = vmatpush2.bf16.msra.mxu0 0
        %1108 = vmatprep.subr.bf16.mxu0 0
        %1109 = vmatpush2.bf16.msra.mxu0 0
        %1110 = vmatprep.subr.bf16.mxu0 0
        %1111 = vmatpush2.bf16.msra.mxu0 0
        %1112 = vmatprep.mubr.bf16.mxu0 0
        %1113 = vmatmul.mubr.bf16.gmra.mxu0 %v1026
        %v1114 = vpop.f32.mrf.mxu0
        %v1115 = vadd.f32 0.0, %v1114
        %v1116 = vpop.f32.mrf.mxu0
        %v1117 = vpop.f32.mrf.mxu0
        %v1118 = vadd.f32 0.0, %v1117
        %v1119 = vpop.f32.mrf.mxu0
        %1120 = vmatprep.mubr.bf16.mxu0 0
        %1121 = vmatmul.mubr.bf16.gmra.mxu0 %v1028
        %v1122 = vpop.f32.mrf.mxu0
        %v1123 = vadd.f32 0.0, %v1122
        %v1124 = vpop.f32.mrf.mxu0
        %v1125 = vpop.f32.mrf.mxu0
        %v1126 = vadd.f32 0.0, %v1125
        %v1127 = vpop.f32.mrf.mxu0
        %1128 = vmatprep.mubr.bf16.mxu0 0
        %1129 = vmatmul.mubr.bf16.gmra.mxu0 %v1027
        %v1130 = vpop.f32.mrf.mxu0
        %v1131 = vadd.f32 0.0, %v1130
        %v1132 = vpop.f32.mrf.mxu0
        %v1133 = vpop.f32.mrf.mxu0
        %v1134 = vpop.f32.mrf.mxu0
        %1135 = vdwg.mxu0
        %v1136 = vadd.f32 %v984, %v1115
        %v1137 = vadd.f32 %v987, %v1118
        %v1138 = vadd.f32 %v992, %v1123
        %v1139 = vadd.f32 %v995, %v1126
        %v1140 = vadd.f32 %v1000, %v1131
        %s1141 = scalar_lea.vmem [#allocation7], 192
        %v1142 = vld [vmem:[%s1141] sm:$0xf]
        %v1143 = vld [vmem:[%s1141 + $0x4] sm:$0xf]
        %v1144 = vld [vmem:[%s1141 + $0x8] sm:$0xf]
        %v1145 = vld [vmem:[%s1141 + $0xc] sm:$0xf]
        %v1146 = vld [vmem:[%s1141 + $0x10] sm:$0xf]
        %v1147 = vld [vmem:[%s1141 + $0x14] sm:$0xf]
        %v1148 = vld [vmem:[%s1141 + $0x18] sm:$0xf]
        %v1149 = vld [vmem:[%s1141 + $0x1c] sm:$0xf]
        %v1150 = vld [vmem:[%s1141 + $0x20] sm:$0xf]
        %v1151 = vld [vmem:[%s1141 + $0x24] sm:$0xf]
        %v1152 = vld [vmem:[%s1141 + $0x28] sm:$0xf]
        %v1153 = vld [vmem:[%s1141 + $0x2c] sm:$0xf]
        %v1154 = vld [vmem:[%s1141 + $0x30] sm:$0xf]
        %v1155 = vld [vmem:[%s1141 + $0x34] sm:$0xf]
        %v1156 = vld [vmem:[%s1141 + $0x38] sm:$0xf]
        %v1157 = vld [vmem:[%s1141 + $0x3c] sm:$0xf]
        %vm1158 = vsmask.f32 6400
        %v1159 = vrot.slane %v773, 1
        %v1160 = vrot.slane %v775, 2
        %v1161 = vor.u32 %v1159, %v1160
        %v1162 = vrot.slane %v783, 1
        %v1163 = vrot.slane %v779, 2
        %v1164 = vor.u32 %v1162, %v1163
        %v1165 = vsel %vm1158, %v1161, %v1164
        %v1166 = vrot.slane %v791, 1
        %v1167 = vrot.slane %v787, 2
        %v1168 = vor.u32 %v1166, %v1167
        %v1169 = vsel %vm1158, %v1164, %v1168
        %v1189 = vunpack.c.l.b16 %v1142
        %v1190 = vunpack.c.l.b16 %v1143
        %v1191 = vunpack.c.l.b16 %v1144
        %v1192 = vunpack.c.l.b16 %v1145
        %v1193 = vunpack.c.l.b16 %v1146
        %v1194 = vunpack.c.l.b16 %v1147
        %v1195 = vunpack.c.l.b16 %v1148
        %v1196 = vunpack.c.l.b16 %v1149
        %v1197 = vunpack.c.l.b16 %v1150
        %v1198 = vunpack.c.l.b16 %v1151
        %v1199 = vunpack.c.l.b16 %v1152
        %v1200 = vunpack.c.l.b16 %v1153
        %v1201 = vunpack.c.l.b16 %v1154
        %v1202 = vunpack.c.l.b16 %v1155
        %v1203 = vunpack.c.l.b16 %v1156
        %v1204 = vunpack.c.l.b16 %v1157
        %v1205 = vpack.c.b16 %v1190, %v1189
        %v1206 = vpack.c.b16 %v1192, %v1191
        %v1207 = vpack.c.b16 %v1194, %v1193
        %v1208 = vpack.c.b16 %v1196, %v1195
        %v1209 = vpack.c.b16 %v1198, %v1197
        %v1210 = vpack.c.b16 %v1200, %v1199
        %v1211 = vpack.c.b16 %v1202, %v1201
        %v1212 = vpack.c.b16 %v1204, %v1203
        %1221 = vmatprep.subr.bf16.mxu0 0
        %1222 = vmatpush1.bf16.msra.mxu0 %v1212
        %1223 = vmatprep.subr.bf16.mxu0 0
        %1224 = vmatpush1.bf16.msra.mxu0 %v1211
        %1225 = vmatprep.subr.bf16.mxu0 0
        %1226 = vmatpush1.bf16.msra.mxu0 %v1210
        %1227 = vmatprep.subr.bf16.mxu0 0
        %1228 = vmatpush1.bf16.msra.mxu0 %v1209
        %1229 = vmatprep.subr.bf16.mxu0 0
        %1230 = vmatpush1.bf16.msra.mxu0 %v1208
        %1231 = vmatprep.subr.bf16.mxu0 0
        %1232 = vmatpush1.bf16.msra.mxu0 %v1207
        %1233 = vmatprep.subr.bf16.mxu0 0
        %1234 = vmatpush1.bf16.msra.mxu0 %v1206
        %1235 = vmatprep.subr.bf16.mxu0 0
        %1236 = vmatpush1.bf16.msra.mxu0 %v1205
        %1237 = vmatprep.subr.bf16.mxu0 0
        %1238 = vmatpush2.bf16.msra.mxu0 0
        %1239 = vmatprep.subr.bf16.mxu0 0
        %1240 = vmatpush2.bf16.msra.mxu0 0
        %1241 = vmatprep.subr.bf16.mxu0 0
        %1242 = vmatpush2.bf16.msra.mxu0 0
        %1243 = vmatprep.subr.bf16.mxu0 0
        %1244 = vmatpush2.bf16.msra.mxu0 0
        %1245 = vmatprep.subr.bf16.mxu0 0
        %1246 = vmatpush2.bf16.msra.mxu0 0
        %1247 = vmatprep.subr.bf16.mxu0 0
        %1248 = vmatpush2.bf16.msra.mxu0 0
        %1249 = vmatprep.subr.bf16.mxu0 0
        %1250 = vmatpush2.bf16.msra.mxu0 0
        %1251 = vmatprep.subr.bf16.mxu0 0
        %1252 = vmatpush2.bf16.msra.mxu0 0
        %1253 = vmatprep.mubr.bf16.mxu0 0
        %1254 = vmatmul.mubr.bf16.gmra.mxu0 %v1165
        %v1255 = vpop.f32.mrf.mxu0
        %v1256 = vadd.f32 0.0, %v1255
        %v1257 = vpop.f32.mrf.mxu0
        %v1258 = vpop.f32.mrf.mxu0
        %v1259 = vadd.f32 0.0, %v1258
        %v1260 = vpop.f32.mrf.mxu0
        %1261 = vmatprep.mubr.bf16.mxu0 0
        %1262 = vmatmul.mubr.bf16.gmra.mxu0 %v1169
        %v1263 = vpop.f32.mrf.mxu0
        %v1264 = vadd.f32 0.0, %v1263
        %v1265 = vpop.f32.mrf.mxu0
        %v1266 = vpop.f32.mrf.mxu0
        %v1267 = vadd.f32 0.0, %v1266
        %v1268 = vpop.f32.mrf.mxu0
        %1269 = vmatprep.mubr.bf16.mxu0 0
        %1270 = vmatmul.mubr.bf16.gmra.mxu0 %v1168
        %v1271 = vpop.f32.mrf.mxu0
        %v1272 = vadd.f32 0.0, %v1271
        %v1273 = vpop.f32.mrf.mxu0
        %v1274 = vpop.f32.mrf.mxu0
        %v1275 = vpop.f32.mrf.mxu0
        %1276 = vdwg.mxu0
        %v1277 = vadd.f32 %v1136, %v1256
        %v1278 = vadd.f32 %v1137, %v1259
        %v1279 = vadd.f32 %v1138, %v1264
        %v1280 = vadd.f32 %v1139, %v1267
        %v1281 = vadd.f32 %v1140, %v1272
        %s1282 = scalar_lea.vmem [#allocation7], 256
        %v1283 = vld [vmem:[%s1282] sm:$0xf]
        %v1284 = vld [vmem:[%s1282 + $0x4] sm:$0xf]
        %v1285 = vld [vmem:[%s1282 + $0x8] sm:$0xf]
        %v1286 = vld [vmem:[%s1282 + $0xc] sm:$0xf]
        %v1287 = vld [vmem:[%s1282 + $0x10] sm:$0xf]
        %v1288 = vld [vmem:[%s1282 + $0x14] sm:$0xf]
        %v1289 = vld [vmem:[%s1282 + $0x18] sm:$0xf]
        %v1290 = vld [vmem:[%s1282 + $0x1c] sm:$0xf]
        %v1291 = vld [vmem:[%s1282 + $0x20] sm:$0xf]
        %v1292 = vld [vmem:[%s1282 + $0x24] sm:$0xf]
        %v1293 = vld [vmem:[%s1282 + $0x28] sm:$0xf]
        %v1294 = vld [vmem:[%s1282 + $0x2c] sm:$0xf]
        %v1295 = vld [vmem:[%s1282 + $0x30] sm:$0xf]
        %v1296 = vld [vmem:[%s1282 + $0x34] sm:$0xf]
        %v1297 = vld [vmem:[%s1282 + $0x38] sm:$0xf]
        %v1298 = vld [vmem:[%s1282 + $0x3c] sm:$0xf]
        %vm1299 = vcmask 1045504
        %v1300 = vrot.slane %v721, 2
        %v1301 = vrot.slane %v736, 2
        %v1302 = vsel %vm1299, %v1300, %v1301
        %v1303 = vrot.slane %v731, 2
        %v1304 = vsel %vm1299, %v1301, %v1303
        %v1324 = vunpack.c.l.b16 %v1283
        %v1325 = vunpack.c.l.b16 %v1284
        %v1326 = vunpack.c.l.b16 %v1285
        %v1327 = vunpack.c.l.b16 %v1286
        %v1328 = vunpack.c.l.b16 %v1287
        %v1329 = vunpack.c.l.b16 %v1288
        %v1330 = vunpack.c.l.b16 %v1289
        %v1331 = vunpack.c.l.b16 %v1290
        %v1332 = vunpack.c.l.b16 %v1291
        %v1333 = vunpack.c.l.b16 %v1292
        %v1334 = vunpack.c.l.b16 %v1293
        %v1335 = vunpack.c.l.b16 %v1294
        %v1336 = vunpack.c.l.b16 %v1295
        %v1337 = vunpack.c.l.b16 %v1296
        %v1338 = vunpack.c.l.b16 %v1297
        %v1339 = vunpack.c.l.b16 %v1298
        %v1340 = vpack.c.b16 %v1325, %v1324
        %v1341 = vpack.c.b16 %v1327, %v1326
        %v1342 = vpack.c.b16 %v1329, %v1328
        %v1343 = vpack.c.b16 %v1331, %v1330
        %v1344 = vpack.c.b16 %v1333, %v1332
        %v1345 = vpack.c.b16 %v1335, %v1334
        %v1346 = vpack.c.b16 %v1337, %v1336
        %v1347 = vpack.c.b16 %v1339, %v1338
        %1356 = vmatprep.subr.bf16.mxu0 0
        %1357 = vmatpush1.bf16.msra.mxu0 %v1347
        %1358 = vmatprep.subr.bf16.mxu0 0
        %1359 = vmatpush1.bf16.msra.mxu0 %v1346
        %1360 = vmatprep.subr.bf16.mxu0 0
        %1361 = vmatpush1.bf16.msra.mxu0 %v1345
        %1362 = vmatprep.subr.bf16.mxu0 0
        %1363 = vmatpush1.bf16.msra.mxu0 %v1344
        %1364 = vmatprep.subr.bf16.mxu0 0
        %1365 = vmatpush1.bf16.msra.mxu0 %v1343
        %1366 = vmatprep.subr.bf16.mxu0 0
        %1367 = vmatpush1.bf16.msra.mxu0 %v1342
        %1368 = vmatprep.subr.bf16.mxu0 0
        %1369 = vmatpush1.bf16.msra.mxu0 %v1341
        %1370 = vmatprep.subr.bf16.mxu0 0
        %1371 = vmatpush1.bf16.msra.mxu0 %v1340
        %1372 = vmatprep.subr.bf16.mxu0 0
        %1373 = vmatpush2.bf16.msra.mxu0 0
        %1374 = vmatprep.subr.bf16.mxu0 0
        %1375 = vmatpush2.bf16.msra.mxu0 0
        %1376 = vmatprep.subr.bf16.mxu0 0
        %1377 = vmatpush2.bf16.msra.mxu0 0
        %1378 = vmatprep.subr.bf16.mxu0 0
        %1379 = vmatpush2.bf16.msra.mxu0 0
        %1380 = vmatprep.subr.bf16.mxu0 0
        %1381 = vmatpush2.bf16.msra.mxu0 0
        %1382 = vmatprep.subr.bf16.mxu0 0
        %1383 = vmatpush2.bf16.msra.mxu0 0
        %1384 = vmatprep.subr.bf16.mxu0 0
        %1385 = vmatpush2.bf16.msra.mxu0 0
        %1386 = vmatprep.subr.bf16.mxu0 0
        %1387 = vmatpush2.bf16.msra.mxu0 0
        %1388 = vmatprep.mubr.bf16.mxu0 0
        %1389 = vmatmul.mubr.bf16.gmra.mxu0 %v1302
        %v1390 = vpop.f32.mrf.mxu0
        %v1391 = vadd.f32 0.0, %v1390
        %v1392 = vpop.f32.mrf.mxu0
        %v1393 = vpop.f32.mrf.mxu0
        %v1394 = vadd.f32 0.0, %v1393
        %v1395 = vpop.f32.mrf.mxu0
        %1396 = vmatprep.mubr.bf16.mxu0 0
        %1397 = vmatmul.mubr.bf16.gmra.mxu0 %v1304
        %v1398 = vpop.f32.mrf.mxu0
        %v1399 = vadd.f32 0.0, %v1398
        %v1400 = vpop.f32.mrf.mxu0
        %v1401 = vpop.f32.mrf.mxu0
        %v1402 = vadd.f32 0.0, %v1401
        %v1403 = vpop.f32.mrf.mxu0
        %1404 = vmatprep.mubr.bf16.mxu0 0
        %1405 = vmatmul.mubr.bf16.gmra.mxu0 %v1303
        %v1406 = vpop.f32.mrf.mxu0
        %v1407 = vadd.f32 0.0, %v1406
        %v1408 = vpop.f32.mrf.mxu0
        %v1409 = vpop.f32.mrf.mxu0
        %v1410 = vpop.f32.mrf.mxu0
        %1411 = vdwg.mxu0
        %v1412 = vadd.f32 %v1277, %v1391
        %v1413 = vadd.f32 %v1278, %v1394
        %v1414 = vadd.f32 %v1279, %v1399
        %v1415 = vadd.f32 %v1280, %v1402
        %v1416 = vadd.f32 %v1281, %v1407
        %v1417 = vld [vmem:[%s3] sm:$0x1]
        %v1419 = vlaneseq
        %v1420 = vshrl.u32 %v1419, 7
        %v1421 = vsub.s32 0, %v1420
        %v1422 = vrot.slane %v1417, %v1421
        %v1424 = vmul.f32 %v1412, %v1422
        %v1425 = vmul.f32 %v1413, %v1422
        %v1426 = vmul.f32 %v1414, %v1422
        %v1427 = vmul.f32 %v1415, %v1422
        %v1428 = vmul.f32 %v1416, %v1422
        %v1429 = vld [vmem:[%s4] sm:$0x1]
        %v1431 = vlaneseq
        %v1432 = vshrl.u32 %v1431, 7
        %v1433 = vsub.s32 0, %v1432
        %v1434 = vrot.slane %v1429, %v1433
        %v1436 = vadd.f32 %v1424, %v1434
        %v1437 = vadd.f32 %v1425, %v1434
        %v1438 = vadd.f32 %v1426, %v1434
        %v1439 = vadd.f32 %v1427, %v1434
        %v1440 = vadd.f32 %v1428, %v1434
        %v1441 = vtanh.pop %v1436
        %v1442 = vtanh.pop %v1437
        %v1443 = vtanh.pop %v1438
        %v1444 = vtanh.pop %v1439
        %v1445 = vtanh.pop %v1440
        %s1446 = smul.u32 %s44, 24
        %s1447 = sadd.s32 %s1446, 4294967288
        %v1448 = vlaneseq
        %v1449 = vshrl.u32 %v1448, 7
        %v1450 = vadd.s32 %v1449, 8
        %v1451 = vadd.s32 %v1449, 16
        %v1452 = vadd.s32 %v1449, 24
        %v1453 = vadd.s32 %v1449, 32
        %v1454 = vstv %s1447
        %v1455 = vadd.s32 %v1454, %v1449
        %v1456 = vadd.s32 %v1454, %v1450
        %v1457 = vadd.s32 %v1454, %v1451
        %v1458 = vadd.s32 %v1454, %v1452
        %v1459 = vadd.s32 %v1454, %v1453
        %vm1460 = vcmp.ge.s32.totalorder %v1455, 0
        %vm1461 = vcmp.ge.s32.totalorder %v1456, 0
        %vm1462 = vcmp.ge.s32.totalorder %v1457, 0
        %vm1463 = vcmp.ge.s32.totalorder %v1458, 0
        %vm1464 = vcmp.ge.s32.totalorder %v1459, 0
        %vm1465 = vcmp.lt.s32.totalorder %v1455, 48
        %vm1466 = vcmp.lt.s32.totalorder %v1456, 48
        %vm1467 = vcmp.lt.s32.totalorder %v1457, 48
        %vm1468 = vcmp.lt.s32.totalorder %v1458, 48
        %vm1469 = vcmp.lt.s32.totalorder %v1459, 48
        %vm1470 = vmand %vm1460, %vm1465
        %vm1471 = vmand %vm1461, %vm1466
        %vm1472 = vmand %vm1462, %vm1467
        %vm1473 = vmand %vm1463, %vm1468
        %vm1474 = vmand %vm1464, %vm1469
        %v1475 = vsel %vm1470, %v1441, 0.0
        %v1476 = vsel %vm1471, %v1442, 0.0
        %v1477 = vsel %vm1472, %v1443, 0.0
        %v1478 = vsel %vm1473, %v1444, 0.0
        %v1479 = vsel %vm1474, %v1445, 0.0
        %v1480 = vpack.c.bf16 %v1476, %v1475
        %v1481 = vpack.c.bf16 %v1478, %v1477
        %v1482 = vpack.c.bf16 %v1479, %v1479
        %v1483 = vld [vmem:[#allocation8] sm:$0xf]
        %v1484 = vld [vmem:[#allocation8 + $0x4] sm:$0xf]
        %v1485 = vld [vmem:[#allocation8 + $0x8] sm:$0xf]
        %v1486 = vld [vmem:[#allocation8 + $0xc] sm:$0xf]
        %v1487 = vld [vmem:[#allocation8 + $0x10] sm:$0xf]
        %v1488 = vld [vmem:[#allocation8 + $0x14] sm:$0xf]
        %v1489 = vld [vmem:[#allocation8 + $0x18] sm:$0xf]
        %v1490 = vld [vmem:[#allocation8 + $0x1c] sm:$0xf]
        %v1491 = vld [vmem:[#allocation8 + $0x20] sm:$0xf]
        %v1492 = vld [vmem:[#allocation8 + $0x24] sm:$0xf]
        %v1493 = vld [vmem:[#allocation8 + $0x28] sm:$0xf]
        %v1494 = vld [vmem:[#allocation8 + $0x2c] sm:$0xf]
        %v1495 = vld [vmem:[#allocation8 + $0x30] sm:$0xf]
        %v1496 = vld [vmem:[#allocation8 + $0x34] sm:$0xf]
        %v1497 = vld [vmem:[#allocation8 + $0x38] sm:$0xf]
        %v1498 = vld [vmem:[#allocation8 + $0x3c] sm:$0xf]
        %s1499 = scalar_lea.vmem [#allocation8], 64
        %v1500 = vld [vmem:[%s1499] sm:$0xf]
        %v1501 = vld [vmem:[%s1499 + $0x4] sm:$0xf]
        %v1502 = vld [vmem:[%s1499 + $0x8] sm:$0xf]
        %v1503 = vld [vmem:[%s1499 + $0xc] sm:$0xf]
        %v1504 = vld [vmem:[%s1499 + $0x10] sm:$0xf]
        %v1505 = vld [vmem:[%s1499 + $0x14] sm:$0xf]
        %v1506 = vld [vmem:[%s1499 + $0x18] sm:$0xf]
        %v1507 = vld [vmem:[%s1499 + $0x1c] sm:$0xf]
        %v1508 = vld [vmem:[%s1499 + $0x20] sm:$0xf]
        %v1509 = vld [vmem:[%s1499 + $0x24] sm:$0xf]
        %v1510 = vld [vmem:[%s1499 + $0x28] sm:$0xf]
        %v1511 = vld [vmem:[%s1499 + $0x2c] sm:$0xf]
        %v1512 = vld [vmem:[%s1499 + $0x30] sm:$0xf]
        %v1513 = vld [vmem:[%s1499 + $0x34] sm:$0xf]
        %v1514 = vld [vmem:[%s1499 + $0x38] sm:$0xf]
        %v1515 = vld [vmem:[%s1499 + $0x3c] sm:$0xf]
        %v1517 = vshrl.u32 %v1480, 16
        %v1519 = vshll.u32 %v1480, 16
        %v1521 = vrot.slane %v1519, 1
        %v1522 = vor.u32 %v1517, %v1521
        %v1524 = vshll.u32 %v1481, 16
        %v1526 = vrot.slane %v1524, 1
        %v1527 = vsel %vm771, %v1522, %v1526
        %v1528 = vshrl.u32 %v1481, 16
        %v1530 = vor.u32 %v1528, %v1526
        %v1532 = vshll.u32 %v1482, 16
        %v1534 = vrot.slane %v1532, 1
        %v1535 = vsel %vm771, %v1530, %v1534
        %v1536 = vshrl.u32 %v1482, 16
        %v1538 = vor.u32 %v1536, %v1534
        %v1558 = vunpack.c.l.b16 %v1500
        %v1559 = vunpack.c.l.b16 %v1501
        %v1560 = vunpack.c.l.b16 %v1502
        %v1561 = vunpack.c.l.b16 %v1503
        %v1562 = vunpack.c.l.b16 %v1504
        %v1563 = vunpack.c.l.b16 %v1505
        %v1564 = vunpack.c.l.b16 %v1506
        %v1565 = vunpack.c.l.b16 %v1507
        %v1566 = vunpack.c.l.b16 %v1508
        %v1567 = vunpack.c.l.b16 %v1509
        %v1568 = vunpack.c.l.b16 %v1510
        %v1569 = vunpack.c.l.b16 %v1511
        %v1570 = vunpack.c.l.b16 %v1512
        %v1571 = vunpack.c.l.b16 %v1513
        %v1572 = vunpack.c.l.b16 %v1514
        %v1573 = vunpack.c.l.b16 %v1515
        %v1574 = vpack.c.b16 %v1559, %v1558
        %v1575 = vpack.c.b16 %v1561, %v1560
        %v1576 = vpack.c.b16 %v1563, %v1562
        %v1577 = vpack.c.b16 %v1565, %v1564
        %v1578 = vpack.c.b16 %v1567, %v1566
        %v1579 = vpack.c.b16 %v1569, %v1568
        %v1580 = vpack.c.b16 %v1571, %v1570
        %v1581 = vpack.c.b16 %v1573, %v1572
        %1590 = vmatprep.subr.bf16.mxu0 0
        %1591 = vmatpush1.bf16.msra.mxu0 %v1581
        %1592 = vmatprep.subr.bf16.mxu0 0
        %1593 = vmatpush1.bf16.msra.mxu0 %v1580
        %1594 = vmatprep.subr.bf16.mxu0 0
        %1595 = vmatpush1.bf16.msra.mxu0 %v1579
        %1596 = vmatprep.subr.bf16.mxu0 0
        %1597 = vmatpush1.bf16.msra.mxu0 %v1578
        %1598 = vmatprep.subr.bf16.mxu0 0
        %1599 = vmatpush1.bf16.msra.mxu0 %v1577
        %1600 = vmatprep.subr.bf16.mxu0 0
        %1601 = vmatpush1.bf16.msra.mxu0 %v1576
        %1602 = vmatprep.subr.bf16.mxu0 0
        %1603 = vmatpush1.bf16.msra.mxu0 %v1575
        %1604 = vmatprep.subr.bf16.mxu0 0
        %1605 = vmatpush1.bf16.msra.mxu0 %v1574
        %1606 = vmatprep.subr.bf16.mxu0 0
        %1607 = vmatpush2.bf16.msra.mxu0 0
        %1608 = vmatprep.subr.bf16.mxu0 0
        %1609 = vmatpush2.bf16.msra.mxu0 0
        %1610 = vmatprep.subr.bf16.mxu0 0
        %1611 = vmatpush2.bf16.msra.mxu0 0
        %1612 = vmatprep.subr.bf16.mxu0 0
        %1613 = vmatpush2.bf16.msra.mxu0 0
        %1614 = vmatprep.subr.bf16.mxu0 0
        %1615 = vmatpush2.bf16.msra.mxu0 0
        %1616 = vmatprep.subr.bf16.mxu0 0
        %1617 = vmatpush2.bf16.msra.mxu0 0
        %1618 = vmatprep.subr.bf16.mxu0 0
        %1619 = vmatpush2.bf16.msra.mxu0 0
        %1620 = vmatprep.subr.bf16.mxu0 0
        %1621 = vmatpush2.bf16.msra.mxu0 0
        %1622 = vmatprep.mubr.bf16.mxu0 0
        %1623 = vmatmul.mubr.bf16.gmra.mxu0 %v1527
        %v1624 = vpop.f32.mrf.mxu0
        %v1625 = vadd.f32 0.0, %v1624
        %v1626 = vpop.f32.mrf.mxu0
        %v1627 = vpop.f32.mrf.mxu0
        %v1628 = vadd.f32 0.0, %v1627
        %v1629 = vpop.f32.mrf.mxu0
        %1630 = vmatprep.mubr.bf16.mxu0 0
        %1631 = vmatmul.mubr.bf16.gmra.mxu0 %v1535
        %v1632 = vpop.f32.mrf.mxu0
        %v1633 = vadd.f32 0.0, %v1632
        %v1634 = vpop.f32.mrf.mxu0
        %v1635 = vpop.f32.mrf.mxu0
        %v1636 = vadd.f32 0.0, %v1635
        %v1637 = vpop.f32.mrf.mxu0
        %1638 = vmatprep.mubr.bf16.mxu0 0
        %1639 = vmatmul.mubr.bf16.gmra.mxu0 %v1538
        %v1640 = vpop.f32.mrf.mxu0
        %v1641 = vadd.f32 0.0, %v1640
        %v1642 = vpop.f32.mrf.mxu0
        %v1643 = vpop.f32.mrf.mxu0
        %v1644 = vpop.f32.mrf.mxu0
        %1645 = vdwg.mxu0
        %v1662 = vunpack.c.l.b16 %v1483
        %v1663 = vunpack.c.l.b16 %v1484
        %v1664 = vunpack.c.l.b16 %v1485
        %v1665 = vunpack.c.l.b16 %v1486
        %v1666 = vunpack.c.l.b16 %v1487
        %v1667 = vunpack.c.l.b16 %v1488
        %v1668 = vunpack.c.l.b16 %v1489
        %v1669 = vunpack.c.l.b16 %v1490
        %v1670 = vunpack.c.l.b16 %v1491
        %v1671 = vunpack.c.l.b16 %v1492
        %v1672 = vunpack.c.l.b16 %v1493
        %v1673 = vunpack.c.l.b16 %v1494
        %v1674 = vunpack.c.l.b16 %v1495
        %v1675 = vunpack.c.l.b16 %v1496
        %v1676 = vunpack.c.l.b16 %v1497
        %v1677 = vunpack.c.l.b16 %v1498
        %v1678 = vpack.c.b16 %v1663, %v1662
        %v1679 = vpack.c.b16 %v1665, %v1664
        %v1680 = vpack.c.b16 %v1667, %v1666
        %v1681 = vpack.c.b16 %v1669, %v1668
        %v1682 = vpack.c.b16 %v1671, %v1670
        %v1683 = vpack.c.b16 %v1673, %v1672
        %v1684 = vpack.c.b16 %v1675, %v1674
        %v1685 = vpack.c.b16 %v1677, %v1676
        %1694 = vmatprep.subr.bf16.mxu0 0
        %1695 = vmatpush1.bf16.msra.mxu0 %v1685
        %1696 = vmatprep.subr.bf16.mxu0 0
        %1697 = vmatpush1.bf16.msra.mxu0 %v1684
        %1698 = vmatprep.subr.bf16.mxu0 0
        %1699 = vmatpush1.bf16.msra.mxu0 %v1683
        %1700 = vmatprep.subr.bf16.mxu0 0
        %1701 = vmatpush1.bf16.msra.mxu0 %v1682
        %1702 = vmatprep.subr.bf16.mxu0 0
        %1703 = vmatpush1.bf16.msra.mxu0 %v1681
        %1704 = vmatprep.subr.bf16.mxu0 0
        %1705 = vmatpush1.bf16.msra.mxu0 %v1680
        %1706 = vmatprep.subr.bf16.mxu0 0
        %1707 = vmatpush1.bf16.msra.mxu0 %v1679
        %1708 = vmatprep.subr.bf16.mxu0 0
        %1709 = vmatpush1.bf16.msra.mxu0 %v1678
        %1710 = vmatprep.subr.bf16.mxu0 0
        %1711 = vmatpush2.bf16.msra.mxu0 0
        %1712 = vmatprep.subr.bf16.mxu0 0
        %1713 = vmatpush2.bf16.msra.mxu0 0
        %1714 = vmatprep.subr.bf16.mxu0 0
        %1715 = vmatpush2.bf16.msra.mxu0 0
        %1716 = vmatprep.subr.bf16.mxu0 0
        %1717 = vmatpush2.bf16.msra.mxu0 0
        %1718 = vmatprep.subr.bf16.mxu0 0
        %1719 = vmatpush2.bf16.msra.mxu0 0
        %1720 = vmatprep.subr.bf16.mxu0 0
        %1721 = vmatpush2.bf16.msra.mxu0 0
        %1722 = vmatprep.subr.bf16.mxu0 0
        %1723 = vmatpush2.bf16.msra.mxu0 0
        %1724 = vmatprep.subr.bf16.mxu0 0
        %1725 = vmatpush2.bf16.msra.mxu0 0
        %1726 = vmatprep.mubr.bf16.mxu0 0
        %1727 = vmatmul.mubr.bf16.gmra.mxu0 %v1480
        %v1728 = vpop.f32.mrf.mxu0
        %v1729 = vadd.f32 %v1625, %v1728
        %v1730 = vpop.f32.mrf.mxu0
        %v1731 = vpop.f32.mrf.mxu0
        %v1732 = vadd.f32 %v1628, %v1731
        %v1733 = vpop.f32.mrf.mxu0
        %1734 = vmatprep.mubr.bf16.mxu0 0
        %1735 = vmatmul.mubr.bf16.gmra.mxu0 %v1481
        %v1736 = vpop.f32.mrf.mxu0
        %v1737 = vadd.f32 %v1633, %v1736
        %v1738 = vpop.f32.mrf.mxu0
        %v1739 = vpop.f32.mrf.mxu0
        %v1740 = vadd.f32 %v1636, %v1739
        %v1741 = vpop.f32.mrf.mxu0
        %1742 = vmatprep.mubr.bf16.mxu0 0
        %1743 = vmatmul.mubr.bf16.gmra.mxu0 %v1482
        %v1744 = vpop.f32.mrf.mxu0
        %v1745 = vadd.f32 %v1641, %v1744
        %v1746 = vpop.f32.mrf.mxu0
        %v1747 = vpop.f32.mrf.mxu0
        %v1748 = vpop.f32.mrf.mxu0
        %1749 = vdwg.mxu0
        %s1750 = scalar_lea.vmem [#allocation8], 128
        %v1751 = vld [vmem:[%s1750] sm:$0xf]
        %v1752 = vld [vmem:[%s1750 + $0x4] sm:$0xf]
        %v1753 = vld [vmem:[%s1750 + $0x8] sm:$0xf]
        %v1754 = vld [vmem:[%s1750 + $0xc] sm:$0xf]
        %v1755 = vld [vmem:[%s1750 + $0x10] sm:$0xf]
        %v1756 = vld [vmem:[%s1750 + $0x14] sm:$0xf]
        %v1757 = vld [vmem:[%s1750 + $0x18] sm:$0xf]
        %v1758 = vld [vmem:[%s1750 + $0x1c] sm:$0xf]
        %v1759 = vld [vmem:[%s1750 + $0x20] sm:$0xf]
        %v1760 = vld [vmem:[%s1750 + $0x24] sm:$0xf]
        %v1761 = vld [vmem:[%s1750 + $0x28] sm:$0xf]
        %v1762 = vld [vmem:[%s1750 + $0x2c] sm:$0xf]
        %v1763 = vld [vmem:[%s1750 + $0x30] sm:$0xf]
        %v1764 = vld [vmem:[%s1750 + $0x34] sm:$0xf]
        %v1765 = vld [vmem:[%s1750 + $0x38] sm:$0xf]
        %v1766 = vld [vmem:[%s1750 + $0x3c] sm:$0xf]
        %v1770 = vrot.slane %v1480, 1
        %v1771 = vrot.slane %v1481, 1
        %v1772 = vsel %vm1023, %v1770, %v1771
        %v1773 = vrot.slane %v1482, 1
        %v1774 = vsel %vm1023, %v1771, %v1773
        %v1794 = vunpack.c.l.b16 %v1751
        %v1795 = vunpack.c.l.b16 %v1752
        %v1796 = vunpack.c.l.b16 %v1753
        %v1797 = vunpack.c.l.b16 %v1754
        %v1798 = vunpack.c.l.b16 %v1755
        %v1799 = vunpack.c.l.b16 %v1756
        %v1800 = vunpack.c.l.b16 %v1757
        %v1801 = vunpack.c.l.b16 %v1758
        %v1802 = vunpack.c.l.b16 %v1759
        %v1803 = vunpack.c.l.b16 %v1760
        %v1804 = vunpack.c.l.b16 %v1761
        %v1805 = vunpack.c.l.b16 %v1762
        %v1806 = vunpack.c.l.b16 %v1763
        %v1807 = vunpack.c.l.b16 %v1764
        %v1808 = vunpack.c.l.b16 %v1765
        %v1809 = vunpack.c.l.b16 %v1766
        %v1810 = vpack.c.b16 %v1795, %v1794
        %v1811 = vpack.c.b16 %v1797, %v1796
        %v1812 = vpack.c.b16 %v1799, %v1798
        %v1813 = vpack.c.b16 %v1801, %v1800
        %v1814 = vpack.c.b16 %v1803, %v1802
        %v1815 = vpack.c.b16 %v1805, %v1804
        %v1816 = vpack.c.b16 %v1807, %v1806
        %v1817 = vpack.c.b16 %v1809, %v1808
        %1826 = vmatprep.subr.bf16.mxu0 0
        %1827 = vmatpush1.bf16.msra.mxu0 %v1817
        %1828 = vmatprep.subr.bf16.mxu0 0
        %1829 = vmatpush1.bf16.msra.mxu0 %v1816
        %1830 = vmatprep.subr.bf16.mxu0 0
        %1831 = vmatpush1.bf16.msra.mxu0 %v1815
        %1832 = vmatprep.subr.bf16.mxu0 0
        %1833 = vmatpush1.bf16.msra.mxu0 %v1814
        %1834 = vmatprep.subr.bf16.mxu0 0
        %1835 = vmatpush1.bf16.msra.mxu0 %v1813
        %1836 = vmatprep.subr.bf16.mxu0 0
        %1837 = vmatpush1.bf16.msra.mxu0 %v1812
        %1838 = vmatprep.subr.bf16.mxu0 0
        %1839 = vmatpush1.bf16.msra.mxu0 %v1811
        %1840 = vmatprep.subr.bf16.mxu0 0
        %1841 = vmatpush1.bf16.msra.mxu0 %v1810
        %1842 = vmatprep.subr.bf16.mxu0 0
        %1843 = vmatpush2.bf16.msra.mxu0 0
        %1844 = vmatprep.subr.bf16.mxu0 0
        %1845 = vmatpush2.bf16.msra.mxu0 0
        %1846 = vmatprep.subr.bf16.mxu0 0
        %1847 = vmatpush2.bf16.msra.mxu0 0
        %1848 = vmatprep.subr.bf16.mxu0 0
        %1849 = vmatpush2.bf16.msra.mxu0 0
        %1850 = vmatprep.subr.bf16.mxu0 0
        %1851 = vmatpush2.bf16.msra.mxu0 0
        %1852 = vmatprep.subr.bf16.mxu0 0
        %1853 = vmatpush2.bf16.msra.mxu0 0
        %1854 = vmatprep.subr.bf16.mxu0 0
        %1855 = vmatpush2.bf16.msra.mxu0 0
        %1856 = vmatprep.subr.bf16.mxu0 0
        %1857 = vmatpush2.bf16.msra.mxu0 0
        %1858 = vmatprep.mubr.bf16.mxu0 0
        %1859 = vmatmul.mubr.bf16.gmra.mxu0 %v1772
        %v1860 = vpop.f32.mrf.mxu0
        %v1861 = vadd.f32 0.0, %v1860
        %v1862 = vpop.f32.mrf.mxu0
        %v1863 = vpop.f32.mrf.mxu0
        %v1864 = vadd.f32 0.0, %v1863
        %v1865 = vpop.f32.mrf.mxu0
        %1866 = vmatprep.mubr.bf16.mxu0 0
        %1867 = vmatmul.mubr.bf16.gmra.mxu0 %v1774
        %v1868 = vpop.f32.mrf.mxu0
        %v1869 = vadd.f32 0.0, %v1868
        %v1870 = vpop.f32.mrf.mxu0
        %v1871 = vpop.f32.mrf.mxu0
        %v1872 = vadd.f32 0.0, %v1871
        %v1873 = vpop.f32.mrf.mxu0
        %1874 = vmatprep.mubr.bf16.mxu0 0
        %1875 = vmatmul.mubr.bf16.gmra.mxu0 %v1773
        %v1876 = vpop.f32.mrf.mxu0
        %v1877 = vadd.f32 0.0, %v1876
        %v1878 = vpop.f32.mrf.mxu0
        %v1879 = vpop.f32.mrf.mxu0
        %v1880 = vpop.f32.mrf.mxu0
        %1881 = vdwg.mxu0
        %v1882 = vadd.f32 %v1729, %v1861
        %v1883 = vadd.f32 %v1732, %v1864
        %v1884 = vadd.f32 %v1737, %v1869
        %v1885 = vadd.f32 %v1740, %v1872
        %v1886 = vadd.f32 %v1745, %v1877
        %s1887 = scalar_lea.vmem [#allocation8], 192
        %v1888 = vld [vmem:[%s1887] sm:$0xf]
        %v1889 = vld [vmem:[%s1887 + $0x4] sm:$0xf]
        %v1890 = vld [vmem:[%s1887 + $0x8] sm:$0xf]
        %v1891 = vld [vmem:[%s1887 + $0xc] sm:$0xf]
        %v1892 = vld [vmem:[%s1887 + $0x10] sm:$0xf]
        %v1893 = vld [vmem:[%s1887 + $0x14] sm:$0xf]
        %v1894 = vld [vmem:[%s1887 + $0x18] sm:$0xf]
        %v1895 = vld [vmem:[%s1887 + $0x1c] sm:$0xf]
        %v1896 = vld [vmem:[%s1887 + $0x20] sm:$0xf]
        %v1897 = vld [vmem:[%s1887 + $0x24] sm:$0xf]
        %v1898 = vld [vmem:[%s1887 + $0x28] sm:$0xf]
        %v1899 = vld [vmem:[%s1887 + $0x2c] sm:$0xf]
        %v1900 = vld [vmem:[%s1887 + $0x30] sm:$0xf]
        %v1901 = vld [vmem:[%s1887 + $0x34] sm:$0xf]
        %v1902 = vld [vmem:[%s1887 + $0x38] sm:$0xf]
        %v1903 = vld [vmem:[%s1887 + $0x3c] sm:$0xf]
        %v1904 = vrot.slane %v1517, 1
        %v1905 = vrot.slane %v1519, 2
        %v1906 = vor.u32 %v1904, %v1905
        %v1907 = vrot.slane %v1528, 1
        %v1908 = vrot.slane %v1524, 2
        %v1909 = vor.u32 %v1907, %v1908
        %v1910 = vsel %vm1158, %v1906, %v1909
        %v1911 = vrot.slane %v1536, 1
        %v1912 = vrot.slane %v1532, 2
        %v1913 = vor.u32 %v1911, %v1912
        %v1914 = vsel %vm1158, %v1909, %v1913
        %v1934 = vunpack.c.l.b16 %v1888
        %v1935 = vunpack.c.l.b16 %v1889
        %v1936 = vunpack.c.l.b16 %v1890
        %v1937 = vunpack.c.l.b16 %v1891
        %v1938 = vunpack.c.l.b16 %v1892
        %v1939 = vunpack.c.l.b16 %v1893
        %v1940 = vunpack.c.l.b16 %v1894
        %v1941 = vunpack.c.l.b16 %v1895
        %v1942 = vunpack.c.l.b16 %v1896
        %v1943 = vunpack.c.l.b16 %v1897
        %v1944 = vunpack.c.l.b16 %v1898
        %v1945 = vunpack.c.l.b16 %v1899
        %v1946 = vunpack.c.l.b16 %v1900
        %v1947 = vunpack.c.l.b16 %v1901
        %v1948 = vunpack.c.l.b16 %v1902
        %v1949 = vunpack.c.l.b16 %v1903
        %v1950 = vpack.c.b16 %v1935, %v1934
        %v1951 = vpack.c.b16 %v1937, %v1936
        %v1952 = vpack.c.b16 %v1939, %v1938
        %v1953 = vpack.c.b16 %v1941, %v1940
        %v1954 = vpack.c.b16 %v1943, %v1942
        %v1955 = vpack.c.b16 %v1945, %v1944
        %v1956 = vpack.c.b16 %v1947, %v1946
        %v1957 = vpack.c.b16 %v1949, %v1948
        %1966 = vmatprep.subr.bf16.mxu0 0
        %1967 = vmatpush1.bf16.msra.mxu0 %v1957
        %1968 = vmatprep.subr.bf16.mxu0 0
        %1969 = vmatpush1.bf16.msra.mxu0 %v1956
        %1970 = vmatprep.subr.bf16.mxu0 0
        %1971 = vmatpush1.bf16.msra.mxu0 %v1955
        %1972 = vmatprep.subr.bf16.mxu0 0
        %1973 = vmatpush1.bf16.msra.mxu0 %v1954
        %1974 = vmatprep.subr.bf16.mxu0 0
        %1975 = vmatpush1.bf16.msra.mxu0 %v1953
        %1976 = vmatprep.subr.bf16.mxu0 0
        %1977 = vmatpush1.bf16.msra.mxu0 %v1952
        %1978 = vmatprep.subr.bf16.mxu0 0
        %1979 = vmatpush1.bf16.msra.mxu0 %v1951
        %1980 = vmatprep.subr.bf16.mxu0 0
        %1981 = vmatpush1.bf16.msra.mxu0 %v1950
        %1982 = vmatprep.subr.bf16.mxu0 0
        %1983 = vmatpush2.bf16.msra.mxu0 0
        %1984 = vmatprep.subr.bf16.mxu0 0
        %1985 = vmatpush2.bf16.msra.mxu0 0
        %1986 = vmatprep.subr.bf16.mxu0 0
        %1987 = vmatpush2.bf16.msra.mxu0 0
        %1988 = vmatprep.subr.bf16.mxu0 0
        %1989 = vmatpush2.bf16.msra.mxu0 0
        %1990 = vmatprep.subr.bf16.mxu0 0
        %1991 = vmatpush2.bf16.msra.mxu0 0
        %1992 = vmatprep.subr.bf16.mxu0 0
        %1993 = vmatpush2.bf16.msra.mxu0 0
        %1994 = vmatprep.subr.bf16.mxu0 0
        %1995 = vmatpush2.bf16.msra.mxu0 0
        %1996 = vmatprep.subr.bf16.mxu0 0
        %1997 = vmatpush2.bf16.msra.mxu0 0
        %1998 = vmatprep.mubr.bf16.mxu0 0
        %1999 = vmatmul.mubr.bf16.gmra.mxu0 %v1910
        %v2000 = vpop.f32.mrf.mxu0
        %v2001 = vadd.f32 0.0, %v2000
        %v2002 = vpop.f32.mrf.mxu0
        %v2003 = vpop.f32.mrf.mxu0
        %v2004 = vadd.f32 0.0, %v2003
        %v2005 = vpop.f32.mrf.mxu0
        %2006 = vmatprep.mubr.bf16.mxu0 0
        %2007 = vmatmul.mubr.bf16.gmra.mxu0 %v1914
        %v2008 = vpop.f32.mrf.mxu0
        %v2009 = vadd.f32 0.0, %v2008
        %v2010 = vpop.f32.mrf.mxu0
        %v2011 = vpop.f32.mrf.mxu0
        %v2012 = vadd.f32 0.0, %v2011
        %v2013 = vpop.f32.mrf.mxu0
        %2014 = vmatprep.mubr.bf16.mxu0 0
        %2015 = vmatmul.mubr.bf16.gmra.mxu0 %v1913
        %v2016 = vpop.f32.mrf.mxu0
        %v2017 = vadd.f32 0.0, %v2016
        %v2018 = vpop.f32.mrf.mxu0
        %v2019 = vpop.f32.mrf.mxu0
        %v2020 = vpop.f32.mrf.mxu0
        %2021 = vdwg.mxu0
        %v2022 = vadd.f32 %v1882, %v2001
        %v2023 = vadd.f32 %v1883, %v2004
        %v2024 = vadd.f32 %v1884, %v2009
        %v2025 = vadd.f32 %v1885, %v2012
        %v2026 = vadd.f32 %v1886, %v2017
        %s2027 = scalar_lea.vmem [#allocation8], 256
        %v2028 = vld [vmem:[%s2027] sm:$0xf]
        %v2029 = vld [vmem:[%s2027 + $0x4] sm:$0xf]
        %v2030 = vld [vmem:[%s2027 + $0x8] sm:$0xf]
        %v2031 = vld [vmem:[%s2027 + $0xc] sm:$0xf]
        %v2032 = vld [vmem:[%s2027 + $0x10] sm:$0xf]
        %v2033 = vld [vmem:[%s2027 + $0x14] sm:$0xf]
        %v2034 = vld [vmem:[%s2027 + $0x18] sm:$0xf]
        %v2035 = vld [vmem:[%s2027 + $0x1c] sm:$0xf]
        %v2036 = vld [vmem:[%s2027 + $0x20] sm:$0xf]
        %v2037 = vld [vmem:[%s2027 + $0x24] sm:$0xf]
        %v2038 = vld [vmem:[%s2027 + $0x28] sm:$0xf]
        %v2039 = vld [vmem:[%s2027 + $0x2c] sm:$0xf]
        %v2040 = vld [vmem:[%s2027 + $0x30] sm:$0xf]
        %v2041 = vld [vmem:[%s2027 + $0x34] sm:$0xf]
        %v2042 = vld [vmem:[%s2027 + $0x38] sm:$0xf]
        %v2043 = vld [vmem:[%s2027 + $0x3c] sm:$0xf]
        %v2044 = vrot.slane %v1480, 2
        %v2045 = vrot.slane %v1481, 2
        %v2046 = vsel %vm1299, %v2044, %v2045
        %v2047 = vrot.slane %v1482, 2
        %v2048 = vsel %vm1299, %v2045, %v2047
        %v2068 = vunpack.c.l.b16 %v2028
        %v2069 = vunpack.c.l.b16 %v2029
        %v2070 = vunpack.c.l.b16 %v2030
        %v2071 = vunpack.c.l.b16 %v2031
        %v2072 = vunpack.c.l.b16 %v2032
        %v2073 = vunpack.c.l.b16 %v2033
        %v2074 = vunpack.c.l.b16 %v2034
        %v2075 = vunpack.c.l.b16 %v2035
        %v2076 = vunpack.c.l.b16 %v2036
        %v2077 = vunpack.c.l.b16 %v2037
        %v2078 = vunpack.c.l.b16 %v2038
        %v2079 = vunpack.c.l.b16 %v2039
        %v2080 = vunpack.c.l.b16 %v2040
        %v2081 = vunpack.c.l.b16 %v2041
        %v2082 = vunpack.c.l.b16 %v2042
        %v2083 = vunpack.c.l.b16 %v2043
        %v2084 = vpack.c.b16 %v2069, %v2068
        %v2085 = vpack.c.b16 %v2071, %v2070
        %v2086 = vpack.c.b16 %v2073, %v2072
        %v2087 = vpack.c.b16 %v2075, %v2074
        %v2088 = vpack.c.b16 %v2077, %v2076
        %v2089 = vpack.c.b16 %v2079, %v2078
        %v2090 = vpack.c.b16 %v2081, %v2080
        %v2091 = vpack.c.b16 %v2083, %v2082
        %2100 = vmatprep.subr.bf16.mxu0 0
        %2101 = vmatpush1.bf16.msra.mxu0 %v2091
        %2102 = vmatprep.subr.bf16.mxu0 0
        %2103 = vmatpush1.bf16.msra.mxu0 %v2090
        %2104 = vmatprep.subr.bf16.mxu0 0
        %2105 = vmatpush1.bf16.msra.mxu0 %v2089
        %2106 = vmatprep.subr.bf16.mxu0 0
        %2107 = vmatpush1.bf16.msra.mxu0 %v2088
        %2108 = vmatprep.subr.bf16.mxu0 0
        %2109 = vmatpush1.bf16.msra.mxu0 %v2087
        %2110 = vmatprep.subr.bf16.mxu0 0
        %2111 = vmatpush1.bf16.msra.mxu0 %v2086
        %2112 = vmatprep.subr.bf16.mxu0 0
        %2113 = vmatpush1.bf16.msra.mxu0 %v2085
        %2114 = vmatprep.subr.bf16.mxu0 0
        %2115 = vmatpush1.bf16.msra.mxu0 %v2084
        %2116 = vmatprep.subr.bf16.mxu0 0
        %2117 = vmatpush2.bf16.msra.mxu0 0
        %2118 = vmatprep.subr.bf16.mxu0 0
        %2119 = vmatpush2.bf16.msra.mxu0 0
        %2120 = vmatprep.subr.bf16.mxu0 0
        %2121 = vmatpush2.bf16.msra.mxu0 0
        %2122 = vmatprep.subr.bf16.mxu0 0
        %2123 = vmatpush2.bf16.msra.mxu0 0
        %2124 = vmatprep.subr.bf16.mxu0 0
        %2125 = vmatpush2.bf16.msra.mxu0 0
        %2126 = vmatprep.subr.bf16.mxu0 0
        %2127 = vmatpush2.bf16.msra.mxu0 0
        %2128 = vmatprep.subr.bf16.mxu0 0
        %2129 = vmatpush2.bf16.msra.mxu0 0
        %2130 = vmatprep.subr.bf16.mxu0 0
        %2131 = vmatpush2.bf16.msra.mxu0 0
        %2132 = vmatprep.mubr.bf16.mxu0 0
        %2133 = vmatmul.mubr.bf16.gmra.mxu0 %v2046
        %v2134 = vpop.f32.mrf.mxu0
        %v2135 = vadd.f32 0.0, %v2134
        %v2136 = vpop.f32.mrf.mxu0
        %v2137 = vpop.f32.mrf.mxu0
        %v2138 = vadd.f32 0.0, %v2137
        %v2139 = vpop.f32.mrf.mxu0
        %2140 = vmatprep.mubr.bf16.mxu0 0
        %2141 = vmatmul.mubr.bf16.gmra.mxu0 %v2048
        %v2142 = vpop.f32.mrf.mxu0
        %v2143 = vadd.f32 0.0, %v2142
        %v2144 = vpop.f32.mrf.mxu0
        %v2145 = vpop.f32.mrf.mxu0
        %v2146 = vadd.f32 0.0, %v2145
        %v2147 = vpop.f32.mrf.mxu0
        %2148 = vmatprep.mubr.bf16.mxu0 0
        %2149 = vmatmul.mubr.bf16.gmra.mxu0 %v2047
        %v2150 = vpop.f32.mrf.mxu0
        %v2151 = vadd.f32 0.0, %v2150
        %v2152 = vpop.f32.mrf.mxu0
        %v2153 = vpop.f32.mrf.mxu0
        %v2154 = vpop.f32.mrf.mxu0
        %2155 = vdwg.mxu0
        %v2156 = vadd.f32 %v2022, %v2135
        %v2157 = vadd.f32 %v2023, %v2138
        %v2158 = vadd.f32 %v2024, %v2143
        %v2159 = vadd.f32 %v2025, %v2146
        %v2160 = vadd.f32 %v2026, %v2151
        %v2161 = vld [vmem:[%s6] sm:$0x1]
        %v2163 = vlaneseq
        %v2164 = vshrl.u32 %v2163, 7
        %v2165 = vsub.s32 0, %v2164
        %v2166 = vrot.slane %v2161, %v2165
        %v2168 = vmul.f32 %v2156, %v2166
        %v2169 = vmul.f32 %v2157, %v2166
        %v2170 = vmul.f32 %v2158, %v2166
        %v2171 = vmul.f32 %v2159, %v2166
        %v2172 = vmul.f32 %v2160, %v2166
        %v2173 = vld [vmem:[%s7] sm:$0x1]
        %v2175 = vlaneseq
        %v2176 = vshrl.u32 %v2175, 7
        %v2177 = vsub.s32 0, %v2176
        %v2178 = vrot.slane %v2173, %v2177
        %v2180 = vadd.f32 %v2168, %v2178
        %v2181 = vadd.f32 %v2169, %v2178
        %v2182 = vadd.f32 %v2170, %v2178
        %v2183 = vadd.f32 %v2171, %v2178
        %v2184 = vadd.f32 %v2172, %v2178
        %v2185 = vtanh.pop %v2180
        %v2186 = vtanh.pop %v2181
        %v2187 = vtanh.pop %v2182
        %v2188 = vtanh.pop %v2183
        %v2189 = vtanh.pop %v2184
        %s2190 = sadd.s32 %s1446, 4294967290
        %v2191 = vstv %s2190
        %v2192 = vadd.s32 %v2191, %v1449
        %v2193 = vadd.s32 %v2191, %v1450
        %v2194 = vadd.s32 %v2191, %v1451
        %v2195 = vadd.s32 %v2191, %v1452
        %v2196 = vadd.s32 %v2191, %v1453
        %vm2197 = vcmp.ge.s32.totalorder %v2192, 0
        %vm2198 = vcmp.ge.s32.totalorder %v2193, 0
        %vm2199 = vcmp.ge.s32.totalorder %v2194, 0
        %vm2200 = vcmp.ge.s32.totalorder %v2195, 0
        %vm2201 = vcmp.ge.s32.totalorder %v2196, 0
        %vm2202 = vcmp.lt.s32.totalorder %v2192, 48
        %vm2203 = vcmp.lt.s32.totalorder %v2193, 48
        %vm2204 = vcmp.lt.s32.totalorder %v2194, 48
        %vm2205 = vcmp.lt.s32.totalorder %v2195, 48
        %vm2206 = vcmp.lt.s32.totalorder %v2196, 48
        %vm2207 = vmand %vm2197, %vm2202
        %vm2208 = vmand %vm2198, %vm2203
        %vm2209 = vmand %vm2199, %vm2204
        %vm2210 = vmand %vm2200, %vm2205
        %vm2211 = vmand %vm2201, %vm2206
        %v2212 = vsel %vm2207, %v2185, 0.0
        %v2213 = vsel %vm2208, %v2186, 0.0
        %v2214 = vsel %vm2209, %v2187, 0.0
        %v2215 = vsel %vm2210, %v2188, 0.0
        %v2216 = vsel %vm2211, %v2189, 0.0
        %v2217 = vpack.c.bf16 %v2213, %v2212
        %v2218 = vpack.c.bf16 %v2215, %v2214
        %v2219 = vpack.c.bf16 %v2216, %v2216
        %v2220 = vld [vmem:[#allocation10] sm:$0xf]
        %v2221 = vld [vmem:[#allocation10 + $0x4] sm:$0xf]
        %v2222 = vld [vmem:[#allocation10 + $0x8] sm:$0xf]
        %v2223 = vld [vmem:[#allocation10 + $0xc] sm:$0xf]
        %v2224 = vld [vmem:[#allocation10 + $0x10] sm:$0xf]
        %v2225 = vld [vmem:[#allocation10 + $0x14] sm:$0xf]
        %v2226 = vld [vmem:[#allocation10 + $0x18] sm:$0xf]
        %v2227 = vld [vmem:[#allocation10 + $0x1c] sm:$0xf]
        %v2228 = vld [vmem:[#allocation10 + $0x20] sm:$0xf]
        %v2229 = vld [vmem:[#allocation10 + $0x24] sm:$0xf]
        %v2230 = vld [vmem:[#allocation10 + $0x28] sm:$0xf]
        %v2231 = vld [vmem:[#allocation10 + $0x2c] sm:$0xf]
        %v2232 = vld [vmem:[#allocation10 + $0x30] sm:$0xf]
        %v2233 = vld [vmem:[#allocation10 + $0x34] sm:$0xf]
        %v2234 = vld [vmem:[#allocation10 + $0x38] sm:$0xf]
        %v2235 = vld [vmem:[#allocation10 + $0x3c] sm:$0xf]
        %s2236 = scalar_lea.vmem [#allocation10], 64
        %v2237 = vld [vmem:[%s2236] sm:$0xf]
        %v2238 = vld [vmem:[%s2236 + $0x4] sm:$0xf]
        %v2239 = vld [vmem:[%s2236 + $0x8] sm:$0xf]
        %v2240 = vld [vmem:[%s2236 + $0xc] sm:$0xf]
        %v2241 = vld [vmem:[%s2236 + $0x10] sm:$0xf]
        %v2242 = vld [vmem:[%s2236 + $0x14] sm:$0xf]
        %v2243 = vld [vmem:[%s2236 + $0x18] sm:$0xf]
        %v2244 = vld [vmem:[%s2236 + $0x1c] sm:$0xf]
        %v2245 = vld [vmem:[%s2236 + $0x20] sm:$0xf]
        %v2246 = vld [vmem:[%s2236 + $0x24] sm:$0xf]
        %v2247 = vld [vmem:[%s2236 + $0x28] sm:$0xf]
        %v2248 = vld [vmem:[%s2236 + $0x2c] sm:$0xf]
        %v2249 = vld [vmem:[%s2236 + $0x30] sm:$0xf]
        %v2250 = vld [vmem:[%s2236 + $0x34] sm:$0xf]
        %v2251 = vld [vmem:[%s2236 + $0x38] sm:$0xf]
        %v2252 = vld [vmem:[%s2236 + $0x3c] sm:$0xf]
        %v2254 = vshrl.u32 %v2217, 16
        %v2256 = vshll.u32 %v2217, 16
        %v2258 = vrot.slane %v2256, 1
        %v2259 = vor.u32 %v2254, %v2258
        %v2261 = vshll.u32 %v2218, 16
        %v2263 = vrot.slane %v2261, 1
        %v2264 = vsel %vm771, %v2259, %v2263
        %v2265 = vshrl.u32 %v2218, 16
        %v2267 = vor.u32 %v2265, %v2263
        %v2269 = vshll.u32 %v2219, 16
        %v2271 = vrot.slane %v2269, 1
        %v2272 = vsel %vm771, %v2267, %v2271
        %v2291 = vunpack.c.l.b16 %v2237
        %v2292 = vunpack.c.l.b16 %v2238
        %v2293 = vunpack.c.l.b16 %v2239
        %v2294 = vunpack.c.l.b16 %v2240
        %v2295 = vunpack.c.l.b16 %v2241
        %v2296 = vunpack.c.l.b16 %v2242
        %v2297 = vunpack.c.l.b16 %v2243
        %v2298 = vunpack.c.l.b16 %v2244
        %v2299 = vunpack.c.l.b16 %v2245
        %v2300 = vunpack.c.l.b16 %v2246
        %v2301 = vunpack.c.l.b16 %v2247
        %v2302 = vunpack.c.l.b16 %v2248
        %v2303 = vunpack.c.l.b16 %v2249
        %v2304 = vunpack.c.l.b16 %v2250
        %v2305 = vunpack.c.l.b16 %v2251
        %v2306 = vunpack.c.l.b16 %v2252
        %v2307 = vpack.c.b16 %v2292, %v2291
        %v2308 = vpack.c.b16 %v2294, %v2293
        %v2309 = vpack.c.b16 %v2296, %v2295
        %v2310 = vpack.c.b16 %v2298, %v2297
        %v2311 = vpack.c.b16 %v2300, %v2299
        %v2312 = vpack.c.b16 %v2302, %v2301
        %v2313 = vpack.c.b16 %v2304, %v2303
        %v2314 = vpack.c.b16 %v2306, %v2305
        %2323 = vmatprep.subr.bf16.mxu0 0
        %2324 = vmatpush1.bf16.msra.mxu0 %v2314
        %2325 = vmatprep.subr.bf16.mxu0 0
        %2326 = vmatpush1.bf16.msra.mxu0 %v2313
        %2327 = vmatprep.subr.bf16.mxu0 0
        %2328 = vmatpush1.bf16.msra.mxu0 %v2312
        %2329 = vmatprep.subr.bf16.mxu0 0
        %2330 = vmatpush1.bf16.msra.mxu0 %v2311
        %2331 = vmatprep.subr.bf16.mxu0 0
        %2332 = vmatpush1.bf16.msra.mxu0 %v2310
        %2333 = vmatprep.subr.bf16.mxu0 0
        %2334 = vmatpush1.bf16.msra.mxu0 %v2309
        %2335 = vmatprep.subr.bf16.mxu0 0
        %2336 = vmatpush1.bf16.msra.mxu0 %v2308
        %2337 = vmatprep.subr.bf16.mxu0 0
        %2338 = vmatpush1.bf16.msra.mxu0 %v2307
        %2339 = vmatprep.subr.bf16.mxu0 0
        %2340 = vmatpush2.bf16.msra.mxu0 0
        %2341 = vmatprep.subr.bf16.mxu0 0
        %2342 = vmatpush2.bf16.msra.mxu0 0
        %2343 = vmatprep.subr.bf16.mxu0 0
        %2344 = vmatpush2.bf16.msra.mxu0 0
        %2345 = vmatprep.subr.bf16.mxu0 0
        %2346 = vmatpush2.bf16.msra.mxu0 0
        %2347 = vmatprep.subr.bf16.mxu0 0
        %2348 = vmatpush2.bf16.msra.mxu0 0
        %2349 = vmatprep.subr.bf16.mxu0 0
        %2350 = vmatpush2.bf16.msra.mxu0 0
        %2351 = vmatprep.subr.bf16.mxu0 0
        %2352 = vmatpush2.bf16.msra.mxu0 0
        %2353 = vmatprep.subr.bf16.mxu0 0
        %2354 = vmatpush2.bf16.msra.mxu0 0
        %2355 = vmatprep.mubr.bf16.mxu0 0
        %2356 = vmatmul.mubr.bf16.gmra.mxu0 %v2264
        %v2357 = vpop.f32.mrf.mxu0
        %v2358 = vadd.f32 0.0, %v2357
        %v2359 = vpop.f32.mrf.mxu0
        %v2360 = vpop.f32.mrf.mxu0
        %v2361 = vadd.f32 0.0, %v2360
        %v2362 = vpop.f32.mrf.mxu0
        %2363 = vmatprep.mubr.bf16.mxu0 0
        %2364 = vmatmul.mubr.bf16.gmra.mxu0 %v2272
        %v2365 = vpop.f32.mrf.mxu0
        %v2366 = vadd.f32 0.0, %v2365
        %v2367 = vpop.f32.mrf.mxu0
        %v2368 = vpop.f32.mrf.mxu0
        %v2369 = vadd.f32 0.0, %v2368
        %v2370 = vpop.f32.mrf.mxu0
        %2371 = vdwg.mxu0
        %v2388 = vunpack.c.l.b16 %v2220
        %v2389 = vunpack.c.l.b16 %v2221
        %v2390 = vunpack.c.l.b16 %v2222
        %v2391 = vunpack.c.l.b16 %v2223
        %v2392 = vunpack.c.l.b16 %v2224
        %v2393 = vunpack.c.l.b16 %v2225
        %v2394 = vunpack.c.l.b16 %v2226
        %v2395 = vunpack.c.l.b16 %v2227
        %v2396 = vunpack.c.l.b16 %v2228
        %v2397 = vunpack.c.l.b16 %v2229
        %v2398 = vunpack.c.l.b16 %v2230
        %v2399 = vunpack.c.l.b16 %v2231
        %v2400 = vunpack.c.l.b16 %v2232
        %v2401 = vunpack.c.l.b16 %v2233
        %v2402 = vunpack.c.l.b16 %v2234
        %v2403 = vunpack.c.l.b16 %v2235
        %v2404 = vpack.c.b16 %v2389, %v2388
        %v2405 = vpack.c.b16 %v2391, %v2390
        %v2406 = vpack.c.b16 %v2393, %v2392
        %v2407 = vpack.c.b16 %v2395, %v2394
        %v2408 = vpack.c.b16 %v2397, %v2396
        %v2409 = vpack.c.b16 %v2399, %v2398
        %v2410 = vpack.c.b16 %v2401, %v2400
        %v2411 = vpack.c.b16 %v2403, %v2402
        %2420 = vmatprep.subr.bf16.mxu0 0
        %2421 = vmatpush1.bf16.msra.mxu0 %v2411
        %2422 = vmatprep.subr.bf16.mxu0 0
        %2423 = vmatpush1.bf16.msra.mxu0 %v2410
        %2424 = vmatprep.subr.bf16.mxu0 0
        %2425 = vmatpush1.bf16.msra.mxu0 %v2409
        %2426 = vmatprep.subr.bf16.mxu0 0
        %2427 = vmatpush1.bf16.msra.mxu0 %v2408
        %2428 = vmatprep.subr.bf16.mxu0 0
        %2429 = vmatpush1.bf16.msra.mxu0 %v2407
        %2430 = vmatprep.subr.bf16.mxu0 0
        %2431 = vmatpush1.bf16.msra.mxu0 %v2406
        %2432 = vmatprep.subr.bf16.mxu0 0
        %2433 = vmatpush1.bf16.msra.mxu0 %v2405
        %2434 = vmatprep.subr.bf16.mxu0 0
        %2435 = vmatpush1.bf16.msra.mxu0 %v2404
        %2436 = vmatprep.subr.bf16.mxu0 0
        %2437 = vmatpush2.bf16.msra.mxu0 0
        %2438 = vmatprep.subr.bf16.mxu0 0
        %2439 = vmatpush2.bf16.msra.mxu0 0
        %2440 = vmatprep.subr.bf16.mxu0 0
        %2441 = vmatpush2.bf16.msra.mxu0 0
        %2442 = vmatprep.subr.bf16.mxu0 0
        %2443 = vmatpush2.bf16.msra.mxu0 0
        %2444 = vmatprep.subr.bf16.mxu0 0
        %2445 = vmatpush2.bf16.msra.mxu0 0
        %2446 = vmatprep.subr.bf16.mxu0 0
        %2447 = vmatpush2.bf16.msra.mxu0 0
        %2448 = vmatprep.subr.bf16.mxu0 0
        %2449 = vmatpush2.bf16.msra.mxu0 0
        %2450 = vmatprep.subr.bf16.mxu0 0
        %2451 = vmatpush2.bf16.msra.mxu0 0
        %2452 = vmatprep.mubr.bf16.mxu0 0
        %2453 = vmatmul.mubr.bf16.gmra.mxu0 %v2217
        %v2454 = vpop.f32.mrf.mxu0
        %v2455 = vadd.f32 %v2358, %v2454
        %v2456 = vpop.f32.mrf.mxu0
        %v2457 = vpop.f32.mrf.mxu0
        %v2458 = vadd.f32 %v2361, %v2457
        %v2459 = vpop.f32.mrf.mxu0
        %2460 = vmatprep.mubr.bf16.mxu0 0
        %2461 = vmatmul.mubr.bf16.gmra.mxu0 %v2218
        %v2462 = vpop.f32.mrf.mxu0
        %v2463 = vadd.f32 %v2366, %v2462
        %v2464 = vpop.f32.mrf.mxu0
        %v2465 = vpop.f32.mrf.mxu0
        %v2466 = vadd.f32 %v2369, %v2465
        %v2467 = vpop.f32.mrf.mxu0
        %2468 = vdwg.mxu0
        %s2469 = scalar_lea.vmem [#allocation10], 128
        %v2470 = vld [vmem:[%s2469] sm:$0xf]
        %v2471 = vld [vmem:[%s2469 + $0x4] sm:$0xf]
        %v2472 = vld [vmem:[%s2469 + $0x8] sm:$0xf]
        %v2473 = vld [vmem:[%s2469 + $0xc] sm:$0xf]
        %v2474 = vld [vmem:[%s2469 + $0x10] sm:$0xf]
        %v2475 = vld [vmem:[%s2469 + $0x14] sm:$0xf]
        %v2476 = vld [vmem:[%s2469 + $0x18] sm:$0xf]
        %v2477 = vld [vmem:[%s2469 + $0x1c] sm:$0xf]
        %v2478 = vld [vmem:[%s2469 + $0x20] sm:$0xf]
        %v2479 = vld [vmem:[%s2469 + $0x24] sm:$0xf]
        %v2480 = vld [vmem:[%s2469 + $0x28] sm:$0xf]
        %v2481 = vld [vmem:[%s2469 + $0x2c] sm:$0xf]
        %v2482 = vld [vmem:[%s2469 + $0x30] sm:$0xf]
        %v2483 = vld [vmem:[%s2469 + $0x34] sm:$0xf]
        %v2484 = vld [vmem:[%s2469 + $0x38] sm:$0xf]
        %v2485 = vld [vmem:[%s2469 + $0x3c] sm:$0xf]
        %v2489 = vrot.slane %v2217, 1
        %v2490 = vrot.slane %v2218, 1
        %v2491 = vsel %vm1023, %v2489, %v2490
        %v2492 = vrot.slane %v2219, 1
        %v2493 = vsel %vm1023, %v2490, %v2492
        %v2512 = vunpack.c.l.b16 %v2470
        %v2513 = vunpack.c.l.b16 %v2471
        %v2514 = vunpack.c.l.b16 %v2472
        %v2515 = vunpack.c.l.b16 %v2473
        %v2516 = vunpack.c.l.b16 %v2474
        %v2517 = vunpack.c.l.b16 %v2475
        %v2518 = vunpack.c.l.b16 %v2476
        %v2519 = vunpack.c.l.b16 %v2477
        %v2520 = vunpack.c.l.b16 %v2478
        %v2521 = vunpack.c.l.b16 %v2479
        %v2522 = vunpack.c.l.b16 %v2480
        %v2523 = vunpack.c.l.b16 %v2481
        %v2524 = vunpack.c.l.b16 %v2482
        %v2525 = vunpack.c.l.b16 %v2483
        %v2526 = vunpack.c.l.b16 %v2484
        %v2527 = vunpack.c.l.b16 %v2485
        %v2528 = vpack.c.b16 %v2513, %v2512
        %v2529 = vpack.c.b16 %v2515, %v2514
        %v2530 = vpack.c.b16 %v2517, %v2516
        %v2531 = vpack.c.b16 %v2519, %v2518
        %v2532 = vpack.c.b16 %v2521, %v2520
        %v2533 = vpack.c.b16 %v2523, %v2522
        %v2534 = vpack.c.b16 %v2525, %v2524
        %v2535 = vpack.c.b16 %v2527, %v2526
        %2544 = vmatprep.subr.bf16.mxu0 0
        %2545 = vmatpush1.bf16.msra.mxu0 %v2535
        %2546 = vmatprep.subr.bf16.mxu0 0
        %2547 = vmatpush1.bf16.msra.mxu0 %v2534
        %2548 = vmatprep.subr.bf16.mxu0 0
        %2549 = vmatpush1.bf16.msra.mxu0 %v2533
        %2550 = vmatprep.subr.bf16.mxu0 0
        %2551 = vmatpush1.bf16.msra.mxu0 %v2532
        %2552 = vmatprep.subr.bf16.mxu0 0
        %2553 = vmatpush1.bf16.msra.mxu0 %v2531
        %2554 = vmatprep.subr.bf16.mxu0 0
        %2555 = vmatpush1.bf16.msra.mxu0 %v2530
        %2556 = vmatprep.subr.bf16.mxu0 0
        %2557 = vmatpush1.bf16.msra.mxu0 %v2529
        %2558 = vmatprep.subr.bf16.mxu0 0
        %2559 = vmatpush1.bf16.msra.mxu0 %v2528
        %2560 = vmatprep.subr.bf16.mxu0 0
        %2561 = vmatpush2.bf16.msra.mxu0 0
        %2562 = vmatprep.subr.bf16.mxu0 0
        %2563 = vmatpush2.bf16.msra.mxu0 0
        %2564 = vmatprep.subr.bf16.mxu0 0
        %2565 = vmatpush2.bf16.msra.mxu0 0
        %2566 = vmatprep.subr.bf16.mxu0 0
        %2567 = vmatpush2.bf16.msra.mxu0 0
        %2568 = vmatprep.subr.bf16.mxu0 0
        %2569 = vmatpush2.bf16.msra.mxu0 0
        %2570 = vmatprep.subr.bf16.mxu0 0
        %2571 = vmatpush2.bf16.msra.mxu0 0
        %2572 = vmatprep.subr.bf16.mxu0 0
        %2573 = vmatpush2.bf16.msra.mxu0 0
        %2574 = vmatprep.subr.bf16.mxu0 0
        %2575 = vmatpush2.bf16.msra.mxu0 0
        %2576 = vmatprep.mubr.bf16.mxu0 0
        %2577 = vmatmul.mubr.bf16.gmra.mxu0 %v2491
        %v2578 = vpop.f32.mrf.mxu0
        %v2579 = vadd.f32 0.0, %v2578
        %v2580 = vpop.f32.mrf.mxu0
        %v2581 = vpop.f32.mrf.mxu0
        %v2582 = vadd.f32 0.0, %v2581
        %v2583 = vpop.f32.mrf.mxu0
        %2584 = vmatprep.mubr.bf16.mxu0 0
        %2585 = vmatmul.mubr.bf16.gmra.mxu0 %v2493
        %v2586 = vpop.f32.mrf.mxu0
        %v2587 = vadd.f32 0.0, %v2586
        %v2588 = vpop.f32.mrf.mxu0
        %v2589 = vpop.f32.mrf.mxu0
        %v2590 = vadd.f32 0.0, %v2589
        %v2591 = vpop.f32.mrf.mxu0
        %2592 = vdwg.mxu0
        %v2593 = vadd.f32 %v2455, %v2579
        %v2594 = vadd.f32 %v2458, %v2582
        %v2595 = vadd.f32 %v2463, %v2587
        %v2596 = vadd.f32 %v2466, %v2590
        %s2597 = scalar_lea.vmem [#allocation10], 192
        %v2598 = vld [vmem:[%s2597] sm:$0xf]
        %v2599 = vld [vmem:[%s2597 + $0x4] sm:$0xf]
        %v2600 = vld [vmem:[%s2597 + $0x8] sm:$0xf]
        %v2601 = vld [vmem:[%s2597 + $0xc] sm:$0xf]
        %v2602 = vld [vmem:[%s2597 + $0x10] sm:$0xf]
        %v2603 = vld [vmem:[%s2597 + $0x14] sm:$0xf]
        %v2604 = vld [vmem:[%s2597 + $0x18] sm:$0xf]
        %v2605 = vld [vmem:[%s2597 + $0x1c] sm:$0xf]
        %v2606 = vld [vmem:[%s2597 + $0x20] sm:$0xf]
        %v2607 = vld [vmem:[%s2597 + $0x24] sm:$0xf]
        %v2608 = vld [vmem:[%s2597 + $0x28] sm:$0xf]
        %v2609 = vld [vmem:[%s2597 + $0x2c] sm:$0xf]
        %v2610 = vld [vmem:[%s2597 + $0x30] sm:$0xf]
        %v2611 = vld [vmem:[%s2597 + $0x34] sm:$0xf]
        %v2612 = vld [vmem:[%s2597 + $0x38] sm:$0xf]
        %v2613 = vld [vmem:[%s2597 + $0x3c] sm:$0xf]
        %v2614 = vrot.slane %v2254, 1
        %v2615 = vrot.slane %v2256, 2
        %v2616 = vor.u32 %v2614, %v2615
        %v2617 = vrot.slane %v2265, 1
        %v2618 = vrot.slane %v2261, 2
        %v2619 = vor.u32 %v2617, %v2618
        %v2620 = vsel %vm1158, %v2616, %v2619
        %v2621 = vshrl.u32 %v2219, 16
        %v2623 = vrot.slane %v2621, 1
        %v2624 = vrot.slane %v2269, 2
        %v2625 = vor.u32 %v2623, %v2624
        %v2626 = vsel %vm1158, %v2619, %v2625
        %v2645 = vunpack.c.l.b16 %v2598
        %v2646 = vunpack.c.l.b16 %v2599
        %v2647 = vunpack.c.l.b16 %v2600
        %v2648 = vunpack.c.l.b16 %v2601
        %v2649 = vunpack.c.l.b16 %v2602
        %v2650 = vunpack.c.l.b16 %v2603
        %v2651 = vunpack.c.l.b16 %v2604
        %v2652 = vunpack.c.l.b16 %v2605
        %v2653 = vunpack.c.l.b16 %v2606
        %v2654 = vunpack.c.l.b16 %v2607
        %v2655 = vunpack.c.l.b16 %v2608
        %v2656 = vunpack.c.l.b16 %v2609
        %v2657 = vunpack.c.l.b16 %v2610
        %v2658 = vunpack.c.l.b16 %v2611
        %v2659 = vunpack.c.l.b16 %v2612
        %v2660 = vunpack.c.l.b16 %v2613
        %v2661 = vpack.c.b16 %v2646, %v2645
        %v2662 = vpack.c.b16 %v2648, %v2647
        %v2663 = vpack.c.b16 %v2650, %v2649
        %v2664 = vpack.c.b16 %v2652, %v2651
        %v2665 = vpack.c.b16 %v2654, %v2653
        %v2666 = vpack.c.b16 %v2656, %v2655
        %v2667 = vpack.c.b16 %v2658, %v2657
        %v2668 = vpack.c.b16 %v2660, %v2659
        %2677 = vmatprep.subr.bf16.mxu0 0
        %2678 = vmatpush1.bf16.msra.mxu0 %v2668
        %2679 = vmatprep.subr.bf16.mxu0 0
        %2680 = vmatpush1.bf16.msra.mxu0 %v2667
        %2681 = vmatprep.subr.bf16.mxu0 0
        %2682 = vmatpush1.bf16.msra.mxu0 %v2666
        %2683 = vmatprep.subr.bf16.mxu0 0
        %2684 = vmatpush1.bf16.msra.mxu0 %v2665
        %2685 = vmatprep.subr.bf16.mxu0 0
        %2686 = vmatpush1.bf16.msra.mxu0 %v2664
        %2687 = vmatprep.subr.bf16.mxu0 0
        %2688 = vmatpush1.bf16.msra.mxu0 %v2663
        %2689 = vmatprep.subr.bf16.mxu0 0
        %2690 = vmatpush1.bf16.msra.mxu0 %v2662
        %2691 = vmatprep.subr.bf16.mxu0 0
        %2692 = vmatpush1.bf16.msra.mxu0 %v2661
        %2693 = vmatprep.subr.bf16.mxu0 0
        %2694 = vmatpush2.bf16.msra.mxu0 0
        %2695 = vmatprep.subr.bf16.mxu0 0
        %2696 = vmatpush2.bf16.msra.mxu0 0
        %2697 = vmatprep.subr.bf16.mxu0 0
        %2698 = vmatpush2.bf16.msra.mxu0 0
        %2699 = vmatprep.subr.bf16.mxu0 0
        %2700 = vmatpush2.bf16.msra.mxu0 0
        %2701 = vmatprep.subr.bf16.mxu0 0
        %2702 = vmatpush2.bf16.msra.mxu0 0
        %2703 = vmatprep.subr.bf16.mxu0 0
        %2704 = vmatpush2.bf16.msra.mxu0 0
        %2705 = vmatprep.subr.bf16.mxu0 0
        %2706 = vmatpush2.bf16.msra.mxu0 0
        %2707 = vmatprep.subr.bf16.mxu0 0
        %2708 = vmatpush2.bf16.msra.mxu0 0
        %2709 = vmatprep.mubr.bf16.mxu0 0
        %2710 = vmatmul.mubr.bf16.gmra.mxu0 %v2620
        %v2711 = vpop.f32.mrf.mxu0
        %v2712 = vadd.f32 0.0, %v2711
        %v2713 = vpop.f32.mrf.mxu0
        %v2714 = vpop.f32.mrf.mxu0
        %v2715 = vadd.f32 0.0, %v2714
        %v2716 = vpop.f32.mrf.mxu0
        %2717 = vmatprep.mubr.bf16.mxu0 0
        %2718 = vmatmul.mubr.bf16.gmra.mxu0 %v2626
        %v2719 = vpop.f32.mrf.mxu0
        %v2720 = vadd.f32 0.0, %v2719
        %v2721 = vpop.f32.mrf.mxu0
        %v2722 = vpop.f32.mrf.mxu0
        %v2723 = vadd.f32 0.0, %v2722
        %v2724 = vpop.f32.mrf.mxu0
        %2725 = vdwg.mxu0
        %v2726 = vadd.f32 %v2593, %v2712
        %v2727 = vadd.f32 %v2594, %v2715
        %v2728 = vadd.f32 %v2595, %v2720
        %v2729 = vadd.f32 %v2596, %v2723
        %s2730 = scalar_lea.vmem [#allocation10], 256
        %v2731 = vld [vmem:[%s2730] sm:$0xf]
        %v2732 = vld [vmem:[%s2730 + $0x4] sm:$0xf]
        %v2733 = vld [vmem:[%s2730 + $0x8] sm:$0xf]
        %v2734 = vld [vmem:[%s2730 + $0xc] sm:$0xf]
        %v2735 = vld [vmem:[%s2730 + $0x10] sm:$0xf]
        %v2736 = vld [vmem:[%s2730 + $0x14] sm:$0xf]
        %v2737 = vld [vmem:[%s2730 + $0x18] sm:$0xf]
        %v2738 = vld [vmem:[%s2730 + $0x1c] sm:$0xf]
        %v2739 = vld [vmem:[%s2730 + $0x20] sm:$0xf]
        %v2740 = vld [vmem:[%s2730 + $0x24] sm:$0xf]
        %v2741 = vld [vmem:[%s2730 + $0x28] sm:$0xf]
        %v2742 = vld [vmem:[%s2730 + $0x2c] sm:$0xf]
        %v2743 = vld [vmem:[%s2730 + $0x30] sm:$0xf]
        %v2744 = vld [vmem:[%s2730 + $0x34] sm:$0xf]
        %v2745 = vld [vmem:[%s2730 + $0x38] sm:$0xf]
        %v2746 = vld [vmem:[%s2730 + $0x3c] sm:$0xf]
        %v2747 = vrot.slane %v2217, 2
        %v2748 = vrot.slane %v2218, 2
        %v2749 = vsel %vm1299, %v2747, %v2748
        %v2750 = vrot.slane %v2219, 2
        %v2751 = vsel %vm1299, %v2748, %v2750
        %v2770 = vunpack.c.l.b16 %v2731
        %v2771 = vunpack.c.l.b16 %v2732
        %v2772 = vunpack.c.l.b16 %v2733
        %v2773 = vunpack.c.l.b16 %v2734
        %v2774 = vunpack.c.l.b16 %v2735
        %v2775 = vunpack.c.l.b16 %v2736
        %v2776 = vunpack.c.l.b16 %v2737
        %v2777 = vunpack.c.l.b16 %v2738
        %v2778 = vunpack.c.l.b16 %v2739
        %v2779 = vunpack.c.l.b16 %v2740
        %v2780 = vunpack.c.l.b16 %v2741
        %v2781 = vunpack.c.l.b16 %v2742
        %v2782 = vunpack.c.l.b16 %v2743
        %v2783 = vunpack.c.l.b16 %v2744
        %v2784 = vunpack.c.l.b16 %v2745
        %v2785 = vunpack.c.l.b16 %v2746
        %v2786 = vpack.c.b16 %v2771, %v2770
        %v2787 = vpack.c.b16 %v2773, %v2772
        %v2788 = vpack.c.b16 %v2775, %v2774
        %v2789 = vpack.c.b16 %v2777, %v2776
        %v2790 = vpack.c.b16 %v2779, %v2778
        %v2791 = vpack.c.b16 %v2781, %v2780
        %v2792 = vpack.c.b16 %v2783, %v2782
        %v2793 = vpack.c.b16 %v2785, %v2784
        %2802 = vmatprep.subr.bf16.mxu0 0
        %2803 = vmatpush1.bf16.msra.mxu0 %v2793
        %2804 = vmatprep.subr.bf16.mxu0 0
        %2805 = vmatpush1.bf16.msra.mxu0 %v2792
        %2806 = vmatprep.subr.bf16.mxu0 0
        %2807 = vmatpush1.bf16.msra.mxu0 %v2791
        %2808 = vmatprep.subr.bf16.mxu0 0
        %2809 = vmatpush1.bf16.msra.mxu0 %v2790
        %2810 = vmatprep.subr.bf16.mxu0 0
        %2811 = vmatpush1.bf16.msra.mxu0 %v2789
        %2812 = vmatprep.subr.bf16.mxu0 0
        %2813 = vmatpush1.bf16.msra.mxu0 %v2788
        %2814 = vmatprep.subr.bf16.mxu0 0
        %2815 = vmatpush1.bf16.msra.mxu0 %v2787
        %2816 = vmatprep.subr.bf16.mxu0 0
        %2817 = vmatpush1.bf16.msra.mxu0 %v2786
        %2818 = vmatprep.subr.bf16.mxu0 0
        %2819 = vmatpush2.bf16.msra.mxu0 0
        %2820 = vmatprep.subr.bf16.mxu0 0
        %2821 = vmatpush2.bf16.msra.mxu0 0
        %2822 = vmatprep.subr.bf16.mxu0 0
        %2823 = vmatpush2.bf16.msra.mxu0 0
        %2824 = vmatprep.subr.bf16.mxu0 0
        %2825 = vmatpush2.bf16.msra.mxu0 0
        %2826 = vmatprep.subr.bf16.mxu0 0
        %2827 = vmatpush2.bf16.msra.mxu0 0
        %2828 = vmatprep.subr.bf16.mxu0 0
        %2829 = vmatpush2.bf16.msra.mxu0 0
        %2830 = vmatprep.subr.bf16.mxu0 0
        %2831 = vmatpush2.bf16.msra.mxu0 0
        %2832 = vmatprep.subr.bf16.mxu0 0
        %2833 = vmatpush2.bf16.msra.mxu0 0
        %2834 = vmatprep.mubr.bf16.mxu0 0
        %2835 = vmatmul.mubr.bf16.gmra.mxu0 %v2749
        %v2836 = vpop.f32.mrf.mxu0
        %v2837 = vadd.f32 0.0, %v2836
        %v2838 = vpop.f32.mrf.mxu0
        %v2839 = vpop.f32.mrf.mxu0
        %v2840 = vadd.f32 0.0, %v2839
        %v2841 = vpop.f32.mrf.mxu0
        %2842 = vmatprep.mubr.bf16.mxu0 0
        %2843 = vmatmul.mubr.bf16.gmra.mxu0 %v2751
        %v2844 = vpop.f32.mrf.mxu0
        %v2845 = vadd.f32 0.0, %v2844
        %v2846 = vpop.f32.mrf.mxu0
        %v2847 = vpop.f32.mrf.mxu0
        %v2848 = vadd.f32 0.0, %v2847
        %v2849 = vpop.f32.mrf.mxu0
        %2850 = vdwg.mxu0
        %v2851 = vadd.f32 %v2726, %v2837
        %v2852 = vadd.f32 %v2727, %v2840
        %v2853 = vadd.f32 %v2728, %v2845
        %v2854 = vadd.f32 %v2729, %v2848
        %v2855 = vld [vmem:[%s9] sm:$0x1]
        %v2857 = vlaneseq
        %v2858 = vshrl.u32 %v2857, 7
        %v2859 = vsub.s32 0, %v2858
        %v2860 = vrot.slane %v2855, %v2859
        %v2862 = vmul.f32 %v2851, %v2860
        %v2863 = vmul.f32 %v2852, %v2860
        %v2864 = vmul.f32 %v2853, %v2860
        %v2865 = vmul.f32 %v2854, %v2860
        %v2866 = vld [vmem:[%s10] sm:$0x1]
        %v2868 = vlaneseq
        %v2869 = vshrl.u32 %v2868, 7
        %v2870 = vsub.s32 0, %v2869
        %v2871 = vrot.slane %v2866, %v2870
        %v2873 = vadd.f32 %v2862, %v2871
        %v2874 = vadd.f32 %v2863, %v2871
        %v2875 = vadd.f32 %v2864, %v2871
        %v2876 = vadd.f32 %v2865, %v2871
        %v2877 = vtanh.pop %v2873
        %v2878 = vtanh.pop %v2874
        %v2879 = vtanh.pop %v2875
        %v2880 = vtanh.pop %v2876
        %s2881 = sadd.s32 %s1446, 4294967292
        %v2882 = vstv %s2881
        %v2883 = vadd.s32 %v2882, %v1449
        %v2884 = vadd.s32 %v2882, %v1450
        %v2885 = vadd.s32 %v2882, %v1451
        %v2886 = vadd.s32 %v2882, %v1452
        %vm2887 = vcmp.ge.s32.totalorder %v2883, 0
        %vm2888 = vcmp.ge.s32.totalorder %v2884, 0
        %vm2889 = vcmp.ge.s32.totalorder %v2885, 0
        %vm2890 = vcmp.ge.s32.totalorder %v2886, 0
        %vm2891 = vcmp.lt.s32.totalorder %v2883, 48
        %vm2892 = vcmp.lt.s32.totalorder %v2884, 48
        %vm2893 = vcmp.lt.s32.totalorder %v2885, 48
        %vm2894 = vcmp.lt.s32.totalorder %v2886, 48
        %vm2895 = vmand %vm2887, %vm2891
        %vm2896 = vmand %vm2888, %vm2892
        %vm2897 = vmand %vm2889, %vm2893
        %vm2898 = vmand %vm2890, %vm2894
        %v2899 = vsel %vm2895, %v2877, 0.0
        %v2900 = vsel %vm2896, %v2878, 0.0
        %v2901 = vsel %vm2897, %v2879, 0.0
        %v2902 = vsel %vm2898, %v2880, 0.0
        %v2903 = vpack.c.bf16 %v2900, %v2899
        %v2904 = vpack.c.bf16 %v2902, %v2901
        %v2905 = vld [vmem:[#allocation11] sm:$0xf]
        %v2906 = vld [vmem:[#allocation11 + $0x4] sm:$0xf]
        %v2907 = vld [vmem:[#allocation11 + $0x8] sm:$0xf]
        %v2908 = vld [vmem:[#allocation11 + $0xc] sm:$0xf]
        %v2909 = vld [vmem:[#allocation11 + $0x10] sm:$0xf]
        %v2910 = vld [vmem:[#allocation11 + $0x14] sm:$0xf]
        %v2911 = vld [vmem:[#allocation11 + $0x18] sm:$0xf]
        %v2912 = vld [vmem:[#allocation11 + $0x1c] sm:$0xf]
        %v2913 = vld [vmem:[#allocation11 + $0x20] sm:$0xf]
        %v2914 = vld [vmem:[#allocation11 + $0x24] sm:$0xf]
        %v2915 = vld [vmem:[#allocation11 + $0x28] sm:$0xf]
        %v2916 = vld [vmem:[#allocation11 + $0x2c] sm:$0xf]
        %v2917 = vld [vmem:[#allocation11 + $0x30] sm:$0xf]
        %v2918 = vld [vmem:[#allocation11 + $0x34] sm:$0xf]
        %v2919 = vld [vmem:[#allocation11 + $0x38] sm:$0xf]
        %v2920 = vld [vmem:[#allocation11 + $0x3c] sm:$0xf]
        %s2921 = scalar_lea.vmem [#allocation11], 64
        %v2922 = vld [vmem:[%s2921] sm:$0xf]
        %v2923 = vld [vmem:[%s2921 + $0x4] sm:$0xf]
        %v2924 = vld [vmem:[%s2921 + $0x8] sm:$0xf]
        %v2925 = vld [vmem:[%s2921 + $0xc] sm:$0xf]
        %v2926 = vld [vmem:[%s2921 + $0x10] sm:$0xf]
        %v2927 = vld [vmem:[%s2921 + $0x14] sm:$0xf]
        %v2928 = vld [vmem:[%s2921 + $0x18] sm:$0xf]
        %v2929 = vld [vmem:[%s2921 + $0x1c] sm:$0xf]
        %v2930 = vld [vmem:[%s2921 + $0x20] sm:$0xf]
        %v2931 = vld [vmem:[%s2921 + $0x24] sm:$0xf]
        %v2932 = vld [vmem:[%s2921 + $0x28] sm:$0xf]
        %v2933 = vld [vmem:[%s2921 + $0x2c] sm:$0xf]
        %v2934 = vld [vmem:[%s2921 + $0x30] sm:$0xf]
        %v2935 = vld [vmem:[%s2921 + $0x34] sm:$0xf]
        %v2936 = vld [vmem:[%s2921 + $0x38] sm:$0xf]
        %v2937 = vld [vmem:[%s2921 + $0x3c] sm:$0xf]
        %v2939 = vshrl.u32 %v2903, 16
        %v2941 = vshll.u32 %v2903, 16
        %v2943 = vrot.slane %v2941, 1
        %v2944 = vor.u32 %v2939, %v2943
        %v2946 = vshll.u32 %v2904, 16
        %v2948 = vrot.slane %v2946, 1
        %v2949 = vsel %vm771, %v2944, %v2948
        %v2950 = vshrl.u32 %v2904, 16
        %v2952 = vor.u32 %v2950, %v2948
        %v2971 = vunpack.c.l.b16 %v2922
        %v2972 = vunpack.c.l.b16 %v2923
        %v2973 = vunpack.c.l.b16 %v2924
        %v2974 = vunpack.c.l.b16 %v2925
        %v2975 = vunpack.c.l.b16 %v2926
        %v2976 = vunpack.c.l.b16 %v2927
        %v2977 = vunpack.c.l.b16 %v2928
        %v2978 = vunpack.c.l.b16 %v2929
        %v2979 = vunpack.c.l.b16 %v2930
        %v2980 = vunpack.c.l.b16 %v2931
        %v2981 = vunpack.c.l.b16 %v2932
        %v2982 = vunpack.c.l.b16 %v2933
        %v2983 = vunpack.c.l.b16 %v2934
        %v2984 = vunpack.c.l.b16 %v2935
        %v2985 = vunpack.c.l.b16 %v2936
        %v2986 = vunpack.c.l.b16 %v2937
        %v2987 = vpack.c.b16 %v2972, %v2971
        %v2988 = vpack.c.b16 %v2974, %v2973
        %v2989 = vpack.c.b16 %v2976, %v2975
        %v2990 = vpack.c.b16 %v2978, %v2977
        %v2991 = vpack.c.b16 %v2980, %v2979
        %v2992 = vpack.c.b16 %v2982, %v2981
        %v2993 = vpack.c.b16 %v2984, %v2983
        %v2994 = vpack.c.b16 %v2986, %v2985
        %3003 = vmatprep.subr.bf16.mxu0 0
        %3004 = vmatpush1.bf16.msra.mxu0 %v2994
        %3005 = vmatprep.subr.bf16.mxu0 0
        %3006 = vmatpush1.bf16.msra.mxu0 %v2993
        %3007 = vmatprep.subr.bf16.mxu0 0
        %3008 = vmatpush1.bf16.msra.mxu0 %v2992
        %3009 = vmatprep.subr.bf16.mxu0 0
        %3010 = vmatpush1.bf16.msra.mxu0 %v2991
        %3011 = vmatprep.subr.bf16.mxu0 0
        %3012 = vmatpush1.bf16.msra.mxu0 %v2990
        %3013 = vmatprep.subr.bf16.mxu0 0
        %3014 = vmatpush1.bf16.msra.mxu0 %v2989
        %3015 = vmatprep.subr.bf16.mxu0 0
        %3016 = vmatpush1.bf16.msra.mxu0 %v2988
        %3017 = vmatprep.subr.bf16.mxu0 0
        %3018 = vmatpush1.bf16.msra.mxu0 %v2987
        %3019 = vmatprep.subr.bf16.mxu0 0
        %3020 = vmatpush2.bf16.msra.mxu0 0
        %3021 = vmatprep.subr.bf16.mxu0 0
        %3022 = vmatpush2.bf16.msra.mxu0 0
        %3023 = vmatprep.subr.bf16.mxu0 0
        %3024 = vmatpush2.bf16.msra.mxu0 0
        %3025 = vmatprep.subr.bf16.mxu0 0
        %3026 = vmatpush2.bf16.msra.mxu0 0
        %3027 = vmatprep.subr.bf16.mxu0 0
        %3028 = vmatpush2.bf16.msra.mxu0 0
        %3029 = vmatprep.subr.bf16.mxu0 0
        %3030 = vmatpush2.bf16.msra.mxu0 0
        %3031 = vmatprep.subr.bf16.mxu0 0
        %3032 = vmatpush2.bf16.msra.mxu0 0
        %3033 = vmatprep.subr.bf16.mxu0 0
        %3034 = vmatpush2.bf16.msra.mxu0 0
        %3035 = vmatprep.mubr.bf16.mxu0 0
        %3036 = vmatmul.mubr.bf16.gmra.mxu0 %v2949
        %v3037 = vpop.f32.mrf.mxu0
        %v3038 = vadd.f32 0.0, %v3037
        %v3039 = vpop.f32.mrf.mxu0
        %v3040 = vpop.f32.mrf.mxu0
        %v3041 = vadd.f32 0.0, %v3040
        %v3042 = vpop.f32.mrf.mxu0
        %3043 = vmatprep.mubr.bf16.mxu0 0
        %3044 = vmatmul.mubr.bf16.gmra.mxu0 %v2952
        %v3045 = vpop.f32.mrf.mxu0
        %v3046 = vadd.f32 0.0, %v3045
        %v3047 = vpop.f32.mrf.mxu0
        %v3048 = vpop.f32.mrf.mxu0
        %v3049 = vadd.f32 0.0, %v3048
        %v3050 = vpop.f32.mrf.mxu0
        %3051 = vdwg.mxu0
        %v3068 = vunpack.c.l.b16 %v2905
        %v3069 = vunpack.c.l.b16 %v2906
        %v3070 = vunpack.c.l.b16 %v2907
        %v3071 = vunpack.c.l.b16 %v2908
        %v3072 = vunpack.c.l.b16 %v2909
        %v3073 = vunpack.c.l.b16 %v2910
        %v3074 = vunpack.c.l.b16 %v2911
        %v3075 = vunpack.c.l.b16 %v2912
        %v3076 = vunpack.c.l.b16 %v2913
        %v3077 = vunpack.c.l.b16 %v2914
        %v3078 = vunpack.c.l.b16 %v2915
        %v3079 = vunpack.c.l.b16 %v2916
        %v3080 = vunpack.c.l.b16 %v2917
        %v3081 = vunpack.c.l.b16 %v2918
        %v3082 = vunpack.c.l.b16 %v2919
        %v3083 = vunpack.c.l.b16 %v2920
        %v3084 = vpack.c.b16 %v3069, %v3068
        %v3085 = vpack.c.b16 %v3071, %v3070
        %v3086 = vpack.c.b16 %v3073, %v3072
        %v3087 = vpack.c.b16 %v3075, %v3074
        %v3088 = vpack.c.b16 %v3077, %v3076
        %v3089 = vpack.c.b16 %v3079, %v3078
        %v3090 = vpack.c.b16 %v3081, %v3080
        %v3091 = vpack.c.b16 %v3083, %v3082
        %3100 = vmatprep.subr.bf16.mxu0 0
        %3101 = vmatpush1.bf16.msra.mxu0 %v3091
        %3102 = vmatprep.subr.bf16.mxu0 0
        %3103 = vmatpush1.bf16.msra.mxu0 %v3090
        %3104 = vmatprep.subr.bf16.mxu0 0
        %3105 = vmatpush1.bf16.msra.mxu0 %v3089
        %3106 = vmatprep.subr.bf16.mxu0 0
        %3107 = vmatpush1.bf16.msra.mxu0 %v3088
        %3108 = vmatprep.subr.bf16.mxu0 0
        %3109 = vmatpush1.bf16.msra.mxu0 %v3087
        %3110 = vmatprep.subr.bf16.mxu0 0
        %3111 = vmatpush1.bf16.msra.mxu0 %v3086
        %3112 = vmatprep.subr.bf16.mxu0 0
        %3113 = vmatpush1.bf16.msra.mxu0 %v3085
        %3114 = vmatprep.subr.bf16.mxu0 0
        %3115 = vmatpush1.bf16.msra.mxu0 %v3084
        %3116 = vmatprep.subr.bf16.mxu0 0
        %3117 = vmatpush2.bf16.msra.mxu0 0
        %3118 = vmatprep.subr.bf16.mxu0 0
        %3119 = vmatpush2.bf16.msra.mxu0 0
        %3120 = vmatprep.subr.bf16.mxu0 0
        %3121 = vmatpush2.bf16.msra.mxu0 0
        %3122 = vmatprep.subr.bf16.mxu0 0
        %3123 = vmatpush2.bf16.msra.mxu0 0
        %3124 = vmatprep.subr.bf16.mxu0 0
        %3125 = vmatpush2.bf16.msra.mxu0 0
        %3126 = vmatprep.subr.bf16.mxu0 0
        %3127 = vmatpush2.bf16.msra.mxu0 0
        %3128 = vmatprep.subr.bf16.mxu0 0
        %3129 = vmatpush2.bf16.msra.mxu0 0
        %3130 = vmatprep.subr.bf16.mxu0 0
        %3131 = vmatpush2.bf16.msra.mxu0 0
        %3132 = vmatprep.mubr.bf16.mxu0 0
        %3133 = vmatmul.mubr.bf16.gmra.mxu0 %v2903
        %v3134 = vpop.f32.mrf.mxu0
        %v3135 = vadd.f32 %v3038, %v3134
        %v3136 = vpop.f32.mrf.mxu0
        %v3137 = vpop.f32.mrf.mxu0
        %v3138 = vadd.f32 %v3041, %v3137
        %v3139 = vpop.f32.mrf.mxu0
        %3140 = vmatprep.mubr.bf16.mxu0 0
        %3141 = vmatmul.mubr.bf16.gmra.mxu0 %v2904
        %v3142 = vpop.f32.mrf.mxu0
        %v3143 = vadd.f32 %v3046, %v3142
        %v3144 = vpop.f32.mrf.mxu0
        %v3145 = vpop.f32.mrf.mxu0
        %v3146 = vadd.f32 %v3049, %v3145
        %v3147 = vpop.f32.mrf.mxu0
        %3148 = vdwg.mxu0
        %s3149 = scalar_lea.vmem [#allocation11], 128
        %v3150 = vld [vmem:[%s3149] sm:$0xf]
        %v3151 = vld [vmem:[%s3149 + $0x4] sm:$0xf]
        %v3152 = vld [vmem:[%s3149 + $0x8] sm:$0xf]
        %v3153 = vld [vmem:[%s3149 + $0xc] sm:$0xf]
        %v3154 = vld [vmem:[%s3149 + $0x10] sm:$0xf]
        %v3155 = vld [vmem:[%s3149 + $0x14] sm:$0xf]
        %v3156 = vld [vmem:[%s3149 + $0x18] sm:$0xf]
        %v3157 = vld [vmem:[%s3149 + $0x1c] sm:$0xf]
        %v3158 = vld [vmem:[%s3149 + $0x20] sm:$0xf]
        %v3159 = vld [vmem:[%s3149 + $0x24] sm:$0xf]
        %v3160 = vld [vmem:[%s3149 + $0x28] sm:$0xf]
        %v3161 = vld [vmem:[%s3149 + $0x2c] sm:$0xf]
        %v3162 = vld [vmem:[%s3149 + $0x30] sm:$0xf]
        %v3163 = vld [vmem:[%s3149 + $0x34] sm:$0xf]
        %v3164 = vld [vmem:[%s3149 + $0x38] sm:$0xf]
        %v3165 = vld [vmem:[%s3149 + $0x3c] sm:$0xf]
        %v3168 = vrot.slane %v2903, 1
        %v3169 = vrot.slane %v2904, 1
        %v3170 = vsel %vm1023, %v3168, %v3169
        %v3189 = vunpack.c.l.b16 %v3150
        %v3190 = vunpack.c.l.b16 %v3151
        %v3191 = vunpack.c.l.b16 %v3152
        %v3192 = vunpack.c.l.b16 %v3153
        %v3193 = vunpack.c.l.b16 %v3154
        %v3194 = vunpack.c.l.b16 %v3155
        %v3195 = vunpack.c.l.b16 %v3156
        %v3196 = vunpack.c.l.b16 %v3157
        %v3197 = vunpack.c.l.b16 %v3158
        %v3198 = vunpack.c.l.b16 %v3159
        %v3199 = vunpack.c.l.b16 %v3160
        %v3200 = vunpack.c.l.b16 %v3161
        %v3201 = vunpack.c.l.b16 %v3162
        %v3202 = vunpack.c.l.b16 %v3163
        %v3203 = vunpack.c.l.b16 %v3164
        %v3204 = vunpack.c.l.b16 %v3165
        %v3205 = vpack.c.b16 %v3190, %v3189
        %v3206 = vpack.c.b16 %v3192, %v3191
        %v3207 = vpack.c.b16 %v3194, %v3193
        %v3208 = vpack.c.b16 %v3196, %v3195
        %v3209 = vpack.c.b16 %v3198, %v3197
        %v3210 = vpack.c.b16 %v3200, %v3199
        %v3211 = vpack.c.b16 %v3202, %v3201
        %v3212 = vpack.c.b16 %v3204, %v3203
        %3221 = vmatprep.subr.bf16.mxu0 0
        %3222 = vmatpush1.bf16.msra.mxu0 %v3212
        %3223 = vmatprep.subr.bf16.mxu0 0
        %3224 = vmatpush1.bf16.msra.mxu0 %v3211
        %3225 = vmatprep.subr.bf16.mxu0 0
        %3226 = vmatpush1.bf16.msra.mxu0 %v3210
        %3227 = vmatprep.subr.bf16.mxu0 0
        %3228 = vmatpush1.bf16.msra.mxu0 %v3209
        %3229 = vmatprep.subr.bf16.mxu0 0
        %3230 = vmatpush1.bf16.msra.mxu0 %v3208
        %3231 = vmatprep.subr.bf16.mxu0 0
        %3232 = vmatpush1.bf16.msra.mxu0 %v3207
        %3233 = vmatprep.subr.bf16.mxu0 0
        %3234 = vmatpush1.bf16.msra.mxu0 %v3206
        %3235 = vmatprep.subr.bf16.mxu0 0
        %3236 = vmatpush1.bf16.msra.mxu0 %v3205
        %3237 = vmatprep.subr.bf16.mxu0 0
        %3238 = vmatpush2.bf16.msra.mxu0 0
        %3239 = vmatprep.subr.bf16.mxu0 0
        %3240 = vmatpush2.bf16.msra.mxu0 0
        %3241 = vmatprep.subr.bf16.mxu0 0
        %3242 = vmatpush2.bf16.msra.mxu0 0
        %3243 = vmatprep.subr.bf16.mxu0 0
        %3244 = vmatpush2.bf16.msra.mxu0 0
        %3245 = vmatprep.subr.bf16.mxu0 0
        %3246 = vmatpush2.bf16.msra.mxu0 0
        %3247 = vmatprep.subr.bf16.mxu0 0
        %3248 = vmatpush2.bf16.msra.mxu0 0
        %3249 = vmatprep.subr.bf16.mxu0 0
        %3250 = vmatpush2.bf16.msra.mxu0 0
        %3251 = vmatprep.subr.bf16.mxu0 0
        %3252 = vmatpush2.bf16.msra.mxu0 0
        %3253 = vmatprep.mubr.bf16.mxu0 0
        %3254 = vmatmul.mubr.bf16.gmra.mxu0 %v3170
        %v3255 = vpop.f32.mrf.mxu0
        %v3256 = vadd.f32 0.0, %v3255
        %v3257 = vpop.f32.mrf.mxu0
        %v3258 = vpop.f32.mrf.mxu0
        %v3259 = vadd.f32 0.0, %v3258
        %v3260 = vpop.f32.mrf.mxu0
        %3261 = vmatprep.mubr.bf16.mxu0 0
        %3262 = vmatmul.mubr.bf16.gmra.mxu0 %v3169
        %v3263 = vpop.f32.mrf.mxu0
        %v3264 = vadd.f32 0.0, %v3263
        %v3265 = vpop.f32.mrf.mxu0
        %v3266 = vpop.f32.mrf.mxu0
        %v3267 = vadd.f32 0.0, %v3266
        %v3268 = vpop.f32.mrf.mxu0
        %3269 = vdwg.mxu0
        %v3270 = vadd.f32 %v3135, %v3256
        %v3271 = vadd.f32 %v3138, %v3259
        %v3272 = vadd.f32 %v3143, %v3264
        %v3273 = vadd.f32 %v3146, %v3267
        %s3274 = scalar_lea.vmem [#allocation11], 192
        %v3275 = vld [vmem:[%s3274] sm:$0xf]
        %v3276 = vld [vmem:[%s3274 + $0x4] sm:$0xf]
        %v3277 = vld [vmem:[%s3274 + $0x8] sm:$0xf]
        %v3278 = vld [vmem:[%s3274 + $0xc] sm:$0xf]
        %v3279 = vld [vmem:[%s3274 + $0x10] sm:$0xf]
        %v3280 = vld [vmem:[%s3274 + $0x14] sm:$0xf]
        %v3281 = vld [vmem:[%s3274 + $0x18] sm:$0xf]
        %v3282 = vld [vmem:[%s3274 + $0x1c] sm:$0xf]
        %v3283 = vld [vmem:[%s3274 + $0x20] sm:$0xf]
        %v3284 = vld [vmem:[%s3274 + $0x24] sm:$0xf]
        %v3285 = vld [vmem:[%s3274 + $0x28] sm:$0xf]
        %v3286 = vld [vmem:[%s3274 + $0x2c] sm:$0xf]
        %v3287 = vld [vmem:[%s3274 + $0x30] sm:$0xf]
        %v3288 = vld [vmem:[%s3274 + $0x34] sm:$0xf]
        %v3289 = vld [vmem:[%s3274 + $0x38] sm:$0xf]
        %v3290 = vld [vmem:[%s3274 + $0x3c] sm:$0xf]
        %v3291 = vrot.slane %v2939, 1
        %v3292 = vrot.slane %v2941, 2
        %v3293 = vor.u32 %v3291, %v3292
        %v3294 = vrot.slane %v2950, 1
        %v3295 = vrot.slane %v2946, 2
        %v3296 = vor.u32 %v3294, %v3295
        %v3297 = vsel %vm1158, %v3293, %v3296
        %v3316 = vunpack.c.l.b16 %v3275
        %v3317 = vunpack.c.l.b16 %v3276
        %v3318 = vunpack.c.l.b16 %v3277
        %v3319 = vunpack.c.l.b16 %v3278
        %v3320 = vunpack.c.l.b16 %v3279
        %v3321 = vunpack.c.l.b16 %v3280
        %v3322 = vunpack.c.l.b16 %v3281
        %v3323 = vunpack.c.l.b16 %v3282
        %v3324 = vunpack.c.l.b16 %v3283
        %v3325 = vunpack.c.l.b16 %v3284
        %v3326 = vunpack.c.l.b16 %v3285
        %v3327 = vunpack.c.l.b16 %v3286
        %v3328 = vunpack.c.l.b16 %v3287
        %v3329 = vunpack.c.l.b16 %v3288
        %v3330 = vunpack.c.l.b16 %v3289
        %v3331 = vunpack.c.l.b16 %v3290
        %v3332 = vpack.c.b16 %v3317, %v3316
        %v3333 = vpack.c.b16 %v3319, %v3318
        %v3334 = vpack.c.b16 %v3321, %v3320
        %v3335 = vpack.c.b16 %v3323, %v3322
        %v3336 = vpack.c.b16 %v3325, %v3324
        %v3337 = vpack.c.b16 %v3327, %v3326
        %v3338 = vpack.c.b16 %v3329, %v3328
        %v3339 = vpack.c.b16 %v3331, %v3330
        %3348 = vmatprep.subr.bf16.mxu0 0
        %3349 = vmatpush1.bf16.msra.mxu0 %v3339
        %3350 = vmatprep.subr.bf16.mxu0 0
        %3351 = vmatpush1.bf16.msra.mxu0 %v3338
        %3352 = vmatprep.subr.bf16.mxu0 0
        %3353 = vmatpush1.bf16.msra.mxu0 %v3337
        %3354 = vmatprep.subr.bf16.mxu0 0
        %3355 = vmatpush1.bf16.msra.mxu0 %v3336
        %3356 = vmatprep.subr.bf16.mxu0 0
        %3357 = vmatpush1.bf16.msra.mxu0 %v3335
        %3358 = vmatprep.subr.bf16.mxu0 0
        %3359 = vmatpush1.bf16.msra.mxu0 %v3334
        %3360 = vmatprep.subr.bf16.mxu0 0
        %3361 = vmatpush1.bf16.msra.mxu0 %v3333
        %3362 = vmatprep.subr.bf16.mxu0 0
        %3363 = vmatpush1.bf16.msra.mxu0 %v3332
        %3364 = vmatprep.subr.bf16.mxu0 0
        %3365 = vmatpush2.bf16.msra.mxu0 0
        %3366 = vmatprep.subr.bf16.mxu0 0
        %3367 = vmatpush2.bf16.msra.mxu0 0
        %3368 = vmatprep.subr.bf16.mxu0 0
        %3369 = vmatpush2.bf16.msra.mxu0 0
        %3370 = vmatprep.subr.bf16.mxu0 0
        %3371 = vmatpush2.bf16.msra.mxu0 0
        %3372 = vmatprep.subr.bf16.mxu0 0
        %3373 = vmatpush2.bf16.msra.mxu0 0
        %3374 = vmatprep.subr.bf16.mxu0 0
        %3375 = vmatpush2.bf16.msra.mxu0 0
        %3376 = vmatprep.subr.bf16.mxu0 0
        %3377 = vmatpush2.bf16.msra.mxu0 0
        %3378 = vmatprep.subr.bf16.mxu0 0
        %3379 = vmatpush2.bf16.msra.mxu0 0
        %3380 = vmatprep.mubr.bf16.mxu0 0
        %3381 = vmatmul.mubr.bf16.gmra.mxu0 %v3297
        %v3382 = vpop.f32.mrf.mxu0
        %v3383 = vadd.f32 0.0, %v3382
        %v3384 = vpop.f32.mrf.mxu0
        %v3385 = vpop.f32.mrf.mxu0
        %v3386 = vadd.f32 0.0, %v3385
        %v3387 = vpop.f32.mrf.mxu0
        %3388 = vmatprep.mubr.bf16.mxu0 0
        %3389 = vmatmul.mubr.bf16.gmra.mxu0 %v3296
        %v3390 = vpop.f32.mrf.mxu0
        %v3391 = vadd.f32 0.0, %v3390
        %v3392 = vpop.f32.mrf.mxu0
        %v3393 = vpop.f32.mrf.mxu0
        %v3394 = vadd.f32 0.0, %v3393
        %v3395 = vpop.f32.mrf.mxu0
        %3396 = vdwg.mxu0
        %v3397 = vadd.f32 %v3270, %v3383
        %v3398 = vadd.f32 %v3271, %v3386
        %v3399 = vadd.f32 %v3272, %v3391
        %v3400 = vadd.f32 %v3273, %v3394
        %s3401 = scalar_lea.vmem [#allocation11], 256
        %v3402 = vld [vmem:[%s3401] sm:$0xf]
        %v3403 = vld [vmem:[%s3401 + $0x4] sm:$0xf]
        %v3404 = vld [vmem:[%s3401 + $0x8] sm:$0xf]
        %v3405 = vld [vmem:[%s3401 + $0xc] sm:$0xf]
        %v3406 = vld [vmem:[%s3401 + $0x10] sm:$0xf]
        %v3407 = vld [vmem:[%s3401 + $0x14] sm:$0xf]
        %v3408 = vld [vmem:[%s3401 + $0x18] sm:$0xf]
        %v3409 = vld [vmem:[%s3401 + $0x1c] sm:$0xf]
        %v3410 = vld [vmem:[%s3401 + $0x20] sm:$0xf]
        %v3411 = vld [vmem:[%s3401 + $0x24] sm:$0xf]
        %v3412 = vld [vmem:[%s3401 + $0x28] sm:$0xf]
        %v3413 = vld [vmem:[%s3401 + $0x2c] sm:$0xf]
        %v3414 = vld [vmem:[%s3401 + $0x30] sm:$0xf]
        %v3415 = vld [vmem:[%s3401 + $0x34] sm:$0xf]
        %v3416 = vld [vmem:[%s3401 + $0x38] sm:$0xf]
        %v3417 = vld [vmem:[%s3401 + $0x3c] sm:$0xf]
        %v3418 = vrot.slane %v2903, 2
        %v3419 = vrot.slane %v2904, 2
        %v3420 = vsel %vm1299, %v3418, %v3419
        %v3439 = vunpack.c.l.b16 %v3402
        %v3440 = vunpack.c.l.b16 %v3403
        %v3441 = vunpack.c.l.b16 %v3404
        %v3442 = vunpack.c.l.b16 %v3405
        %v3443 = vunpack.c.l.b16 %v3406
        %v3444 = vunpack.c.l.b16 %v3407
        %v3445 = vunpack.c.l.b16 %v3408
        %v3446 = vunpack.c.l.b16 %v3409
        %v3447 = vunpack.c.l.b16 %v3410
        %v3448 = vunpack.c.l.b16 %v3411
        %v3449 = vunpack.c.l.b16 %v3412
        %v3450 = vunpack.c.l.b16 %v3413
        %v3451 = vunpack.c.l.b16 %v3414
        %v3452 = vunpack.c.l.b16 %v3415
        %v3453 = vunpack.c.l.b16 %v3416
        %v3454 = vunpack.c.l.b16 %v3417
        %v3455 = vpack.c.b16 %v3440, %v3439
        %v3456 = vpack.c.b16 %v3442, %v3441
        %v3457 = vpack.c.b16 %v3444, %v3443
        %v3458 = vpack.c.b16 %v3446, %v3445
        %v3459 = vpack.c.b16 %v3448, %v3447
        %v3460 = vpack.c.b16 %v3450, %v3449
        %v3461 = vpack.c.b16 %v3452, %v3451
        %v3462 = vpack.c.b16 %v3454, %v3453
        %3471 = vmatprep.subr.bf16.mxu0 0
        %3472 = vmatpush1.bf16.msra.mxu0 %v3462
        %3473 = vmatprep.subr.bf16.mxu0 0
        %3474 = vmatpush1.bf16.msra.mxu0 %v3461
        %3475 = vmatprep.subr.bf16.mxu0 0
        %3476 = vmatpush1.bf16.msra.mxu0 %v3460
        %3477 = vmatprep.subr.bf16.mxu0 0
        %3478 = vmatpush1.bf16.msra.mxu0 %v3459
        %3479 = vmatprep.subr.bf16.mxu0 0
        %3480 = vmatpush1.bf16.msra.mxu0 %v3458
        %3481 = vmatprep.subr.bf16.mxu0 0
        %3482 = vmatpush1.bf16.msra.mxu0 %v3457
        %3483 = vmatprep.subr.bf16.mxu0 0
        %3484 = vmatpush1.bf16.msra.mxu0 %v3456
        %3485 = vmatprep.subr.bf16.mxu0 0
        %3486 = vmatpush1.bf16.msra.mxu0 %v3455
        %3487 = vmatprep.subr.bf16.mxu0 0
        %3488 = vmatpush2.bf16.msra.mxu0 0
        %3489 = vmatprep.subr.bf16.mxu0 0
        %3490 = vmatpush2.bf16.msra.mxu0 0
        %3491 = vmatprep.subr.bf16.mxu0 0
        %3492 = vmatpush2.bf16.msra.mxu0 0
        %3493 = vmatprep.subr.bf16.mxu0 0
        %3494 = vmatpush2.bf16.msra.mxu0 0
        %3495 = vmatprep.subr.bf16.mxu0 0
        %3496 = vmatpush2.bf16.msra.mxu0 0
        %3497 = vmatprep.subr.bf16.mxu0 0
        %3498 = vmatpush2.bf16.msra.mxu0 0
        %3499 = vmatprep.subr.bf16.mxu0 0
        %3500 = vmatpush2.bf16.msra.mxu0 0
        %3501 = vmatprep.subr.bf16.mxu0 0
        %3502 = vmatpush2.bf16.msra.mxu0 0
        %3503 = vmatprep.mubr.bf16.mxu0 0
        %3504 = vmatmul.mubr.bf16.gmra.mxu0 %v3420
        %v3505 = vpop.f32.mrf.mxu0
        %v3506 = vadd.f32 0.0, %v3505
        %v3507 = vpop.f32.mrf.mxu0
        %v3508 = vpop.f32.mrf.mxu0
        %v3509 = vadd.f32 0.0, %v3508
        %v3510 = vpop.f32.mrf.mxu0
        %3511 = vmatprep.mubr.bf16.mxu0 0
        %3512 = vmatmul.mubr.bf16.gmra.mxu0 %v3419
        %v3513 = vpop.f32.mrf.mxu0
        %v3514 = vadd.f32 0.0, %v3513
        %v3515 = vpop.f32.mrf.mxu0
        %v3516 = vpop.f32.mrf.mxu0
        %v3517 = vadd.f32 0.0, %v3516
        %v3518 = vpop.f32.mrf.mxu0
        %3519 = vdwg.mxu0
        %v3520 = vadd.f32 %v3397, %v3506
        %v3521 = vadd.f32 %v3398, %v3509
        %v3522 = vadd.f32 %v3399, %v3514
        %v3523 = vadd.f32 %v3400, %v3517
        %v3524 = vld [vmem:[%s12] sm:$0x1]
        %v3526 = vlaneseq
        %v3527 = vshrl.u32 %v3526, 7
        %v3528 = vsub.s32 0, %v3527
        %v3529 = vrot.slane %v3524, %v3528
        %v3531 = vmul.f32 %v3520, %v3529
        %v3532 = vmul.f32 %v3521, %v3529
        %v3533 = vmul.f32 %v3522, %v3529
        %v3534 = vmul.f32 %v3523, %v3529
        %v3535 = vld [vmem:[%s13] sm:$0x1]
        %v3537 = vlaneseq
        %v3538 = vshrl.u32 %v3537, 7
        %v3539 = vsub.s32 0, %v3538
        %v3540 = vrot.slane %v3535, %v3539
        %v3542 = vadd.f32 %v3531, %v3540
        %v3543 = vadd.f32 %v3532, %v3540
        %v3544 = vadd.f32 %v3533, %v3540
        %v3545 = vadd.f32 %v3534, %v3540
        %v3546 = vtanh.pop %v3542
        %v3547 = vtanh.pop %v3543
        %v3548 = vtanh.pop %v3544
        %v3549 = vtanh.pop %v3545
        %s3550 = sadd.s32 %s1446, 4294967294
        %v3551 = vstv %s3550
        %v3552 = vadd.s32 %v3551, %v1449
        %v3553 = vadd.s32 %v3551, %v1450
        %v3554 = vadd.s32 %v3551, %v1451
        %v3555 = vadd.s32 %v3551, %v1452
        %vm3556 = vcmp.ge.s32.totalorder %v3552, 0
        %vm3557 = vcmp.ge.s32.totalorder %v3553, 0
        %vm3558 = vcmp.ge.s32.totalorder %v3554, 0
        %vm3559 = vcmp.ge.s32.totalorder %v3555, 0
        %vm3560 = vcmp.lt.s32.totalorder %v3552, 48
        %vm3561 = vcmp.lt.s32.totalorder %v3553, 48
        %vm3562 = vcmp.lt.s32.totalorder %v3554, 48
        %vm3563 = vcmp.lt.s32.totalorder %v3555, 48
        %vm3564 = vmand %vm3556, %vm3560
        %vm3565 = vmand %vm3557, %vm3561
        %vm3566 = vmand %vm3558, %vm3562
        %vm3567 = vmand %vm3559, %vm3563
        %v3568 = vsel %vm3564, %v3546, 0.0
        %v3569 = vsel %vm3565, %v3547, 0.0
        %v3570 = vsel %vm3566, %v3548, 0.0
        %v3571 = vsel %vm3567, %v3549, 0.0
        %v3572 = vpack.c.bf16 %v3569, %v3568
        %v3573 = vpack.c.bf16 %v3571, %v3570
        %v3574 = vld [vmem:[#allocation13] sm:$0xf]
        %v3575 = vld [vmem:[#allocation13 + $0x4] sm:$0xf]
        %v3576 = vld [vmem:[#allocation13 + $0x8] sm:$0xf]
        %v3577 = vld [vmem:[#allocation13 + $0xc] sm:$0xf]
        %v3578 = vld [vmem:[#allocation13 + $0x10] sm:$0xf]
        %v3579 = vld [vmem:[#allocation13 + $0x14] sm:$0xf]
        %v3580 = vld [vmem:[#allocation13 + $0x18] sm:$0xf]
        %v3581 = vld [vmem:[#allocation13 + $0x1c] sm:$0xf]
        %v3582 = vld [vmem:[#allocation13 + $0x20] sm:$0xf]
        %v3583 = vld [vmem:[#allocation13 + $0x24] sm:$0xf]
        %v3584 = vld [vmem:[#allocation13 + $0x28] sm:$0xf]
        %v3585 = vld [vmem:[#allocation13 + $0x2c] sm:$0xf]
        %v3586 = vld [vmem:[#allocation13 + $0x30] sm:$0xf]
        %v3587 = vld [vmem:[#allocation13 + $0x34] sm:$0xf]
        %v3588 = vld [vmem:[#allocation13 + $0x38] sm:$0xf]
        %v3589 = vld [vmem:[#allocation13 + $0x3c] sm:$0xf]
        %s3590 = scalar_lea.vmem [#allocation13], 64
        %v3591 = vld [vmem:[%s3590] sm:$0xf]
        %v3592 = vld [vmem:[%s3590 + $0x4] sm:$0xf]
        %v3593 = vld [vmem:[%s3590 + $0x8] sm:$0xf]
        %v3594 = vld [vmem:[%s3590 + $0xc] sm:$0xf]
        %v3595 = vld [vmem:[%s3590 + $0x10] sm:$0xf]
        %v3596 = vld [vmem:[%s3590 + $0x14] sm:$0xf]
        %v3597 = vld [vmem:[%s3590 + $0x18] sm:$0xf]
        %v3598 = vld [vmem:[%s3590 + $0x1c] sm:$0xf]
        %v3599 = vld [vmem:[%s3590 + $0x20] sm:$0xf]
        %v3600 = vld [vmem:[%s3590 + $0x24] sm:$0xf]
        %v3601 = vld [vmem:[%s3590 + $0x28] sm:$0xf]
        %v3602 = vld [vmem:[%s3590 + $0x2c] sm:$0xf]
        %v3603 = vld [vmem:[%s3590 + $0x30] sm:$0xf]
        %v3604 = vld [vmem:[%s3590 + $0x34] sm:$0xf]
        %v3605 = vld [vmem:[%s3590 + $0x38] sm:$0xf]
        %v3606 = vld [vmem:[%s3590 + $0x3c] sm:$0xf]
        %v3608 = vshrl.u32 %v3572, 16
        %v3610 = vshll.u32 %v3572, 16
        %v3612 = vrot.slane %v3610, 1
        %v3613 = vor.u32 %v3608, %v3612
        %v3615 = vshll.u32 %v3573, 16
        %v3617 = vrot.slane %v3615, 1
        %v3618 = vsel %vm771, %v3613, %v3617
        %v3619 = vshrl.u32 %v3573, 16
        %v3621 = vor.u32 %v3619, %v3617
        %v3640 = vunpack.c.l.b16 %v3591
        %v3641 = vunpack.c.l.b16 %v3592
        %v3642 = vunpack.c.l.b16 %v3593
        %v3643 = vunpack.c.l.b16 %v3594
        %v3644 = vunpack.c.l.b16 %v3595
        %v3645 = vunpack.c.l.b16 %v3596
        %v3646 = vunpack.c.l.b16 %v3597
        %v3647 = vunpack.c.l.b16 %v3598
        %v3648 = vunpack.c.l.b16 %v3599
        %v3649 = vunpack.c.l.b16 %v3600
        %v3650 = vunpack.c.l.b16 %v3601
        %v3651 = vunpack.c.l.b16 %v3602
        %v3652 = vunpack.c.l.b16 %v3603
        %v3653 = vunpack.c.l.b16 %v3604
        %v3654 = vunpack.c.l.b16 %v3605
        %v3655 = vunpack.c.l.b16 %v3606
        %v3656 = vpack.c.b16 %v3641, %v3640
        %v3657 = vpack.c.b16 %v3643, %v3642
        %v3658 = vpack.c.b16 %v3645, %v3644
        %v3659 = vpack.c.b16 %v3647, %v3646
        %v3660 = vpack.c.b16 %v3649, %v3648
        %v3661 = vpack.c.b16 %v3651, %v3650
        %v3662 = vpack.c.b16 %v3653, %v3652
        %v3663 = vpack.c.b16 %v3655, %v3654
        %3672 = vmatprep.subr.bf16.mxu0 0
        %3673 = vmatpush1.bf16.msra.mxu0 %v3663
        %3674 = vmatprep.subr.bf16.mxu0 0
        %3675 = vmatpush1.bf16.msra.mxu0 %v3662
        %3676 = vmatprep.subr.bf16.mxu0 0
        %3677 = vmatpush1.bf16.msra.mxu0 %v3661
        %3678 = vmatprep.subr.bf16.mxu0 0
        %3679 = vmatpush1.bf16.msra.mxu0 %v3660
        %3680 = vmatprep.subr.bf16.mxu0 0
        %3681 = vmatpush1.bf16.msra.mxu0 %v3659
        %3682 = vmatprep.subr.bf16.mxu0 0
        %3683 = vmatpush1.bf16.msra.mxu0 %v3658
        %3684 = vmatprep.subr.bf16.mxu0 0
        %3685 = vmatpush1.bf16.msra.mxu0 %v3657
        %3686 = vmatprep.subr.bf16.mxu0 0
        %3687 = vmatpush1.bf16.msra.mxu0 %v3656
        %3688 = vmatprep.subr.bf16.mxu0 0
        %3689 = vmatpush2.bf16.msra.mxu0 0
        %3690 = vmatprep.subr.bf16.mxu0 0
        %3691 = vmatpush2.bf16.msra.mxu0 0
        %3692 = vmatprep.subr.bf16.mxu0 0
        %3693 = vmatpush2.bf16.msra.mxu0 0
        %3694 = vmatprep.subr.bf16.mxu0 0
        %3695 = vmatpush2.bf16.msra.mxu0 0
        %3696 = vmatprep.subr.bf16.mxu0 0
        %3697 = vmatpush2.bf16.msra.mxu0 0
        %3698 = vmatprep.subr.bf16.mxu0 0
        %3699 = vmatpush2.bf16.msra.mxu0 0
        %3700 = vmatprep.subr.bf16.mxu0 0
        %3701 = vmatpush2.bf16.msra.mxu0 0
        %3702 = vmatprep.subr.bf16.mxu0 0
        %3703 = vmatpush2.bf16.msra.mxu0 0
        %3704 = vmatprep.mubr.bf16.mxu0 0
        %3705 = vmatmul.mubr.bf16.gmra.mxu0 %v3618
        %v3706 = vpop.f32.mrf.mxu0
        %v3707 = vadd.f32 0.0, %v3706
        %v3708 = vpop.f32.mrf.mxu0
        %v3709 = vpop.f32.mrf.mxu0
        %v3710 = vadd.f32 0.0, %v3709
        %v3711 = vpop.f32.mrf.mxu0
        %3712 = vmatprep.mubr.bf16.mxu0 0
        %3713 = vmatmul.mubr.bf16.gmra.mxu0 %v3621
        %v3714 = vpop.f32.mrf.mxu0
        %v3715 = vadd.f32 0.0, %v3714
        %v3716 = vpop.f32.mrf.mxu0
        %v3717 = vpop.f32.mrf.mxu0
        %v3718 = vpop.f32.mrf.mxu0
        %3719 = vdwg.mxu0
        %v3736 = vunpack.c.l.b16 %v3574
        %v3737 = vunpack.c.l.b16 %v3575
        %v3738 = vunpack.c.l.b16 %v3576
        %v3739 = vunpack.c.l.b16 %v3577
        %v3740 = vunpack.c.l.b16 %v3578
        %v3741 = vunpack.c.l.b16 %v3579
        %v3742 = vunpack.c.l.b16 %v3580
        %v3743 = vunpack.c.l.b16 %v3581
        %v3744 = vunpack.c.l.b16 %v3582
        %v3745 = vunpack.c.l.b16 %v3583
        %v3746 = vunpack.c.l.b16 %v3584
        %v3747 = vunpack.c.l.b16 %v3585
        %v3748 = vunpack.c.l.b16 %v3586
        %v3749 = vunpack.c.l.b16 %v3587
        %v3750 = vunpack.c.l.b16 %v3588
        %v3751 = vunpack.c.l.b16 %v3589
        %v3752 = vpack.c.b16 %v3737, %v3736
        %v3753 = vpack.c.b16 %v3739, %v3738
        %v3754 = vpack.c.b16 %v3741, %v3740
        %v3755 = vpack.c.b16 %v3743, %v3742
        %v3756 = vpack.c.b16 %v3745, %v3744
        %v3757 = vpack.c.b16 %v3747, %v3746
        %v3758 = vpack.c.b16 %v3749, %v3748
        %v3759 = vpack.c.b16 %v3751, %v3750
        %3768 = vmatprep.subr.bf16.mxu0 0
        %3769 = vmatpush1.bf16.msra.mxu0 %v3759
        %3770 = vmatprep.subr.bf16.mxu0 0
        %3771 = vmatpush1.bf16.msra.mxu0 %v3758
        %3772 = vmatprep.subr.bf16.mxu0 0
        %3773 = vmatpush1.bf16.msra.mxu0 %v3757
        %3774 = vmatprep.subr.bf16.mxu0 0
        %3775 = vmatpush1.bf16.msra.mxu0 %v3756
        %3776 = vmatprep.subr.bf16.mxu0 0
        %3777 = vmatpush1.bf16.msra.mxu0 %v3755
        %3778 = vmatprep.subr.bf16.mxu0 0
        %3779 = vmatpush1.bf16.msra.mxu0 %v3754
        %3780 = vmatprep.subr.bf16.mxu0 0
        %3781 = vmatpush1.bf16.msra.mxu0 %v3753
        %3782 = vmatprep.subr.bf16.mxu0 0
        %3783 = vmatpush1.bf16.msra.mxu0 %v3752
        %3784 = vmatprep.subr.bf16.mxu0 0
        %3785 = vmatpush2.bf16.msra.mxu0 0
        %3786 = vmatprep.subr.bf16.mxu0 0
        %3787 = vmatpush2.bf16.msra.mxu0 0
        %3788 = vmatprep.subr.bf16.mxu0 0
        %3789 = vmatpush2.bf16.msra.mxu0 0
        %3790 = vmatprep.subr.bf16.mxu0 0
        %3791 = vmatpush2.bf16.msra.mxu0 0
        %3792 = vmatprep.subr.bf16.mxu0 0
        %3793 = vmatpush2.bf16.msra.mxu0 0
        %3794 = vmatprep.subr.bf16.mxu0 0
        %3795 = vmatpush2.bf16.msra.mxu0 0
        %3796 = vmatprep.subr.bf16.mxu0 0
        %3797 = vmatpush2.bf16.msra.mxu0 0
        %3798 = vmatprep.subr.bf16.mxu0 0
        %3799 = vmatpush2.bf16.msra.mxu0 0
        %3800 = vmatprep.mubr.bf16.mxu0 0
        %3801 = vmatmul.mubr.bf16.gmra.mxu0 %v3572
        %v3802 = vpop.f32.mrf.mxu0
        %v3803 = vadd.f32 %v3707, %v3802
        %v3804 = vpop.f32.mrf.mxu0
        %v3805 = vpop.f32.mrf.mxu0
        %v3806 = vadd.f32 %v3710, %v3805
        %v3807 = vpop.f32.mrf.mxu0
        %3808 = vmatprep.mubr.bf16.mxu0 0
        %3809 = vmatmul.mubr.bf16.gmra.mxu0 %v3573
        %v3810 = vpop.f32.mrf.mxu0
        %v3811 = vadd.f32 %v3715, %v3810
        %v3812 = vpop.f32.mrf.mxu0
        %v3813 = vpop.f32.mrf.mxu0
        %v3814 = vpop.f32.mrf.mxu0
        %3815 = vdwg.mxu0
        %s3816 = scalar_lea.vmem [#allocation13], 128
        %v3817 = vld [vmem:[%s3816] sm:$0xf]
        %v3818 = vld [vmem:[%s3816 + $0x4] sm:$0xf]
        %v3819 = vld [vmem:[%s3816 + $0x8] sm:$0xf]
        %v3820 = vld [vmem:[%s3816 + $0xc] sm:$0xf]
        %v3821 = vld [vmem:[%s3816 + $0x10] sm:$0xf]
        %v3822 = vld [vmem:[%s3816 + $0x14] sm:$0xf]
        %v3823 = vld [vmem:[%s3816 + $0x18] sm:$0xf]
        %v3824 = vld [vmem:[%s3816 + $0x1c] sm:$0xf]
        %v3825 = vld [vmem:[%s3816 + $0x20] sm:$0xf]
        %v3826 = vld [vmem:[%s3816 + $0x24] sm:$0xf]
        %v3827 = vld [vmem:[%s3816 + $0x28] sm:$0xf]
        %v3828 = vld [vmem:[%s3816 + $0x2c] sm:$0xf]
        %v3829 = vld [vmem:[%s3816 + $0x30] sm:$0xf]
        %v3830 = vld [vmem:[%s3816 + $0x34] sm:$0xf]
        %v3831 = vld [vmem:[%s3816 + $0x38] sm:$0xf]
        %v3832 = vld [vmem:[%s3816 + $0x3c] sm:$0xf]
        %v3835 = vrot.slane %v3572, 1
        %v3836 = vrot.slane %v3573, 1
        %v3837 = vsel %vm1023, %v3835, %v3836
        %v3856 = vunpack.c.l.b16 %v3817
        %v3857 = vunpack.c.l.b16 %v3818
        %v3858 = vunpack.c.l.b16 %v3819
        %v3859 = vunpack.c.l.b16 %v3820
        %v3860 = vunpack.c.l.b16 %v3821
        %v3861 = vunpack.c.l.b16 %v3822
        %v3862 = vunpack.c.l.b16 %v3823
        %v3863 = vunpack.c.l.b16 %v3824
        %v3864 = vunpack.c.l.b16 %v3825
        %v3865 = vunpack.c.l.b16 %v3826
        %v3866 = vunpack.c.l.b16 %v3827
        %v3867 = vunpack.c.l.b16 %v3828
        %v3868 = vunpack.c.l.b16 %v3829
        %v3869 = vunpack.c.l.b16 %v3830
        %v3870 = vunpack.c.l.b16 %v3831
        %v3871 = vunpack.c.l.b16 %v3832
        %v3872 = vpack.c.b16 %v3857, %v3856
        %v3873 = vpack.c.b16 %v3859, %v3858
        %v3874 = vpack.c.b16 %v3861, %v3860
        %v3875 = vpack.c.b16 %v3863, %v3862
        %v3876 = vpack.c.b16 %v3865, %v3864
        %v3877 = vpack.c.b16 %v3867, %v3866
        %v3878 = vpack.c.b16 %v3869, %v3868
        %v3879 = vpack.c.b16 %v3871, %v3870
        %3888 = vmatprep.subr.bf16.mxu0 0
        %3889 = vmatpush1.bf16.msra.mxu0 %v3879
        %3890 = vmatprep.subr.bf16.mxu0 0
        %3891 = vmatpush1.bf16.msra.mxu0 %v3878
        %3892 = vmatprep.subr.bf16.mxu0 0
        %3893 = vmatpush1.bf16.msra.mxu0 %v3877
        %3894 = vmatprep.subr.bf16.mxu0 0
        %3895 = vmatpush1.bf16.msra.mxu0 %v3876
        %3896 = vmatprep.subr.bf16.mxu0 0
        %3897 = vmatpush1.bf16.msra.mxu0 %v3875
        %3898 = vmatprep.subr.bf16.mxu0 0
        %3899 = vmatpush1.bf16.msra.mxu0 %v3874
        %3900 = vmatprep.subr.bf16.mxu0 0
        %3901 = vmatpush1.bf16.msra.mxu0 %v3873
        %3902 = vmatprep.subr.bf16.mxu0 0
        %3903 = vmatpush1.bf16.msra.mxu0 %v3872
        %3904 = vmatprep.subr.bf16.mxu0 0
        %3905 = vmatpush2.bf16.msra.mxu0 0
        %3906 = vmatprep.subr.bf16.mxu0 0
        %3907 = vmatpush2.bf16.msra.mxu0 0
        %3908 = vmatprep.subr.bf16.mxu0 0
        %3909 = vmatpush2.bf16.msra.mxu0 0
        %3910 = vmatprep.subr.bf16.mxu0 0
        %3911 = vmatpush2.bf16.msra.mxu0 0
        %3912 = vmatprep.subr.bf16.mxu0 0
        %3913 = vmatpush2.bf16.msra.mxu0 0
        %3914 = vmatprep.subr.bf16.mxu0 0
        %3915 = vmatpush2.bf16.msra.mxu0 0
        %3916 = vmatprep.subr.bf16.mxu0 0
        %3917 = vmatpush2.bf16.msra.mxu0 0
        %3918 = vmatprep.subr.bf16.mxu0 0
        %3919 = vmatpush2.bf16.msra.mxu0 0
        %3920 = vmatprep.mubr.bf16.mxu0 0
        %3921 = vmatmul.mubr.bf16.gmra.mxu0 %v3837
        %v3922 = vpop.f32.mrf.mxu0
        %v3923 = vadd.f32 0.0, %v3922
        %v3924 = vpop.f32.mrf.mxu0
        %v3925 = vpop.f32.mrf.mxu0
        %v3926 = vadd.f32 0.0, %v3925
        %v3927 = vpop.f32.mrf.mxu0
        %3928 = vmatprep.mubr.bf16.mxu0 0
        %3929 = vmatmul.mubr.bf16.gmra.mxu0 %v3836
        %v3930 = vpop.f32.mrf.mxu0
        %v3931 = vadd.f32 0.0, %v3930
        %v3932 = vpop.f32.mrf.mxu0
        %v3933 = vpop.f32.mrf.mxu0
        %v3934 = vpop.f32.mrf.mxu0
        %3935 = vdwg.mxu0
        %v3936 = vadd.f32 %v3803, %v3923
        %v3937 = vadd.f32 %v3806, %v3926
        %v3938 = vadd.f32 %v3811, %v3931
        %s3939 = scalar_lea.vmem [#allocation13], 192
        %v3940 = vld [vmem:[%s3939] sm:$0xf]
        %v3941 = vld [vmem:[%s3939 + $0x4] sm:$0xf]
        %v3942 = vld [vmem:[%s3939 + $0x8] sm:$0xf]
        %v3943 = vld [vmem:[%s3939 + $0xc] sm:$0xf]
        %v3944 = vld [vmem:[%s3939 + $0x10] sm:$0xf]
        %v3945 = vld [vmem:[%s3939 + $0x14] sm:$0xf]
        %v3946 = vld [vmem:[%s3939 + $0x18] sm:$0xf]
        %v3947 = vld [vmem:[%s3939 + $0x1c] sm:$0xf]
        %v3948 = vld [vmem:[%s3939 + $0x20] sm:$0xf]
        %v3949 = vld [vmem:[%s3939 + $0x24] sm:$0xf]
        %v3950 = vld [vmem:[%s3939 + $0x28] sm:$0xf]
        %v3951 = vld [vmem:[%s3939 + $0x2c] sm:$0xf]
        %v3952 = vld [vmem:[%s3939 + $0x30] sm:$0xf]
        %v3953 = vld [vmem:[%s3939 + $0x34] sm:$0xf]
        %v3954 = vld [vmem:[%s3939 + $0x38] sm:$0xf]
        %v3955 = vld [vmem:[%s3939 + $0x3c] sm:$0xf]
        %v3956 = vrot.slane %v3608, 1
        %v3957 = vrot.slane %v3610, 2
        %v3958 = vor.u32 %v3956, %v3957
        %v3959 = vrot.slane %v3619, 1
        %v3960 = vrot.slane %v3615, 2
        %v3961 = vor.u32 %v3959, %v3960
        %v3962 = vsel %vm1158, %v3958, %v3961
        %v3981 = vunpack.c.l.b16 %v3940
        %v3982 = vunpack.c.l.b16 %v3941
        %v3983 = vunpack.c.l.b16 %v3942
        %v3984 = vunpack.c.l.b16 %v3943
        %v3985 = vunpack.c.l.b16 %v3944
        %v3986 = vunpack.c.l.b16 %v3945
        %v3987 = vunpack.c.l.b16 %v3946
        %v3988 = vunpack.c.l.b16 %v3947
        %v3989 = vunpack.c.l.b16 %v3948
        %v3990 = vunpack.c.l.b16 %v3949
        %v3991 = vunpack.c.l.b16 %v3950
        %v3992 = vunpack.c.l.b16 %v3951
        %v3993 = vunpack.c.l.b16 %v3952
        %v3994 = vunpack.c.l.b16 %v3953
        %v3995 = vunpack.c.l.b16 %v3954
        %v3996 = vunpack.c.l.b16 %v3955
        %v3997 = vpack.c.b16 %v3982, %v3981
        %v3998 = vpack.c.b16 %v3984, %v3983
        %v3999 = vpack.c.b16 %v3986, %v3985
        %v4000 = vpack.c.b16 %v3988, %v3987
        %v4001 = vpack.c.b16 %v3990, %v3989
        %v4002 = vpack.c.b16 %v3992, %v3991
        %v4003 = vpack.c.b16 %v3994, %v3993
        %v4004 = vpack.c.b16 %v3996, %v3995
        %4013 = vmatprep.subr.bf16.mxu0 0
        %4014 = vmatpush1.bf16.msra.mxu0 %v4004
        %4015 = vmatprep.subr.bf16.mxu0 0
        %4016 = vmatpush1.bf16.msra.mxu0 %v4003
        %4017 = vmatprep.subr.bf16.mxu0 0
        %4018 = vmatpush1.bf16.msra.mxu0 %v4002
        %4019 = vmatprep.subr.bf16.mxu0 0
        %4020 = vmatpush1.bf16.msra.mxu0 %v4001
        %4021 = vmatprep.subr.bf16.mxu0 0
        %4022 = vmatpush1.bf16.msra.mxu0 %v4000
        %4023 = vmatprep.subr.bf16.mxu0 0
        %4024 = vmatpush1.bf16.msra.mxu0 %v3999
        %4025 = vmatprep.subr.bf16.mxu0 0
        %4026 = vmatpush1.bf16.msra.mxu0 %v3998
        %4027 = vmatprep.subr.bf16.mxu0 0
        %4028 = vmatpush1.bf16.msra.mxu0 %v3997
        %4029 = vmatprep.subr.bf16.mxu0 0
        %4030 = vmatpush2.bf16.msra.mxu0 0
        %4031 = vmatprep.subr.bf16.mxu0 0
        %4032 = vmatpush2.bf16.msra.mxu0 0
        %4033 = vmatprep.subr.bf16.mxu0 0
        %4034 = vmatpush2.bf16.msra.mxu0 0
        %4035 = vmatprep.subr.bf16.mxu0 0
        %4036 = vmatpush2.bf16.msra.mxu0 0
        %4037 = vmatprep.subr.bf16.mxu0 0
        %4038 = vmatpush2.bf16.msra.mxu0 0
        %4039 = vmatprep.subr.bf16.mxu0 0
        %4040 = vmatpush2.bf16.msra.mxu0 0
        %4041 = vmatprep.subr.bf16.mxu0 0
        %4042 = vmatpush2.bf16.msra.mxu0 0
        %4043 = vmatprep.subr.bf16.mxu0 0
        %4044 = vmatpush2.bf16.msra.mxu0 0
        %4045 = vmatprep.mubr.bf16.mxu0 0
        %4046 = vmatmul.mubr.bf16.gmra.mxu0 %v3962
        %v4047 = vpop.f32.mrf.mxu0
        %v4048 = vadd.f32 0.0, %v4047
        %v4049 = vpop.f32.mrf.mxu0
        %v4050 = vpop.f32.mrf.mxu0
        %v4051 = vadd.f32 0.0, %v4050
        %v4052 = vpop.f32.mrf.mxu0
        %4053 = vmatprep.mubr.bf16.mxu0 0
        %4054 = vmatmul.mubr.bf16.gmra.mxu0 %v3961
        %v4055 = vpop.f32.mrf.mxu0
        %v4056 = vadd.f32 0.0, %v4055
        %v4057 = vpop.f32.mrf.mxu0
        %v4058 = vpop.f32.mrf.mxu0
        %v4059 = vpop.f32.mrf.mxu0
        %4060 = vdwg.mxu0
        %v4061 = vadd.f32 %v3936, %v4048
        %v4062 = vadd.f32 %v3937, %v4051
        %v4063 = vadd.f32 %v3938, %v4056
        %s4064 = scalar_lea.vmem [#allocation13], 256
        %v4065 = vld [vmem:[%s4064] sm:$0xf]
        %v4066 = vld [vmem:[%s4064 + $0x4] sm:$0xf]
        %v4067 = vld [vmem:[%s4064 + $0x8] sm:$0xf]
        %v4068 = vld [vmem:[%s4064 + $0xc] sm:$0xf]
        %v4069 = vld [vmem:[%s4064 + $0x10] sm:$0xf]
        %v4070 = vld [vmem:[%s4064 + $0x14] sm:$0xf]
        %v4071 = vld [vmem:[%s4064 + $0x18] sm:$0xf]
        %v4072 = vld [vmem:[%s4064 + $0x1c] sm:$0xf]
        %v4073 = vld [vmem:[%s4064 + $0x20] sm:$0xf]
        %v4074 = vld [vmem:[%s4064 + $0x24] sm:$0xf]
        %v4075 = vld [vmem:[%s4064 + $0x28] sm:$0xf]
        %v4076 = vld [vmem:[%s4064 + $0x2c] sm:$0xf]
        %v4077 = vld [vmem:[%s4064 + $0x30] sm:$0xf]
        %v4078 = vld [vmem:[%s4064 + $0x34] sm:$0xf]
        %v4079 = vld [vmem:[%s4064 + $0x38] sm:$0xf]
        %v4080 = vld [vmem:[%s4064 + $0x3c] sm:$0xf]
        %v4081 = vrot.slane %v3572, 2
        %v4082 = vrot.slane %v3573, 2
        %v4083 = vsel %vm1299, %v4081, %v4082
        %v4102 = vunpack.c.l.b16 %v4065
        %v4103 = vunpack.c.l.b16 %v4066
        %v4104 = vunpack.c.l.b16 %v4067
        %v4105 = vunpack.c.l.b16 %v4068
        %v4106 = vunpack.c.l.b16 %v4069
        %v4107 = vunpack.c.l.b16 %v4070
        %v4108 = vunpack.c.l.b16 %v4071
        %v4109 = vunpack.c.l.b16 %v4072
        %v4110 = vunpack.c.l.b16 %v4073
        %v4111 = vunpack.c.l.b16 %v4074
        %v4112 = vunpack.c.l.b16 %v4075
        %v4113 = vunpack.c.l.b16 %v4076
        %v4114 = vunpack.c.l.b16 %v4077
        %v4115 = vunpack.c.l.b16 %v4078
        %v4116 = vunpack.c.l.b16 %v4079
        %v4117 = vunpack.c.l.b16 %v4080
        %v4118 = vpack.c.b16 %v4103, %v4102
        %v4119 = vpack.c.b16 %v4105, %v4104
        %v4120 = vpack.c.b16 %v4107, %v4106
        %v4121 = vpack.c.b16 %v4109, %v4108
        %v4122 = vpack.c.b16 %v4111, %v4110
        %v4123 = vpack.c.b16 %v4113, %v4112
        %v4124 = vpack.c.b16 %v4115, %v4114
        %v4125 = vpack.c.b16 %v4117, %v4116
        %4134 = vmatprep.subr.bf16.mxu0 0
        %4135 = vmatpush1.bf16.msra.mxu0 %v4125
        %4136 = vmatprep.subr.bf16.mxu0 0
        %4137 = vmatpush1.bf16.msra.mxu0 %v4124
        %4138 = vmatprep.subr.bf16.mxu0 0
        %4139 = vmatpush1.bf16.msra.mxu0 %v4123
        %4140 = vmatprep.subr.bf16.mxu0 0
        %4141 = vmatpush1.bf16.msra.mxu0 %v4122
        %4142 = vmatprep.subr.bf16.mxu0 0
        %4143 = vmatpush1.bf16.msra.mxu0 %v4121
        %4144 = vmatprep.subr.bf16.mxu0 0
        %4145 = vmatpush1.bf16.msra.mxu0 %v4120
        %4146 = vmatprep.subr.bf16.mxu0 0
        %4147 = vmatpush1.bf16.msra.mxu0 %v4119
        %4148 = vmatprep.subr.bf16.mxu0 0
        %4149 = vmatpush1.bf16.msra.mxu0 %v4118
        %4150 = vmatprep.subr.bf16.mxu0 0
        %4151 = vmatpush2.bf16.msra.mxu0 0
        %4152 = vmatprep.subr.bf16.mxu0 0
        %4153 = vmatpush2.bf16.msra.mxu0 0
        %4154 = vmatprep.subr.bf16.mxu0 0
        %4155 = vmatpush2.bf16.msra.mxu0 0
        %4156 = vmatprep.subr.bf16.mxu0 0
        %4157 = vmatpush2.bf16.msra.mxu0 0
        %4158 = vmatprep.subr.bf16.mxu0 0
        %4159 = vmatpush2.bf16.msra.mxu0 0
        %4160 = vmatprep.subr.bf16.mxu0 0
        %4161 = vmatpush2.bf16.msra.mxu0 0
        %4162 = vmatprep.subr.bf16.mxu0 0
        %4163 = vmatpush2.bf16.msra.mxu0 0
        %4164 = vmatprep.subr.bf16.mxu0 0
        %4165 = vmatpush2.bf16.msra.mxu0 0
        %4166 = vmatprep.mubr.bf16.mxu0 0
        %4167 = vmatmul.mubr.bf16.gmra.mxu0 %v4083
        %v4168 = vpop.f32.mrf.mxu0
        %v4169 = vadd.f32 0.0, %v4168
        %v4170 = vpop.f32.mrf.mxu0
        %v4171 = vpop.f32.mrf.mxu0
        %v4172 = vadd.f32 0.0, %v4171
        %v4173 = vpop.f32.mrf.mxu0
        %4174 = vmatprep.mubr.bf16.mxu0 0
        %4175 = vmatmul.mubr.bf16.gmra.mxu0 %v4082
        %v4176 = vpop.f32.mrf.mxu0
        %v4177 = vadd.f32 0.0, %v4176
        %v4178 = vpop.f32.mrf.mxu0
        %v4179 = vpop.f32.mrf.mxu0
        %v4180 = vpop.f32.mrf.mxu0
        %4181 = vdwg.mxu0
        %v4182 = vadd.f32 %v4061, %v4169
        %v4183 = vadd.f32 %v4062, %v4172
        %v4184 = vadd.f32 %v4063, %v4177
        %v4185 = vld [vmem:[%s15] sm:$0x1]
        %v4187 = vlaneseq
        %v4188 = vshrl.u32 %v4187, 7
        %v4189 = vsub.s32 0, %v4188
        %v4190 = vrot.slane %v4185, %v4189
        %v4192 = vmul.f32 %v4182, %v4190
        %v4193 = vmul.f32 %v4183, %v4190
        %v4194 = vmul.f32 %v4184, %v4190
        %v4195 = vld [vmem:[%s16] sm:$0x1]
        %v4197 = vlaneseq
        %v4198 = vshrl.u32 %v4197, 7
        %v4199 = vsub.s32 0, %v4198
        %v4200 = vrot.slane %v4195, %v4199
        %v4202 = vadd.f32 %v4192, %v4200
        %v4203 = vadd.f32 %v4193, %v4200
        %v4204 = vadd.f32 %v4194, %v4200
        %4205 = vst [vmem:[%s703] sm:$0xff] %v4202
        %4206 = vst [vmem:[%s703 + $0x8] sm:$0xff] %v4203
        %4207 = vst [vmem:[%s703 + $0x10] sm:$0xff] %v4204
        %s4208 = sand.u32 %s434, 1
        %s4209 = scalar_lea.sflag [#allocation4], %s4208
        %s4210 = sand.u32 %s434, 1
        %s4211 = smul.addr %s4210, 24
        %s4212 = scalar_lea.vmem [#allocation14], %s4211
        // Predicated region
        $region117: #{tpu_custom_call.1} parent=87 // pred_check
          %p4213 = pneg %p444
        $region118: #{tpu_custom_call.1} parent=87 // pred_check_branch
          %4215 = sbr.rel (%p4213) target = $region120
        $region119: #{tpu_custom_call.1} parent=87 // pred_region
          %s4216 = smul.u32 3, %s44
          %s4218 = ssub.s32 384, 384
          %4219 = vsyncadd %s4209, %s4218
          %s4220 = smul.addr %s43, 6
          %s4221 = sadd.s32 %s4216, %s4220
          %s4222 = smul.addr %s4221, 128
          %s4223 = scalar_lea.hbm %s17, %s4222
          %s4224 = sshll.u32 %s4212, 4
          %s4225 = int_to_ptr.vmem [resolvable:$true] %s4224
          %4230 = dma.vmem_to_hbm [thread:$0]  %s4225, 384, %s4223, %s4209, 128, 128, 8
        $region120: #{tpu_custom_call.1} parent=87 // pred_fallthru
          _
      $region88: #{tpu_custom_call.1} parent=5 // pred_fallthru
        _
      %p4231 = scmp.le.s32.totalorder 2, %s34
      // Predicated region
      $region121: #{tpu_custom_call.1} parent=5 // pred_check
        %p4232 = pneg %p4231
      $region122: #{tpu_custom_call.1} parent=5 // pred_check_branch
        %4234 = sbr.rel (%p4232) target = $region124
      $region123: #{tpu_custom_call.1} parent=5 // pred_region
        %s4235 = ssub.s32 %s34, 2
        // Predicated region
        $region125: #{tpu_custom_call.1} parent=123 // pred_check
          %p4236 = pneg %p450
        $region126: #{tpu_custom_call.1} parent=123 // pred_check_branch
          %4238 = sbr.rel (%p4236) target = $region128
        $region127: #{tpu_custom_call.1} parent=123 // pred_region
          %s4239 = sand.u32 %s435, 1
          %s4240 = scalar_lea.sflag [#allocation4], %s4239
          %s4241 = sand.u32 %s435, 1
          %s4242 = smul.addr %s4241, 24
          %s4243 = scalar_lea.vmem [#allocation14], %s4242
          %4244 = dma.done %s4240, 384
        $region128: #{tpu_custom_call.1} parent=123 // pred_fallthru
          _
      $region124: #{tpu_custom_call.1} parent=5 // pred_fallthru
        _
    $region6: #{tpu_custom_call.1} parent=1 // loop_footer
      %s38 = sadd.s32 1, %s34
    $region7: #{tpu_custom_call.1} parent=1 // loop_footer_branch
      %33 = sbr.rel target = $region3
    $region8: #{tpu_custom_call.1} parent=1 // loop_exit
      _
    %4245 = vsyncpa [#allocation3], 1
    %s4246 = scalar_lea.sflag [#allocation3], 1
    %4247 = vsyncpa %s4246, 1
    %4248 = vsyncpa [#allocation6], 1
    %s4249 = scalar_lea.sflag [#allocation6], 1
    %4250 = vsyncpa %s4249, 1
    %4251 = vsyncpa [#allocation9], 1
    %4252 = vsyncpa [#allocation12], 1
    %4253 = vsyncpa [#allocation4], 1
    %s4254 = scalar_lea.sflag [#allocation4], 1
    %4255 = vsyncpa %s4254, 1

</llo_original>
